<compile_context>
chip_gen: v7x
topology: tpu7x:2x2x1
jax: 0.10.0
libtpu: 0.0.40
codegen_flags: <defaults>
</compile_context>

<pallas_src>
import jax
import jax.numpy as jnp
from jax.experimental import pallas as pl
from jax.experimental.pallas import tpu as pltpu


D_IN, D_H1, D_H2, D_H3, D_OUT = 18, 256, 1024, 256, 1
D_IN_PAD = 128   # lane-aligned K for the first matmul (padded inside the kernel)
MAX_TB = 512     # cap on rows per grid step (VMEM is nowhere near the limit)
MIN_TILES = 2    # keep >= 2 grid steps so v7x's two TensorCores both get work


def _mlp_kernel(x_ref, w1_ref, b1_ref, w2_ref, b2_ref, w3_ref, b3_ref,
                w4_ref, b4_ref, o_ref, xpad_ref):
    tb = x_ref.shape[0]

    # Lane-pad the 18-feature input to 128 inside VMEM instead of materializing a
    # [B,128] slab in HBM. Cost: ~2 passes over a (tb,128) bf16 tile per step,
    # hidden under the layer-2/3 matmuls. Padding lanes are explicitly zeroed
    # every step (scratch is per-core; no cross-step/core assumptions).
    xpad_ref[...] = jnp.zeros((tb, D_IN_PAD), jnp.bfloat16)
    xpad_ref[:, :D_IN] = x_ref[...]
    x = xpad_ref[...]                                        # [tb, 128] bf16

    # fc1: [tb,128] @ [128,256]   (rows 18..127 of w1 are zeros, padded once)
    h = jnp.dot(x, w1_ref[...], preferred_element_type=jnp.float32)
    h = jnp.maximum(h + b1_ref[...], 0.0)
    # dropout p=0.1: identity in eval/inference mode

    # fc2: [tb,256] @ [256,1024]
    h = jnp.dot(h.astype(jnp.bfloat16), w2_ref[...],
                preferred_element_type=jnp.float32)
    h = jnp.maximum(h + b2_ref[...], 0.0)

    # fc3: [tb,1024] @ [1024,256]
    h = jnp.dot(h.astype(jnp.bfloat16), w3_ref[...],
                preferred_element_type=jnp.float32)
    h = jnp.maximum(h + b3_ref[...], 0.0)

    # fc4 (out_features=1): f32 elementwise multiply + lane reduction (VPU/XLU);
    # the [tb,1] store is masked but trivially cheap and hidden under the matmuls.
    o = jnp.sum(h * w4_ref[...], axis=-1, keepdims=True) + b4_ref[...]
    o_ref[...] = o.astype(o_ref.dtype)


def _cdiv(a, b):
    return (a + b - 1) // b


def _round_up(n, m):
    return (n + m - 1) // m * m


def prepare_params(params):
    """One-time weight prep (hoisted out of the per-call forward).

    Casts matmul weights to bf16, zero-pads w1's input dim 18 -> 128, and stores
    fc4's weight as an f32 row [1, 256] for the in-kernel reduction.
    """
    w1 = jnp.zeros((D_IN_PAD, D_H1), jnp.bfloat16)
    w1 = w1.at[:D_IN, :].set(params["w1"].astype(jnp.bfloat16))
    return {
        "w1": w1,
        "b1": params["b1"].reshape(1, D_H1).astype(jnp.float32),
        "w2": params["w2"].astype(jnp.bfloat16),
        "b2": params["b2"].reshape(1, D_H2).astype(jnp.float32),
        "w3": params["w3"].astype(jnp.bfloat16),
        "b3": params["b3"].reshape(1, D_H3).astype(jnp.float32),
        "w4t": params["w4"].reshape(1, D_H3).astype(jnp.float32),   # [256,1] -> [1,256]
        "b4": params["b4"].reshape(1, D_OUT).astype(jnp.float32),
    }


@jax.jit
def model_1_forward(x, prepared):
    """x: [B, 18] float32.  prepared: output of prepare_params()."""
    B = x.shape[0]
    n_tiles = max(MIN_TILES, _cdiv(B, MAX_TB))
    tb = _round_up(_cdiv(B, n_tiles), 16)       # multiple of 16: bf16 sublane packing
    B_pad = tb * n_tiles

    # Only per-call data prep: cast x to bf16 and pad the batch rows.
    xb = x.astype(jnp.bfloat16)
    if B_pad != B:
        xb = jnp.pad(xb, ((0, B_pad - B), (0, 0)))

    full = lambda shape: pl.BlockSpec(shape, lambda i: (0, 0))   # VMEM-resident

    out = pl.pallas_call(
        _mlp_kernel,
        out_shape=jax.ShapeDtypeStruct((B_pad, D_OUT), jnp.float32),
        grid_spec=pltpu.PrefetchScalarGridSpec(
            num_scalar_prefetch=0,
            grid=(n_tiles,),
            in_specs=[
                pl.BlockSpec((tb, D_IN), lambda i: (i, 0)),     # x tile (unpadded)
                full((D_IN_PAD, D_H1)), full((1, D_H1)),        # fc1 (w1 pre-padded)
                full((D_H1, D_H2)), full((1, D_H2)),            # fc2
                full((D_H2, D_H3)), full((1, D_H3)),            # fc3
                full((1, D_H3)), full((1, D_OUT)),              # fc4 row + bias
            ],
            out_specs=pl.BlockSpec((tb, D_OUT), lambda i: (i, 0)),
            scratch_shapes=[pltpu.VMEM((tb, D_IN_PAD), jnp.bfloat16)],
        ),
        compiler_params=pltpu.CompilerParams(
            dimension_semantics=("parallel",)),
    )(xb, prepared["w1"], prepared["b1"], prepared["w2"], prepared["b2"],
      prepared["w3"], prepared["b3"], prepared["w4t"], prepared["b4"])

    return out[:B] if B_pad != B else out


def init_params(key):
    """Deterministic init matching torch.nn.Linear's U(-1/sqrt(fan_in), 1/sqrt(fan_in))."""
    dims = [(D_IN, D_H1), (D_H1, D_H2), (D_H2, D_H3), (D_H3, D_OUT)]
    params = {}
    for n, (fan_in, fan_out) in enumerate(dims, start=1):
        key, kw, kb = jax.random.split(key, 3)
        bound = 1.0 / jnp.sqrt(float(fan_in))
        params[f"w{n}"] = jax.random.uniform(
            kw, (fan_in, fan_out), jnp.float32, -bound, bound)
        params[f"b{n}"] = jax.random.uniform(
            kb, (1, fan_out), jnp.float32, -bound, bound)
    return params


def _reference(x, p):
    h = jnp.maximum(x @ p["w1"] + p["b1"], 0.0)
    h = jnp.maximum(h @ p["w2"] + p["b2"], 0.0)
    h = jnp.maximum(h @ p["w3"] + p["b3"], 0.0)
    return h @ p["w4"] + p["b4"]


if __name__ == "__main__":
    key = jax.random.PRNGKey(0)
    kx, kp = jax.random.split(key)

    # Non-multiple-of-tile batch: exercises row padding and a 2-step grid
    # (B=300 -> tb=160, B_pad=320, grid=(2,); both TensorCores used on v7x).
    B = 300
    x = jax.random.normal(kx, (B, D_IN), dtype=jnp.float32)
    params = init_params(kp)
    prepared = prepare_params(params)       # one-time weight prep, outside the forward

    out = model_1_forward(x, prepared)
    jax.block_until_ready(out)

    ref = _reference(x, params)
    assert out.shape == (B, D_OUT)
    err = float(jnp.max(jnp.abs(out - ref)))
    # bf16 MXU operands (fc1-fc3) with f32 accumulation and an f32 fc4:
    # loose tolerance vs the f32 reference.
    assert err < 2e-2, f"max abs error {err} vs f32 reference"

    print("KERNEL_OK")
</pallas_src>

<mosaic_0001>
module attributes {stable_mosaic.version = 11 : i64} {
  func.func @_mlp_kernel(%arg0: i32, %arg1: memref<160x18xbf16, #tpu.memory_space<vmem>>, %arg2: memref<128x256xbf16, #tpu.memory_space<vmem>>, %arg3: memref<1x256xf32, #tpu.memory_space<vmem>>, %arg4: memref<256x1024xbf16, #tpu.memory_space<vmem>>, %arg5: memref<1x1024xf32, #tpu.memory_space<vmem>>, %arg6: memref<1024x256xbf16, #tpu.memory_space<vmem>>, %arg7: memref<1x256xf32, #tpu.memory_space<vmem>>, %arg8: memref<1x256xf32, #tpu.memory_space<vmem>>, %arg9: memref<1x1xf32, #tpu.memory_space<vmem>>, %arg10: memref<160x1xf32, #tpu.memory_space<vmem>>, %arg11: memref<160x128xbf16, #tpu.memory_space<vmem>>) attributes {dimension_semantics = [#tpu.dimension_semantics<parallel>], iteration_bounds = array<i64: 2>, scalar_prefetch = 0 : i64, scratch_operands = 1 : i64, tpu.core_type = #tpu.core_type<tc>, window_params = [{transform_indices = @transform_0, window_bounds = array<i64: 160, 18>}, {pipeline_mode = #tpu.pipeline_mode<synchronous>, transform_indices = @transform_1, window_bounds = array<i64: 128, 256>}, {pipeline_mode = #tpu.pipeline_mode<synchronous>, transform_indices = @transform_2, window_bounds = array<i64: 1, 256>}, {pipeline_mode = #tpu.pipeline_mode<synchronous>, transform_indices = @transform_3, window_bounds = array<i64: 256, 1024>}, {pipeline_mode = #tpu.pipeline_mode<synchronous>, transform_indices = @transform_4, window_bounds = array<i64: 1, 1024>}, {pipeline_mode = #tpu.pipeline_mode<synchronous>, transform_indices = @transform_5, window_bounds = array<i64: 1024, 256>}, {pipeline_mode = #tpu.pipeline_mode<synchronous>, transform_indices = @transform_6, window_bounds = array<i64: 1, 256>}, {pipeline_mode = #tpu.pipeline_mode<synchronous>, transform_indices = @transform_7, window_bounds = array<i64: 1, 256>}, {pipeline_mode = #tpu.pipeline_mode<synchronous>, transform_indices = @transform_8, window_bounds = array<i64: 1, 1>}, {transform_indices = @transform_9, window_bounds = array<i64: 160, 1>}]} {
    %cst = arith.constant 0.000000e+00 : bf16
    %0 = vector.broadcast %cst : bf16 to vector<160x128xbf16>
    %c0 = arith.constant 0 : index
    %c0_0 = arith.constant 0 : index
    %1 = vector.load %arg11[%c0, %c0_0] : memref<160x128xbf16, #tpu.memory_space<vmem>>, vector<160x128xbf16>
    tpu.vector_store %arg11[%c0, %c0_0], %0 {strides = array<i32>} : memref<160x128xbf16, #tpu.memory_space<vmem>>, vector<160x128xbf16>,
    %c0_1 = arith.constant 0 : index
    %c0_2 = arith.constant 0 : index
    %2 = vector.load %arg1[%c0_1, %c0_2] : memref<160x18xbf16, #tpu.memory_space<vmem>>, vector<160x18xbf16>
    %c0_3 = arith.constant 0 : index
    %c0_4 = arith.constant 0 : index
    %3 = vector.load %arg11[%c0_3, %c0_4] : memref<160x128xbf16, #tpu.memory_space<vmem>>, vector<160x18xbf16>
    tpu.vector_store %arg11[%c0_3, %c0_4], %2 {strides = array<i32>} : memref<160x128xbf16, #tpu.memory_space<vmem>>, vector<160x18xbf16>,
    %c0_5 = arith.constant 0 : index
    %c0_6 = arith.constant 0 : index
    %4 = vector.load %arg11[%c0_5, %c0_6] : memref<160x128xbf16, #tpu.memory_space<vmem>>, vector<160x128xbf16>
    %c0_7 = arith.constant 0 : index
    %c0_8 = arith.constant 0 : index
    %5 = vector.load %arg2[%c0_7, %c0_8] : memref<128x256xbf16, #tpu.memory_space<vmem>>, vector<128x256xbf16>
    %cst_9 = arith.constant dense<0.000000e+00> : vector<160x256xf32>
    %6 = tpu.matmul %4, %5, %cst_9 {dimension_numbers = #tpu.dot_dimension_numbers<[1], [0], [0], [1], [0, 0, 1, 1], [], []>} : vector<160x128xbf16>, vector<128x256xbf16>, vector<160x256xf32> -> vector<160x256xf32>
    %c0_10 = arith.constant 0 : index
    %c0_11 = arith.constant 0 : index
    %7 = vector.load %arg3[%c0_10, %c0_11] : memref<1x256xf32, #tpu.memory_space<vmem>>, vector<1x256xf32>
    %8 = vector.broadcast %7 : vector<1x256xf32> to vector<160x256xf32>
    %9 = arith.addf %6, %8 : vector<160x256xf32>
    %cst_12 = arith.constant 0.000000e+00 : f32
    %10 = vector.broadcast %cst_12 : f32 to vector<160x256xf32>
    %11 = arith.maximumf %9, %10 : vector<160x256xf32>
    %12 = arith.truncf %11 : vector<160x256xf32> to vector<160x256xbf16>
    %c0_13 = arith.constant 0 : index
    %c0_14 = arith.constant 0 : index
    %13 = vector.load %arg4[%c0_13, %c0_14] : memref<256x1024xbf16, #tpu.memory_space<vmem>>, vector<256x1024xbf16>
    %cst_15 = arith.constant dense<0.000000e+00> : vector<160x1024xf32>
    %14 = tpu.matmul %12, %13, %cst_15 {dimension_numbers = #tpu.dot_dimension_numbers<[1], [0], [0], [1], [0, 0, 1, 1], [], []>} : vector<160x256xbf16>, vector<256x1024xbf16>, vector<160x1024xf32> -> vector<160x1024xf32>
    %c0_16 = arith.constant 0 : index
    %c0_17 = arith.constant 0 : index
    %15 = vector.load %arg5[%c0_16, %c0_17] : memref<1x1024xf32, #tpu.memory_space<vmem>>, vector<1x1024xf32>
    %16 = vector.broadcast %15 : vector<1x1024xf32> to vector<160x1024xf32>
    %17 = arith.addf %14, %16 : vector<160x1024xf32>
    %cst_18 = arith.constant 0.000000e+00 : f32
    %18 = vector.broadcast %cst_18 : f32 to vector<160x1024xf32>
    %19 = arith.maximumf %17, %18 : vector<160x1024xf32>
    %20 = arith.truncf %19 : vector<160x1024xf32> to vector<160x1024xbf16>
    %c0_19 = arith.constant 0 : index
    %c0_20 = arith.constant 0 : index
    %21 = vector.load %arg6[%c0_19, %c0_20] : memref<1024x256xbf16, #tpu.memory_space<vmem>>, vector<1024x256xbf16>
    %cst_21 = arith.constant dense<0.000000e+00> : vector<160x256xf32>
    %22 = tpu.matmul %20, %21, %cst_21 {dimension_numbers = #tpu.dot_dimension_numbers<[1], [0], [0], [1], [0, 0, 1, 1], [], []>} : vector<160x1024xbf16>, vector<1024x256xbf16>, vector<160x256xf32> -> vector<160x256xf32>
    %c0_22 = arith.constant 0 : index
    %c0_23 = arith.constant 0 : index
    %23 = vector.load %arg7[%c0_22, %c0_23] : memref<1x256xf32, #tpu.memory_space<vmem>>, vector<1x256xf32>
    %24 = vector.broadcast %23 : vector<1x256xf32> to vector<160x256xf32>
    %25 = arith.addf %22, %24 : vector<160x256xf32>
    %cst_24 = arith.constant 0.000000e+00 : f32
    %26 = vector.broadcast %cst_24 : f32 to vector<160x256xf32>
    %27 = arith.maximumf %25, %26 : vector<160x256xf32>
    %c0_25 = arith.constant 0 : index
    %c0_26 = arith.constant 0 : index
    %28 = vector.load %arg8[%c0_25, %c0_26] : memref<1x256xf32, #tpu.memory_space<vmem>>, vector<1x256xf32>
    %29 = vector.broadcast %28 : vector<1x256xf32> to vector<160x256xf32>
    %30 = arith.mulf %27, %29 : vector<160x256xf32>
    %cst_27 = arith.constant dense<0.000000e+00> : vector<160xf32>
    %31 = vector.multi_reduction <add>, %30, %cst_27 [1] : vector<160x256xf32> to vector<160xf32>
    %32 = vector.shape_cast %31 : vector<160xf32> to vector<160x1xf32>
    %c0_28 = arith.constant 0 : index
    %c0_29 = arith.constant 0 : index
    %33 = vector.load %arg9[%c0_28, %c0_29] : memref<1x1xf32, #tpu.memory_space<vmem>>, vector<1x1xf32>
    %34 = vector.broadcast %33 : vector<1x1xf32> to vector<160x1xf32>
    %35 = arith.addf %32, %34 : vector<160x1xf32>
    %c0_30 = arith.constant 0 : index
    %c0_31 = arith.constant 0 : index
    %36 = vector.load %arg10[%c0_30, %c0_31] : memref<160x1xf32, #tpu.memory_space<vmem>>, vector<160x1xf32>
    tpu.vector_store %arg10[%c0_30, %c0_31], %35 {strides = array<i32>} : memref<160x1xf32, #tpu.memory_space<vmem>>, vector<160x1xf32>,
    return
  }
  func.func @transform_0(%arg0: i32) -> (i32, i32) {
    %c0_i32 = arith.constant 0 : i32
    %c0_i32_0 = arith.constant 0 : i32
    return %arg0, %c0_i32 : i32, i32
  }
  func.func @transform_1(%arg0: i32) -> (i32, i32) {
    %c0_i32 = arith.constant 0 : i32
    %c0_i32_0 = arith.constant 0 : i32
    %c0_i32_1 = arith.constant 0 : i32
    return %c0_i32, %c0_i32_0 : i32, i32
  }
  func.func @transform_2(%arg0: i32) -> (i32, i32) {
    %c0_i32 = arith.constant 0 : i32
    %c0_i32_0 = arith.constant 0 : i32
    %c0_i32_1 = arith.constant 0 : i32
    return %c0_i32, %c0_i32_0 : i32, i32
  }
  func.func @transform_3(%arg0: i32) -> (i32, i32) {
    %c0_i32 = arith.constant 0 : i32
    %c0_i32_0 = arith.constant 0 : i32
    %c0_i32_1 = arith.constant 0 : i32
    return %c0_i32, %c0_i32_0 : i32, i32
  }
  func.func @transform_4(%arg0: i32) -> (i32, i32) {
    %c0_i32 = arith.constant 0 : i32
    %c0_i32_0 = arith.constant 0 : i32
    %c0_i32_1 = arith.constant 0 : i32
    return %c0_i32, %c0_i32_0 : i32, i32
  }
  func.func @transform_5(%arg0: i32) -> (i32, i32) {
    %c0_i32 = arith.constant 0 : i32
    %c0_i32_0 = arith.constant 0 : i32
    %c0_i32_1 = arith.constant 0 : i32
    return %c0_i32, %c0_i32_0 : i32, i32
  }
  func.func @transform_6(%arg0: i32) -> (i32, i32) {
    %c0_i32 = arith.constant 0 : i32
    %c0_i32_0 = arith.constant 0 : i32
    %c0_i32_1 = arith.constant 0 : i32
    return %c0_i32, %c0_i32_0 : i32, i32
  }
  func.func @transform_7(%arg0: i32) -> (i32, i32) {
    %c0_i32 = arith.constant 0 : i32
    %c0_i32_0 = arith.constant 0 : i32
    %c0_i32_1 = arith.constant 0 : i32
    return %c0_i32, %c0_i32_0 : i32, i32
  }
  func.func @transform_8(%arg0: i32) -> (i32, i32) {
    %c0_i32 = arith.constant 0 : i32
    %c0_i32_0 = arith.constant 0 : i32
    %c0_i32_1 = arith.constant 0 : i32
    return %c0_i32, %c0_i32_0 : i32, i32
  }
  func.func @transform_9(%arg0: i32) -> (i32, i32) {
    %c0_i32 = arith.constant 0 : i32
    %c0_i32_0 = arith.constant 0 : i32
    return %arg0, %c0_i32 : i32, i32
  }
}

</mosaic_0001>

<llo_original>
// kernel: model_1_forward.1
$region0: #{model_1_forward.1}
  #allocation0 [shape = 'u32[]', space=smem, size = 0x4, offset = 0x4, fixed_abs, tag = 'smem constant byte address 0x4 - core index']
  #allocation1 [shape = 'u32[144,128]{1,0:T(1,128)}', space=vmem, size = 0x12000, scoped, tag = 'internal scratch']
  #allocation2 [shape = 'bf16[160,128]{1,0:T(16,128)(2,1)}', space=vmem, size = 0xa000, scoped, tag = 'scratch operand']
  #allocation3 [shape = 'f32[1,1]{1,0:T(1,128)S(1)}', space=vmem, size = 0x200, scoped, tag = 'scoped memory for model_1_forward.1']
  %s0 = inlined_call_operand.vmem [shape: bf16[320,18], index: 0, kind: input, shape index: {}]
  %s1 = inlined_call_operand.vmem [shape: bf16[128,256], index: 1, kind: input, shape index: {}]
  %s2 = inlined_call_operand.vmem [shape: f32[1,256], index: 2, kind: input, shape index: {}]
  %s3 = inlined_call_operand.hbm [shape: bf16[256,1024], index: 3, kind: input, shape index: {}]
  %s4 = inlined_call_operand.vmem [shape: f32[1,1024], index: 4, kind: input, shape index: {}]
  %s5 = inlined_call_operand.hbm [shape: bf16[1024,256], index: 5, kind: input, shape index: {}]
  %s6 = inlined_call_operand.vmem [shape: f32[1,256], index: 6, kind: input, shape index: {}]
  %s7 = inlined_call_operand.vmem [shape: f32[1,256], index: 7, kind: input, shape index: {}]
  %s8 = inlined_call_operand.<no memory space> [shape: f32[1,1], index: 8, kind: input, shape index: {}]
  %s9 = inlined_call_operand.vmem [shape: f32[320,1], index: 9, kind: output, shape index: {}]
  %s10 = sld [smem:[#allocation0]]
  $region77: #{model_1_forward.1} parent=0
    _
  %s12 = ssub.s32 1, %s10
  %s13 = scalar_select 0, %s12, %s10
  %v14 = vstv %s8
  %15 = vst [vmem:[#allocation3] sm:$0x1] %v14
  $region1: #{model_1_forward.1} parent=0
    #allocation4 [shape = 'u8[524288]{0}', space=vmem, size = 0x80000, scoped, tag = 'input window, operand 3, single buffered']
    #allocation5 [shape = 's32[2]{0}', space=sflag, size = 0x8, scoped, tag = 'scoped memory for model_1_forward.1']
    #allocation6 [shape = 'u8[524288]{0}', space=vmem, size = 0x80000, scoped, tag = 'input window, operand 5, single buffered']
    #allocation7 [shape = 's32[1]{0}', space=sflag, size = 0x4, scoped, tag = 'scoped memory for model_1_forward.1']
    %16 = vsyncpa [#allocation5], 0
    %17 = vsyncpa [#allocation7], 0
    loop: start=0, step=1, limit=4
    $region2: #{model_1_forward.1} parent=1 // loop_pre_header
      _
    $region3: #{model_1_forward.1} parent=1 // loop_header
      %s19 = sphi 0, %s23
      %p20 = scmp.ge.s32.totalorder %s19, 4
      %s29 = sphi 0, %s31
      %s32 = sphi 0, %s29
      %s33 = sphi 0, %s32
      %s49 = sphi 0, %s33
      %s53 = sphi 0, %s53
      %s55 = sphi 0, %s53
      %s56 = sphi 0, %s55
      %s70 = sphi 0, %s56
      %s74 = sphi 0, %s74
      %s76 = sphi 0, %s74
      %s77 = sphi 0, %s76
      %s91 = sphi 0, %s77
      %s95 = sphi 0, %s95
      %s97 = sphi 0, %s95
      %s98 = sphi 0, %s97
      %s112 = sphi 0, %s98
      %s116 = sphi 0, %s116
      %s118 = sphi 0, %s116
      %s119 = sphi 0, %s118
      %s133 = sphi 0, %s119
      %s137 = sphi 0, %s137
      %s139 = sphi 0, %s137
      %s140 = sphi 0, %s139
      %s154 = sphi 0, %s140
      %s158 = sphi 0, %s158
      %s160 = sphi 0, %s158
      %s161 = sphi 0, %s160
      %s175 = sphi 0, %s161
      %s179 = sphi 0, %s179
      %s181 = sphi 0, %s179
      %s182 = sphi 0, %s181
      %s196 = sphi 0, %s182
      %s200 = sphi 0, %s200
      %s202 = sphi 0, %s200
      %s203 = sphi 0, %s202
      %s217 = sphi 0, %s203
      %s223 = sphi 0, %s225
      %s226 = sphi 0, %s223
      %s227 = sphi 0, %s226
      %s243 = sphi 0, %s227
    $region4: #{model_1_forward.1} parent=1 // loop_header_branch
      %22 = sbr.rel (%p20) target = $region8
    $region5: #{model_1_forward.1} parent=1 // loop_body
      %s24 = ssub.s32 %s19, 1
      %s25 = ssub.s32 %s19, 2
      %s26 = sadd.s32 %s19, 1
      %s27 = ssub.s32 %s19, %s26
      %p28 = scmp.eq.s32.totalorder %s27, 0
      %s30 = sadd.s32 %s29, 1
      %s31 = scalar_select %p28, %s29, %s30
      %p34 = pneg %p28
      %p35 = scmp.eq.s32.totalorder %s19, 1
      %p36 = por %p34, %p35
      %p37 = scmp.ne.s32.totalorder %s29, %s32
      %p38 = scmp.eq.s32.totalorder %s19, 0
      %p39 = por %p37, %p38
      %p40 = scmp.ne.s32.totalorder %s29, %s32
      %p41 = scmp.eq.s32.totalorder %s24, 1
      %p42 = por %p40, %p41
      %p43 = scmp.ne.s32.totalorder %s32, %s33
      %p44 = scmp.eq.s32.totalorder %s24, 0
      %p45 = por %p43, %p44
      %p46 = scmp.ne.s32.totalorder %s32, %s33
      %p47 = scmp.eq.s32.totalorder %s25, 1
      %p48 = por %p46, %p47
      %p50 = scmp.ne.s32.totalorder %s33, %s49
      %p51 = scmp.eq.s32.totalorder %s25, 0
      %p52 = por %p50, %p51
      %s54 = sadd.s32 %s53, 1
      %p57 = scmp.eq.s32.totalorder %s19, 1
      %p58 = scmp.ne.s32.totalorder %s53, %s55
      %p59 = scmp.eq.s32.totalorder %s19, 0
      %p60 = por %p58, %p59
      %p61 = scmp.ne.s32.totalorder %s53, %s55
      %p62 = scmp.eq.s32.totalorder %s24, 1
      %p63 = por %p61, %p62
      %p64 = scmp.ne.s32.totalorder %s55, %s56
      %p65 = scmp.eq.s32.totalorder %s24, 0
      %p66 = por %p64, %p65
      %p67 = scmp.ne.s32.totalorder %s55, %s56
      %p68 = scmp.eq.s32.totalorder %s25, 1
      %p69 = por %p67, %p68
      %p71 = scmp.ne.s32.totalorder %s56, %s70
      %p72 = scmp.eq.s32.totalorder %s25, 0
      %p73 = por %p71, %p72
      %s75 = sadd.s32 %s74, 1
      %p78 = scmp.eq.s32.totalorder %s19, 1
      %p79 = scmp.ne.s32.totalorder %s74, %s76
      %p80 = scmp.eq.s32.totalorder %s19, 0
      %p81 = por %p79, %p80
      %p82 = scmp.ne.s32.totalorder %s74, %s76
      %p83 = scmp.eq.s32.totalorder %s24, 1
      %p84 = por %p82, %p83
      %p85 = scmp.ne.s32.totalorder %s76, %s77
      %p86 = scmp.eq.s32.totalorder %s24, 0
      %p87 = por %p85, %p86
      %p88 = scmp.ne.s32.totalorder %s76, %s77
      %p89 = scmp.eq.s32.totalorder %s25, 1
      %p90 = por %p88, %p89
      %p92 = scmp.ne.s32.totalorder %s77, %s91
      %p93 = scmp.eq.s32.totalorder %s25, 0
      %p94 = por %p92, %p93
      %s96 = sadd.s32 %s95, 1
      %p99 = scmp.eq.s32.totalorder %s19, 1
      %p100 = scmp.ne.s32.totalorder %s95, %s97
      %p101 = scmp.eq.s32.totalorder %s19, 0
      %p102 = por %p100, %p101
      %p103 = scmp.ne.s32.totalorder %s95, %s97
      %p104 = scmp.eq.s32.totalorder %s24, 1
      %p105 = por %p103, %p104
      %p106 = scmp.ne.s32.totalorder %s97, %s98
      %p107 = scmp.eq.s32.totalorder %s24, 0
      %p108 = por %p106, %p107
      %p109 = scmp.ne.s32.totalorder %s97, %s98
      %p110 = scmp.eq.s32.totalorder %s25, 1
      %p111 = por %p109, %p110
      %p113 = scmp.ne.s32.totalorder %s98, %s112
      %p114 = scmp.eq.s32.totalorder %s25, 0
      %p115 = por %p113, %p114
      %s117 = sadd.s32 %s116, 1
      %p120 = scmp.eq.s32.totalorder %s19, 1
      %p121 = scmp.ne.s32.totalorder %s116, %s118
      %p122 = scmp.eq.s32.totalorder %s19, 0
      %p123 = por %p121, %p122
      %p124 = scmp.ne.s32.totalorder %s116, %s118
      %p125 = scmp.eq.s32.totalorder %s24, 1
      %p126 = por %p124, %p125
      %p127 = scmp.ne.s32.totalorder %s118, %s119
      %p128 = scmp.eq.s32.totalorder %s24, 0
      %p129 = por %p127, %p128
      %p130 = scmp.ne.s32.totalorder %s118, %s119
      %p131 = scmp.eq.s32.totalorder %s25, 1
      %p132 = por %p130, %p131
      %p134 = scmp.ne.s32.totalorder %s119, %s133
      %p135 = scmp.eq.s32.totalorder %s25, 0
      %p136 = por %p134, %p135
      %s138 = sadd.s32 %s137, 1
      %p141 = scmp.eq.s32.totalorder %s19, 1
      %p142 = scmp.ne.s32.totalorder %s137, %s139
      %p143 = scmp.eq.s32.totalorder %s19, 0
      %p144 = por %p142, %p143
      %p145 = scmp.ne.s32.totalorder %s137, %s139
      %p146 = scmp.eq.s32.totalorder %s24, 1
      %p147 = por %p145, %p146
      %p148 = scmp.ne.s32.totalorder %s139, %s140
      %p149 = scmp.eq.s32.totalorder %s24, 0
      %p150 = por %p148, %p149
      %p151 = scmp.ne.s32.totalorder %s139, %s140
      %p152 = scmp.eq.s32.totalorder %s25, 1
      %p153 = por %p151, %p152
      %p155 = scmp.ne.s32.totalorder %s140, %s154
      %p156 = scmp.eq.s32.totalorder %s25, 0
      %p157 = por %p155, %p156
      %s159 = sadd.s32 %s158, 1
      %p162 = scmp.eq.s32.totalorder %s19, 1
      %p163 = scmp.ne.s32.totalorder %s158, %s160
      %p164 = scmp.eq.s32.totalorder %s19, 0
      %p165 = por %p163, %p164
      %p166 = scmp.ne.s32.totalorder %s158, %s160
      %p167 = scmp.eq.s32.totalorder %s24, 1
      %p168 = por %p166, %p167
      %p169 = scmp.ne.s32.totalorder %s160, %s161
      %p170 = scmp.eq.s32.totalorder %s24, 0
      %p171 = por %p169, %p170
      %p172 = scmp.ne.s32.totalorder %s160, %s161
      %p173 = scmp.eq.s32.totalorder %s25, 1
      %p174 = por %p172, %p173
      %p176 = scmp.ne.s32.totalorder %s161, %s175
      %p177 = scmp.eq.s32.totalorder %s25, 0
      %p178 = por %p176, %p177
      %s180 = sadd.s32 %s179, 1
      %p183 = scmp.eq.s32.totalorder %s19, 1
      %p184 = scmp.ne.s32.totalorder %s179, %s181
      %p185 = scmp.eq.s32.totalorder %s19, 0
      %p186 = por %p184, %p185
      %p187 = scmp.ne.s32.totalorder %s179, %s181
      %p188 = scmp.eq.s32.totalorder %s24, 1
      %p189 = por %p187, %p188
      %p190 = scmp.ne.s32.totalorder %s181, %s182
      %p191 = scmp.eq.s32.totalorder %s24, 0
      %p192 = por %p190, %p191
      %p193 = scmp.ne.s32.totalorder %s181, %s182
      %p194 = scmp.eq.s32.totalorder %s25, 1
      %p195 = por %p193, %p194
      %p197 = scmp.ne.s32.totalorder %s182, %s196
      %p198 = scmp.eq.s32.totalorder %s25, 0
      %p199 = por %p197, %p198
      %s201 = sadd.s32 %s200, 1
      %p204 = scmp.eq.s32.totalorder %s19, 1
      %p205 = scmp.ne.s32.totalorder %s200, %s202
      %p206 = scmp.eq.s32.totalorder %s19, 0
      %p207 = por %p205, %p206
      %p208 = scmp.ne.s32.totalorder %s200, %s202
      %p209 = scmp.eq.s32.totalorder %s24, 1
      %p210 = por %p208, %p209
      %p211 = scmp.ne.s32.totalorder %s202, %s203
      %p212 = scmp.eq.s32.totalorder %s24, 0
      %p213 = por %p211, %p212
      %p214 = scmp.ne.s32.totalorder %s202, %s203
      %p215 = scmp.eq.s32.totalorder %s25, 1
      %p216 = por %p214, %p215
      %p218 = scmp.ne.s32.totalorder %s203, %s217
      %p219 = scmp.eq.s32.totalorder %s25, 0
      %p220 = por %p218, %p219
      %s221 = ssub.s32 %s19, %s26
      %p222 = scmp.eq.s32.totalorder %s221, 0
      %s224 = sadd.s32 %s223, 1
      %s225 = scalar_select %p222, %s223, %s224
      %p228 = pneg %p222
      %p229 = scmp.eq.s32.totalorder %s19, 1
      %p230 = por %p228, %p229
      %p231 = scmp.ne.s32.totalorder %s223, %s226
      %p232 = scmp.eq.s32.totalorder %s19, 0
      %p233 = por %p231, %p232
      %p234 = scmp.ne.s32.totalorder %s223, %s226
      %p235 = scmp.eq.s32.totalorder %s24, 1
      %p236 = por %p234, %p235
      %p237 = scmp.ne.s32.totalorder %s226, %s227
      %p238 = scmp.eq.s32.totalorder %s24, 0
      %p239 = por %p237, %p238
      %p240 = scmp.ne.s32.totalorder %s226, %s227
      %p241 = scmp.eq.s32.totalorder %s25, 1
      %p242 = por %p240, %p241
      %p244 = scmp.ne.s32.totalorder %s227, %s243
      %p245 = scmp.eq.s32.totalorder %s25, 0
      %p246 = por %p244, %p245
      %p247 = scmp.le.s32.totalorder 1, %s19
      %p248 = scmp.lt.s32.totalorder %s19, 3
      %p249 = pnand %p247, %p248
      %p250 = pneg %p249
      // Predicated region
      $region9: #{model_1_forward.1} parent=5 // pred_check
        _
      $region10: #{model_1_forward.1} parent=5 // pred_check_branch
        %252 = sbr.rel (%p249) target = $region12
      $region11: #{model_1_forward.1} parent=5 // pred_region
        %s253 = ssub.s32 %s19, 1
        // Predicated region
        $region13: #{model_1_forward.1} parent=11 // pred_check
          %p254 = pneg %p66
        $region14: #{model_1_forward.1} parent=11 // pred_check_branch
          %256 = sbr.rel (%p254) target = $region16
        $region15: #{model_1_forward.1} parent=11 // pred_region
          _
        $region16: #{model_1_forward.1} parent=11 // pred_fallthru
          _
        // Predicated region
        $region17: #{model_1_forward.1} parent=11 // pred_check
          %p257 = pneg %p87
        $region18: #{model_1_forward.1} parent=11 // pred_check_branch
          %259 = sbr.rel (%p257) target = $region20
        $region19: #{model_1_forward.1} parent=11 // pred_region
          _
        $region20: #{model_1_forward.1} parent=11 // pred_fallthru
          _
        // Predicated region
        $region21: #{model_1_forward.1} parent=11 // pred_check
          %p260 = pneg %p108
        $region22: #{model_1_forward.1} parent=11 // pred_check_branch
          %262 = sbr.rel (%p260) target = $region24
        $region23: #{model_1_forward.1} parent=11 // pred_region
          %s264 = ssub.s32 16384, 16384
          %265 = vsyncadd [#allocation5], %s264
          %s266 = sshll.u32 [#allocation4], 4
          %s267 = int_to_ptr.vmem [resolvable:$true] %s266
          %272 = dma.hbm_to_vmem [thread:$0]  %s3, 16384, %s267, [#allocation5], 512, 512, 32
        $region24: #{model_1_forward.1} parent=11 // pred_fallthru
          _
        // Predicated region
        $region25: #{model_1_forward.1} parent=11 // pred_check
          %p273 = pneg %p129
        $region26: #{model_1_forward.1} parent=11 // pred_check_branch
          %275 = sbr.rel (%p273) target = $region28
        $region27: #{model_1_forward.1} parent=11 // pred_region
          _
        $region28: #{model_1_forward.1} parent=11 // pred_fallthru
          _
        // Predicated region
        $region29: #{model_1_forward.1} parent=11 // pred_check
          %p276 = pneg %p150
        $region30: #{model_1_forward.1} parent=11 // pred_check_branch
          %278 = sbr.rel (%p276) target = $region32
        $region31: #{model_1_forward.1} parent=11 // pred_region
          %s280 = ssub.s32 16384, 16384
          %281 = vsyncadd [#allocation7], %s280
          %s282 = sshll.u32 [#allocation6], 4
          %s283 = int_to_ptr.vmem [resolvable:$true] %s282
          %288 = dma.hbm_to_vmem [thread:$0]  %s5, 16384, %s283, [#allocation7], 128, 128, 8
        $region32: #{model_1_forward.1} parent=11 // pred_fallthru
          _
        // Predicated region
        $region33: #{model_1_forward.1} parent=11 // pred_check
          %p289 = pneg %p171
        $region34: #{model_1_forward.1} parent=11 // pred_check_branch
          %291 = sbr.rel (%p289) target = $region36
        $region35: #{model_1_forward.1} parent=11 // pred_region
          _
        $region36: #{model_1_forward.1} parent=11 // pred_fallthru
          _
        // Predicated region
        $region37: #{model_1_forward.1} parent=11 // pred_check
          %p292 = pneg %p192
        $region38: #{model_1_forward.1} parent=11 // pred_check_branch
          %294 = sbr.rel (%p292) target = $region40
        $region39: #{model_1_forward.1} parent=11 // pred_region
          _
        $region40: #{model_1_forward.1} parent=11 // pred_fallthru
          _
        // Predicated region
        $region41: #{model_1_forward.1} parent=11 // pred_check
          %p295 = pneg %p213
        $region42: #{model_1_forward.1} parent=11 // pred_check_branch
          %297 = sbr.rel (%p295) target = $region44
        $region43: #{model_1_forward.1} parent=11 // pred_region
          _
        $region44: #{model_1_forward.1} parent=11 // pred_fallthru
          _
      $region12: #{model_1_forward.1} parent=5 // pred_fallthru
        _
      %p298 = scmp.lt.s32.totalorder %s19, 2
      // Predicated region
      $region45: #{model_1_forward.1} parent=5 // pred_check
        %p299 = pneg %p298
      $region46: #{model_1_forward.1} parent=5 // pred_check_branch
        %301 = sbr.rel (%p299) target = $region48
      $region47: #{model_1_forward.1} parent=5 // pred_region
        // Predicated region
        $region49: #{model_1_forward.1} parent=47 // pred_check
          %p302 = pneg %p39
        $region50: #{model_1_forward.1} parent=47 // pred_check_branch
          %304 = sbr.rel (%p302) target = $region52
        $region51: #{model_1_forward.1} parent=47 // pred_region
          %s305 = smul.u32 20, %s19
          %p306 = scmp.lt.s32.totalorder %s305, 39
          %s307 = scalar_select %p306, %s305, 39
          %s308 = smul.addr %s307, 4
          %s309 = scalar_lea.vmem %s0, %s308
          %s310 = smul.u32 20, %s19
        $region52: #{model_1_forward.1} parent=47 // pred_fallthru
          _
      $region48: #{model_1_forward.1} parent=5 // pred_fallthru
        _
      %p311 = scmp.le.s32.totalorder 1, %s19
      %p312 = scmp.lt.s32.totalorder %s19, 3
      %p313 = pnand %p311, %p312
      %p314 = pneg %p313
      // Predicated region
      $region53: #{model_1_forward.1} parent=5 // pred_check
        _
      $region54: #{model_1_forward.1} parent=5 // pred_check_branch
        %316 = sbr.rel (%p313) target = $region56
      $region55: #{model_1_forward.1} parent=5 // pred_region
        %s317 = ssub.s32 %s19, 1
        // Predicated region
        $region57: #{model_1_forward.1} parent=55 // pred_check
          %p318 = pneg %p108
        $region58: #{model_1_forward.1} parent=55 // pred_check_branch
          %320 = sbr.rel (%p318) target = $region60
        $region59: #{model_1_forward.1} parent=55 // pred_region
          %321 = dma.done [#allocation5], 16384
        $region60: #{model_1_forward.1} parent=55 // pred_fallthru
          _
        // Predicated region
        $region61: #{model_1_forward.1} parent=55 // pred_check
          %p322 = pneg %p150
        $region62: #{model_1_forward.1} parent=55 // pred_check_branch
          %324 = sbr.rel (%p322) target = $region64
        $region63: #{model_1_forward.1} parent=55 // pred_region
          %325 = dma.done [#allocation7], 16384
        $region64: #{model_1_forward.1} parent=55 // pred_fallthru
          _
        %s326 = smul.u32 20, %s24
        %p327 = scmp.lt.s32.totalorder %s326, 39
        %s328 = scalar_select %p327, %s326, 39
        %s329 = smul.addr %s328, 4
        %s330 = scalar_lea.vmem %s0, %s329
        %p331 = pneg %p45
        %p332 = pneg %p42
        %p333 = pneg %p66
        %p334 = pneg %p63
        %p335 = pneg %p87
        %p336 = pneg %p84
        %p337 = pneg %p108
        %p338 = pneg %p105
        %p339 = pneg %p129
        %p340 = pneg %p126
        %p341 = pneg %p150
        %p342 = pneg %p147
        %p343 = pneg %p171
        %p344 = pneg %p168
        %p345 = pneg %p192
        %p346 = pneg %p189
        %p347 = pneg %p213
        %p348 = pneg %p210
        %p349 = pneg %p239
        %p350 = pneg %p236
        %s351 = smul.u32 20, %s24
        %p352 = scmp.lt.s32.totalorder %s351, 39
        %s353 = scalar_select %p352, %s351, 39
        %s354 = smul.addr %s353, 8
        %s355 = scalar_lea.vmem %s9, %s354
        %s356 = smul.u32 20, %s24
        %p357 = scmp.lt.s32.totalorder %s356, 39
        %s358 = scalar_select %p357, %s356, 39
        %s359 = smul.addr %s358, 4
        %s360 = scalar_lea.vmem %s0, %s359
        %s361 = smul.u32 20, %s24
        %s362 = smul.u32 20, %s24
        %p363 = scmp.lt.s32.totalorder %s362, 39
        %s364 = scalar_select %p363, %s362, 39
        %s365 = smul.addr %s364, 8
        %s366 = scalar_lea.vmem %s9, %s365
        %s367 = smul.u32 20, %s24
        %369 = vst [vmem:[#allocation2] sm:$0xff] 0
        %370 = vst [vmem:[#allocation2 + $0x8] sm:$0xff] 0
        %371 = vst [vmem:[#allocation2 + $0x10] sm:$0xff] 0
        %372 = vst [vmem:[#allocation2 + $0x18] sm:$0xff] 0
        %373 = vst [vmem:[#allocation2 + $0x20] sm:$0xff] 0
        %374 = vst [vmem:[#allocation2 + $0x28] sm:$0xff] 0
        %375 = vst [vmem:[#allocation2 + $0x30] sm:$0xff] 0
        %376 = vst [vmem:[#allocation2 + $0x38] sm:$0xff] 0
        %377 = vst [vmem:[#allocation2 + $0x40] sm:$0xff] 0
        %378 = vst [vmem:[#allocation2 + $0x48] sm:$0xff] 0
        %v379 = vld [vmem:[%s360] sm:$0xf]
        %v380 = vld [vmem:[%s360 + $0x4] sm:$0xf]
        %v381 = vld [vmem:[%s360 + $0x8] sm:$0xf]
        %v382 = vld [vmem:[%s360 + $0xc] sm:$0xf]
        %v383 = vld [vmem:[%s360 + $0x10] sm:$0xf]
        %v384 = vld [vmem:[%s360 + $0x14] sm:$0xf]
        %v385 = vld [vmem:[%s360 + $0x18] sm:$0xf]
        %v386 = vld [vmem:[%s360 + $0x1c] sm:$0xf]
        %v387 = vld [vmem:[%s360 + $0x20] sm:$0xf]
        %v388 = vld [vmem:[%s360 + $0x24] sm:$0xf]
        %v389 = vld [vmem:[%s360 + $0x28] sm:$0xf]
        %v390 = vld [vmem:[%s360 + $0x2c] sm:$0xf]
        %v391 = vld [vmem:[%s360 + $0x30] sm:$0xf]
        %v392 = vld [vmem:[%s360 + $0x34] sm:$0xf]
        %v393 = vld [vmem:[%s360 + $0x38] sm:$0xf]
        %v394 = vld [vmem:[%s360 + $0x3c] sm:$0xf]
        %v395 = vld [vmem:[%s360 + $0x40] sm:$0xf]
        %v396 = vld [vmem:[%s360 + $0x44] sm:$0xf]
        %v397 = vld [vmem:[%s360 + $0x48] sm:$0xf]
        %v398 = vld [vmem:[%s360 + $0x4c] sm:$0xf]
        %v419 = vunpack.c.l.b16 %v379
        %v420 = vunpack.c.l.b16 %v380
        %v421 = vunpack.c.l.b16 %v381
        %v422 = vunpack.c.l.b16 %v382
        %v423 = vunpack.c.l.b16 %v383
        %v424 = vunpack.c.l.b16 %v384
        %v425 = vunpack.c.l.b16 %v385
        %v426 = vunpack.c.l.b16 %v386
        %v427 = vunpack.c.l.b16 %v387
        %v428 = vunpack.c.l.b16 %v388
        %v429 = vunpack.c.l.b16 %v389
        %v430 = vunpack.c.l.b16 %v390
        %v431 = vunpack.c.l.b16 %v391
        %v432 = vunpack.c.l.b16 %v392
        %v433 = vunpack.c.l.b16 %v393
        %v434 = vunpack.c.l.b16 %v394
        %v435 = vunpack.c.l.b16 %v395
        %v436 = vunpack.c.l.b16 %v396
        %v437 = vunpack.c.l.b16 %v397
        %v438 = vunpack.c.l.b16 %v398
        %v439 = vpack.c.b16 %v420, %v419
        %v440 = vpack.c.b16 %v422, %v421
        %v441 = vpack.c.b16 %v424, %v423
        %v442 = vpack.c.b16 %v426, %v425
        %v443 = vpack.c.b16 %v428, %v427
        %v444 = vpack.c.b16 %v430, %v429
        %v445 = vpack.c.b16 %v432, %v431
        %v446 = vpack.c.b16 %v434, %v433
        %v447 = vpack.c.b16 %v436, %v435
        %v448 = vpack.c.b16 %v438, %v437
        %vm459 = vcmask 146432
        %460 = vst.msk [vmem:[#allocation2] sm:$0xff] %vm459, %v439
        %461 = vst.msk [vmem:[#allocation2 + $0x8] sm:$0xff] %vm459, %v440
        %462 = vst.msk [vmem:[#allocation2 + $0x10] sm:$0xff] %vm459, %v441
        %463 = vst.msk [vmem:[#allocation2 + $0x18] sm:$0xff] %vm459, %v442
        %464 = vst.msk [vmem:[#allocation2 + $0x20] sm:$0xff] %vm459, %v443
        %465 = vst.msk [vmem:[#allocation2 + $0x28] sm:$0xff] %vm459, %v444
        %466 = vst.msk [vmem:[#allocation2 + $0x30] sm:$0xff] %vm459, %v445
        %467 = vst.msk [vmem:[#allocation2 + $0x38] sm:$0xff] %vm459, %v446
        %468 = vst.msk [vmem:[#allocation2 + $0x40] sm:$0xff] %vm459, %v447
        %469 = vst.msk [vmem:[#allocation2 + $0x48] sm:$0xff] %vm459, %v448
        %v470 = vld [vmem:[#allocation2] sm:$0xff]
        %v471 = vld [vmem:[#allocation2 + $0x8] sm:$0xff]
        %v472 = vld [vmem:[#allocation2 + $0x10] sm:$0xff]
        %v473 = vld [vmem:[#allocation2 + $0x18] sm:$0xff]
        %v474 = vld [vmem:[#allocation2 + $0x20] sm:$0xff]
        %v475 = vld [vmem:[#allocation2 + $0x28] sm:$0xff]
        %v476 = vld [vmem:[#allocation2 + $0x30] sm:$0xff]
        %v477 = vld [vmem:[#allocation2 + $0x38] sm:$0xff]
        %v478 = vld [vmem:[#allocation2 + $0x40] sm:$0xff]
        %v479 = vld [vmem:[#allocation2 + $0x48] sm:$0xff]
        %v480 = vld [vmem:[%s1] sm:$0xff]
        %v481 = vld [vmem:[%s1 + $0x8] sm:$0xff]
        %v482 = vld [vmem:[%s1 + $0x10] sm:$0xff]
        %v483 = vld [vmem:[%s1 + $0x18] sm:$0xff]
        %v484 = vld [vmem:[%s1 + $0x20] sm:$0xff]
        %v485 = vld [vmem:[%s1 + $0x28] sm:$0xff]
        %v486 = vld [vmem:[%s1 + $0x30] sm:$0xff]
        %v487 = vld [vmem:[%s1 + $0x38] sm:$0xff]
        %v488 = vld [vmem:[%s1 + $0x40] sm:$0xff]
        %v489 = vld [vmem:[%s1 + $0x48] sm:$0xff]
        %v490 = vld [vmem:[%s1 + $0x50] sm:$0xff]
        %v491 = vld [vmem:[%s1 + $0x58] sm:$0xff]
        %v492 = vld [vmem:[%s1 + $0x60] sm:$0xff]
        %v493 = vld [vmem:[%s1 + $0x68] sm:$0xff]
        %v494 = vld [vmem:[%s1 + $0x70] sm:$0xff]
        %v495 = vld [vmem:[%s1 + $0x78] sm:$0xff]
        %v496 = vld [vmem:[%s2] sm:$0x3]
        %v498 = vlaneseq
        %v499 = vshrl.u32 %v498, 7
        %v500 = vsub.s32 0, %v499
        %v501 = vrot.slane %v496, %v500
        %v502 = vlaneseq
        %v503 = vshrl.u32 %v502, 7
        %v504 = vsub.s32 1, %v503
        %v505 = vrot.slane %v496, %v504
        %v524 = vunpack.c.l.b16 %v480
        %v525 = vunpack.c.h.b16 %v480
        %v526 = vunpack.c.l.b16 %v481
        %v527 = vunpack.c.h.b16 %v481
        %v528 = vunpack.c.l.b16 %v482
        %v529 = vunpack.c.h.b16 %v482
        %v530 = vunpack.c.l.b16 %v483
        %v531 = vunpack.c.h.b16 %v483
        %v532 = vunpack.c.l.b16 %v484
        %v533 = vunpack.c.h.b16 %v484
        %v534 = vunpack.c.l.b16 %v485
        %v535 = vunpack.c.h.b16 %v485
        %v536 = vunpack.c.l.b16 %v486
        %v537 = vunpack.c.h.b16 %v486
        %v538 = vunpack.c.l.b16 %v487
        %v539 = vunpack.c.h.b16 %v487
        %v540 = vunpack.c.l.b16 %v488
        %v541 = vunpack.c.h.b16 %v488
        %v542 = vunpack.c.l.b16 %v489
        %v543 = vunpack.c.h.b16 %v489
        %v544 = vunpack.c.l.b16 %v490
        %v545 = vunpack.c.h.b16 %v490
        %v546 = vunpack.c.l.b16 %v491
        %v547 = vunpack.c.h.b16 %v491
        %v548 = vunpack.c.l.b16 %v492
        %v549 = vunpack.c.h.b16 %v492
        %v550 = vunpack.c.l.b16 %v493
        %v551 = vunpack.c.h.b16 %v493
        %v552 = vunpack.c.l.b16 %v494
        %v553 = vunpack.c.h.b16 %v494
        %v554 = vunpack.c.l.b16 %v495
        %v555 = vunpack.c.h.b16 %v495
        %v556 = vpack.c.b16 %v526, %v524
        %v557 = vpack.c.b16 %v527, %v525
        %v558 = vpack.c.b16 %v530, %v528
        %v559 = vpack.c.b16 %v531, %v529
        %v560 = vpack.c.b16 %v534, %v532
        %v561 = vpack.c.b16 %v535, %v533
        %v562 = vpack.c.b16 %v538, %v536
        %v563 = vpack.c.b16 %v539, %v537
        %v564 = vpack.c.b16 %v542, %v540
        %v565 = vpack.c.b16 %v543, %v541
        %v566 = vpack.c.b16 %v546, %v544
        %v567 = vpack.c.b16 %v547, %v545
        %v568 = vpack.c.b16 %v550, %v548
        %v569 = vpack.c.b16 %v551, %v549
        %v570 = vpack.c.b16 %v554, %v552
        %v571 = vpack.c.b16 %v555, %v553
        %588 = vmatprep.subr.bf16.mxu0 %v557
        %589 = vmatpush1.bf16.msra.mxu0 %v556
        %590 = vmatprep.subr.bf16.mxu0 %v559
        %591 = vmatpush1.bf16.msra.mxu0 %v558
        %592 = vmatprep.subr.bf16.mxu0 %v561
        %593 = vmatpush1.bf16.msra.mxu0 %v560
        %594 = vmatprep.subr.bf16.mxu0 %v563
        %595 = vmatpush1.bf16.msra.mxu0 %v562
        %596 = vmatprep.subr.bf16.mxu0 %v565
        %597 = vmatpush1.bf16.msra.mxu0 %v564
        %598 = vmatprep.subr.bf16.mxu0 %v567
        %599 = vmatpush1.bf16.msra.mxu0 %v566
        %600 = vmatprep.subr.bf16.mxu0 %v569
        %601 = vmatpush1.bf16.msra.mxu0 %v568
        %602 = vmatprep.subr.bf16.mxu0 %v571
        %603 = vmatpush1.bf16.msra.mxu0 %v570
        %604 = vmatprep.subr.bf16.mxu0 0
        %605 = vmatpush1.bf16.msra.mxu0 0
        %606 = vmatprep.subr.bf16.mxu0 0
        %607 = vmatpush1.bf16.msra.mxu0 0
        %608 = vmatprep.subr.bf16.mxu0 0
        %609 = vmatpush1.bf16.msra.mxu0 0
        %610 = vmatprep.subr.bf16.mxu0 0
        %611 = vmatpush1.bf16.msra.mxu0 0
        %612 = vmatprep.subr.bf16.mxu0 0
        %613 = vmatpush1.bf16.msra.mxu0 0
        %614 = vmatprep.subr.bf16.mxu0 0
        %615 = vmatpush1.bf16.msra.mxu0 0
        %616 = vmatprep.subr.bf16.mxu0 0
        %617 = vmatpush1.bf16.msra.mxu0 0
        %618 = vmatprep.subr.bf16.mxu0 0
        %619 = vmatpush1.bf16.msra.mxu0 0
        %620 = vmatprep.mubr.bf16.mxu0 0
        %621 = vmatmul.mubr.bf16.gmra.mrb[0].mxu0 %v470
        %v622 = vpop.f32.mrb[0].mxu0
        %v623 = vadd.f32 %v501, %v622
        %v624 = vpop.f32.mrb[0].mxu0
        %v625 = vadd.f32 %v505, %v624
        %v626 = vpop.f32.mrb[0].mxu0
        %v627 = vadd.f32 %v501, %v626
        %v628 = vpop.f32.mrb[0].mxu0
        %v629 = vadd.f32 %v505, %v628
        %630 = vmatprep.mubr.bf16.mxu0 0
        %631 = vmatmul.mubr.bf16.gmra.mrb[0].mxu0 %v471
        %v632 = vpop.f32.mrb[0].mxu0
        %v633 = vadd.f32 %v501, %v632
        %v634 = vpop.f32.mrb[0].mxu0
        %v635 = vadd.f32 %v505, %v634
        %v636 = vpop.f32.mrb[0].mxu0
        %v637 = vadd.f32 %v501, %v636
        %v638 = vpop.f32.mrb[0].mxu0
        %v639 = vadd.f32 %v505, %v638
        %640 = vmatprep.mubr.bf16.mxu0 0
        %641 = vmatmul.mubr.bf16.gmra.mrb[0].mxu0 %v472
        %v642 = vpop.f32.mrb[0].mxu0
        %v643 = vadd.f32 %v501, %v642
        %v644 = vpop.f32.mrb[0].mxu0
        %v645 = vadd.f32 %v505, %v644
        %v646 = vpop.f32.mrb[0].mxu0
        %v647 = vadd.f32 %v501, %v646
        %v648 = vpop.f32.mrb[0].mxu0
        %v649 = vadd.f32 %v505, %v648
        %650 = vmatprep.mubr.bf16.mxu0 0
        %651 = vmatmul.mubr.bf16.gmra.mrb[0].mxu0 %v473
        %v652 = vpop.f32.mrb[0].mxu0
        %v653 = vadd.f32 %v501, %v652
        %v654 = vpop.f32.mrb[0].mxu0
        %v655 = vadd.f32 %v505, %v654
        %v656 = vpop.f32.mrb[0].mxu0
        %v657 = vadd.f32 %v501, %v656
        %v658 = vpop.f32.mrb[0].mxu0
        %v659 = vadd.f32 %v505, %v658
        %660 = vmatprep.mubr.bf16.mxu0 0
        %661 = vmatmul.mubr.bf16.gmra.mrb[0].mxu0 %v474
        %v662 = vpop.f32.mrb[0].mxu0
        %v663 = vadd.f32 %v501, %v662
        %v664 = vpop.f32.mrb[0].mxu0
        %v665 = vadd.f32 %v505, %v664
        %v666 = vpop.f32.mrb[0].mxu0
        %v667 = vadd.f32 %v501, %v666
        %v668 = vpop.f32.mrb[0].mxu0
        %v669 = vadd.f32 %v505, %v668
        %670 = vmatprep.mubr.bf16.mxu0 0
        %671 = vmatmul.mubr.bf16.gmra.mrb[0].mxu0 %v475
        %v672 = vpop.f32.mrb[0].mxu0
        %v673 = vadd.f32 %v501, %v672
        %v674 = vpop.f32.mrb[0].mxu0
        %v675 = vadd.f32 %v505, %v674
        %v676 = vpop.f32.mrb[0].mxu0
        %v677 = vadd.f32 %v501, %v676
        %v678 = vpop.f32.mrb[0].mxu0
        %v679 = vadd.f32 %v505, %v678
        %680 = vmatprep.mubr.bf16.mxu0 0
        %681 = vmatmul.mubr.bf16.gmra.mrb[0].mxu0 %v476
        %v682 = vpop.f32.mrb[0].mxu0
        %v683 = vadd.f32 %v501, %v682
        %v684 = vpop.f32.mrb[0].mxu0
        %v685 = vadd.f32 %v505, %v684
        %v686 = vpop.f32.mrb[0].mxu0
        %v687 = vadd.f32 %v501, %v686
        %v688 = vpop.f32.mrb[0].mxu0
        %v689 = vadd.f32 %v505, %v688
        %690 = vmatprep.mubr.bf16.mxu0 0
        %691 = vmatmul.mubr.bf16.gmra.mrb[0].mxu0 %v477
        %v692 = vpop.f32.mrb[0].mxu0
        %v693 = vadd.f32 %v501, %v692
        %v694 = vpop.f32.mrb[0].mxu0
        %v695 = vadd.f32 %v505, %v694
        %v696 = vpop.f32.mrb[0].mxu0
        %v697 = vadd.f32 %v501, %v696
        %v698 = vpop.f32.mrb[0].mxu0
        %v699 = vadd.f32 %v505, %v698
        %700 = vmatprep.mubr.bf16.mxu0 0
        %701 = vmatmul.mubr.bf16.gmra.mrb[0].mxu0 %v478
        %v702 = vpop.f32.mrb[0].mxu0
        %v703 = vadd.f32 %v501, %v702
        %v704 = vpop.f32.mrb[0].mxu0
        %v705 = vadd.f32 %v505, %v704
        %v706 = vpop.f32.mrb[0].mxu0
        %v707 = vadd.f32 %v501, %v706
        %v708 = vpop.f32.mrb[0].mxu0
        %v709 = vadd.f32 %v505, %v708
        %710 = vmatprep.mubr.bf16.mxu0 0
        %711 = vmatmul.mubr.bf16.gmra.mrb[0].mxu0 %v479
        %v712 = vpop.f32.mrb[0].mxu0
        %v713 = vadd.f32 %v501, %v712
        %v714 = vpop.f32.mrb[0].mxu0
        %v715 = vadd.f32 %v505, %v714
        %v716 = vpop.f32.mrb[0].mxu0
        %v717 = vadd.f32 %v501, %v716
        %v718 = vpop.f32.mrb[0].mxu0
        %v719 = vadd.f32 %v505, %v718
        %720 = vdwg.mxu0
        %v721 = vmax.f32 %v623, 0.0
        %v722 = vmax.f32 %v625, 0.0
        %v723 = vmax.f32 %v627, 0.0
        %v724 = vmax.f32 %v629, 0.0
        %v725 = vmax.f32 %v633, 0.0
        %v726 = vmax.f32 %v635, 0.0
        %v727 = vmax.f32 %v637, 0.0
        %v728 = vmax.f32 %v639, 0.0
        %v729 = vmax.f32 %v643, 0.0
        %v730 = vmax.f32 %v645, 0.0
        %v731 = vmax.f32 %v647, 0.0
        %v732 = vmax.f32 %v649, 0.0
        %v733 = vmax.f32 %v653, 0.0
        %v734 = vmax.f32 %v655, 0.0
        %v735 = vmax.f32 %v657, 0.0
        %v736 = vmax.f32 %v659, 0.0
        %v737 = vmax.f32 %v663, 0.0
        %v738 = vmax.f32 %v665, 0.0
        %v739 = vmax.f32 %v667, 0.0
        %v740 = vmax.f32 %v669, 0.0
        %v741 = vmax.f32 %v673, 0.0
        %v742 = vmax.f32 %v675, 0.0
        %v743 = vmax.f32 %v677, 0.0
        %v744 = vmax.f32 %v679, 0.0
        %v745 = vmax.f32 %v683, 0.0
        %v746 = vmax.f32 %v685, 0.0
        %v747 = vmax.f32 %v687, 0.0
        %v748 = vmax.f32 %v689, 0.0
        %v749 = vmax.f32 %v693, 0.0
        %v750 = vmax.f32 %v695, 0.0
        %v751 = vmax.f32 %v697, 0.0
        %v752 = vmax.f32 %v699, 0.0
        %v753 = vmax.f32 %v703, 0.0
        %v754 = vmax.f32 %v705, 0.0
        %v755 = vmax.f32 %v707, 0.0
        %v756 = vmax.f32 %v709, 0.0
        %v757 = vmax.f32 %v713, 0.0
        %v758 = vmax.f32 %v715, 0.0
        %v759 = vmax.f32 %v717, 0.0
        %v760 = vmax.f32 %v719, 0.0
        %v761 = vpack.c.bf16 %v723, %v721
        %v762 = vpack.c.bf16 %v724, %v722
        %v763 = vpack.c.bf16 %v727, %v725
        %v764 = vpack.c.bf16 %v728, %v726
        %v765 = vpack.c.bf16 %v731, %v729
        %v766 = vpack.c.bf16 %v732, %v730
        %v767 = vpack.c.bf16 %v735, %v733
        %v768 = vpack.c.bf16 %v736, %v734
        %v769 = vpack.c.bf16 %v739, %v737
        %v770 = vpack.c.bf16 %v740, %v738
        %v771 = vpack.c.bf16 %v743, %v741
        %v772 = vpack.c.bf16 %v744, %v742
        %v773 = vpack.c.bf16 %v747, %v745
        %v774 = vpack.c.bf16 %v748, %v746
        %v775 = vpack.c.bf16 %v751, %v749
        %v776 = vpack.c.bf16 %v752, %v750
        %v777 = vpack.c.bf16 %v755, %v753
        %v778 = vpack.c.bf16 %v756, %v754
        %v779 = vpack.c.bf16 %v759, %v757
        %v780 = vpack.c.bf16 %v760, %v758
        %v781 = vld [vmem:[#allocation4] sm:$0xff]
        %v782 = vld [vmem:[#allocation4 + $0x8] sm:$0xff]
        %v783 = vld [vmem:[#allocation4 + $0x10] sm:$0xff]
        %v784 = vld [vmem:[#allocation4 + $0x18] sm:$0xff]
        %v785 = vld [vmem:[#allocation4 + $0x20] sm:$0xff]
        %v786 = vld [vmem:[#allocation4 + $0x28] sm:$0xff]
        %v787 = vld [vmem:[#allocation4 + $0x30] sm:$0xff]
        %v788 = vld [vmem:[#allocation4 + $0x38] sm:$0xff]
        %v789 = vld [vmem:[#allocation4 + $0x40] sm:$0xff]
        %v790 = vld [vmem:[#allocation4 + $0x48] sm:$0xff]
        %v791 = vld [vmem:[#allocation4 + $0x50] sm:$0xff]
        %v792 = vld [vmem:[#allocation4 + $0x58] sm:$0xff]
        %v793 = vld [vmem:[#allocation4 + $0x60] sm:$0xff]
        %v794 = vld [vmem:[#allocation4 + $0x68] sm:$0xff]
        %v795 = vld [vmem:[#allocation4 + $0x70] sm:$0xff]
        %v796 = vld [vmem:[#allocation4 + $0x78] sm:$0xff]
        %v797 = vld [vmem:[#allocation4 + $0x80] sm:$0xff]
        %v798 = vld [vmem:[#allocation4 + $0x88] sm:$0xff]
        %v799 = vld [vmem:[#allocation4 + $0x90] sm:$0xff]
        %v800 = vld [vmem:[#allocation4 + $0x98] sm:$0xff]
        %v801 = vld [vmem:[#allocation4 + $0xa0] sm:$0xff]
        %v802 = vld [vmem:[#allocation4 + $0xa8] sm:$0xff]
        %v803 = vld [vmem:[#allocation4 + $0xb0] sm:$0xff]
        %v804 = vld [vmem:[#allocation4 + $0xb8] sm:$0xff]
        %v805 = vld [vmem:[#allocation4 + $0xc0] sm:$0xff]
        %v806 = vld [vmem:[#allocation4 + $0xc8] sm:$0xff]
        %v807 = vld [vmem:[#allocation4 + $0xd0] sm:$0xff]
        %v808 = vld [vmem:[#allocation4 + $0xd8] sm:$0xff]
        %v809 = vld [vmem:[#allocation4 + $0xe0] sm:$0xff]
        %v810 = vld [vmem:[#allocation4 + $0xe8] sm:$0xff]
        %v811 = vld [vmem:[#allocation4 + $0xf0] sm:$0xff]
        %v812 = vld [vmem:[#allocation4 + $0xf8] sm:$0xff]
        %v813 = vld [vmem:[#allocation4 + $0x100] sm:$0xff]
        %v814 = vld [vmem:[#allocation4 + $0x108] sm:$0xff]
        %v815 = vld [vmem:[#allocation4 + $0x110] sm:$0xff]
        %v816 = vld [vmem:[#allocation4 + $0x118] sm:$0xff]
        %v817 = vld [vmem:[#allocation4 + $0x120] sm:$0xff]
        %v818 = vld [vmem:[#allocation4 + $0x128] sm:$0xff]
        %v819 = vld [vmem:[#allocation4 + $0x130] sm:$0xff]
        %v820 = vld [vmem:[#allocation4 + $0x138] sm:$0xff]
        %v821 = vld [vmem:[#allocation4 + $0x140] sm:$0xff]
        %v822 = vld [vmem:[#allocation4 + $0x148] sm:$0xff]
        %v823 = vld [vmem:[#allocation4 + $0x150] sm:$0xff]
        %v824 = vld [vmem:[#allocation4 + $0x158] sm:$0xff]
        %v825 = vld [vmem:[#allocation4 + $0x160] sm:$0xff]
        %v826 = vld [vmem:[#allocation4 + $0x168] sm:$0xff]
        %v827 = vld [vmem:[#allocation4 + $0x170] sm:$0xff]
        %v828 = vld [vmem:[#allocation4 + $0x178] sm:$0xff]
        %v829 = vld [vmem:[#allocation4 + $0x180] sm:$0xff]
        %v830 = vld [vmem:[#allocation4 + $0x188] sm:$0xff]
        %v831 = vld [vmem:[#allocation4 + $0x190] sm:$0xff]
        %v832 = vld [vmem:[#allocation4 + $0x198] sm:$0xff]
        %v833 = vld [vmem:[#allocation4 + $0x1a0] sm:$0xff]
        %v834 = vld [vmem:[#allocation4 + $0x1a8] sm:$0xff]
        %v835 = vld [vmem:[#allocation4 + $0x1b0] sm:$0xff]
        %v836 = vld [vmem:[#allocation4 + $0x1b8] sm:$0xff]
        %v837 = vld [vmem:[#allocation4 + $0x1c0] sm:$0xff]
        %v838 = vld [vmem:[#allocation4 + $0x1c8] sm:$0xff]
        %v839 = vld [vmem:[#allocation4 + $0x1d0] sm:$0xff]
        %v840 = vld [vmem:[#allocation4 + $0x1d8] sm:$0xff]
        %v841 = vld [vmem:[#allocation4 + $0x1e0] sm:$0xff]
        %v842 = vld [vmem:[#allocation4 + $0x1e8] sm:$0xff]
        %v843 = vld [vmem:[#allocation4 + $0x1f0] sm:$0xff]
        %v844 = vld [vmem:[#allocation4 + $0x1f8] sm:$0xff]
        %v845 = vld [vmem:[#allocation4 + $0x200] sm:$0xff]
        %v846 = vld [vmem:[#allocation4 + $0x208] sm:$0xff]
        %v847 = vld [vmem:[#allocation4 + $0x210] sm:$0xff]
        %v848 = vld [vmem:[#allocation4 + $0x218] sm:$0xff]
        %v849 = vld [vmem:[#allocation4 + $0x220] sm:$0xff]
        %v850 = vld [vmem:[#allocation4 + $0x228] sm:$0xff]
        %v851 = vld [vmem:[#allocation4 + $0x230] sm:$0xff]
        %v852 = vld [vmem:[#allocation4 + $0x238] sm:$0xff]
        %v853 = vld [vmem:[#allocation4 + $0x240] sm:$0xff]
        %v854 = vld [vmem:[#allocation4 + $0x248] sm:$0xff]
        %v855 = vld [vmem:[#allocation4 + $0x250] sm:$0xff]
        %v856 = vld [vmem:[#allocation4 + $0x258] sm:$0xff]
        %v857 = vld [vmem:[#allocation4 + $0x260] sm:$0xff]
        %v858 = vld [vmem:[#allocation4 + $0x268] sm:$0xff]
        %v859 = vld [vmem:[#allocation4 + $0x270] sm:$0xff]
        %v860 = vld [vmem:[#allocation4 + $0x278] sm:$0xff]
        %v861 = vld [vmem:[#allocation4 + $0x280] sm:$0xff]
        %v862 = vld [vmem:[#allocation4 + $0x288] sm:$0xff]
        %v863 = vld [vmem:[#allocation4 + $0x290] sm:$0xff]
        %v864 = vld [vmem:[#allocation4 + $0x298] sm:$0xff]
        %v865 = vld [vmem:[#allocation4 + $0x2a0] sm:$0xff]
        %v866 = vld [vmem:[#allocation4 + $0x2a8] sm:$0xff]
        %v867 = vld [vmem:[#allocation4 + $0x2b0] sm:$0xff]
        %v868 = vld [vmem:[#allocation4 + $0x2b8] sm:$0xff]
        %v869 = vld [vmem:[#allocation4 + $0x2c0] sm:$0xff]
        %v870 = vld [vmem:[#allocation4 + $0x2c8] sm:$0xff]
        %v871 = vld [vmem:[#allocation4 + $0x2d0] sm:$0xff]
        %v872 = vld [vmem:[#allocation4 + $0x2d8] sm:$0xff]
        %v873 = vld [vmem:[#allocation4 + $0x2e0] sm:$0xff]
        %v874 = vld [vmem:[#allocation4 + $0x2e8] sm:$0xff]
        %v875 = vld [vmem:[#allocation4 + $0x2f0] sm:$0xff]
        %v876 = vld [vmem:[#allocation4 + $0x2f8] sm:$0xff]
        %v877 = vld [vmem:[#allocation4 + $0x300] sm:$0xff]
        %v878 = vld [vmem:[#allocation4 + $0x308] sm:$0xff]
        %v879 = vld [vmem:[#allocation4 + $0x310] sm:$0xff]
        %v880 = vld [vmem:[#allocation4 + $0x318] sm:$0xff]
        %v881 = vld [vmem:[#allocation4 + $0x320] sm:$0xff]
        %v882 = vld [vmem:[#allocation4 + $0x328] sm:$0xff]
        %v883 = vld [vmem:[#allocation4 + $0x330] sm:$0xff]
        %v884 = vld [vmem:[#allocation4 + $0x338] sm:$0xff]
        %v885 = vld [vmem:[#allocation4 + $0x340] sm:$0xff]
        %v886 = vld [vmem:[#allocation4 + $0x348] sm:$0xff]
        %v887 = vld [vmem:[#allocation4 + $0x350] sm:$0xff]
        %v888 = vld [vmem:[#allocation4 + $0x358] sm:$0xff]
        %v889 = vld [vmem:[#allocation4 + $0x360] sm:$0xff]
        %v890 = vld [vmem:[#allocation4 + $0x368] sm:$0xff]
        %v891 = vld [vmem:[#allocation4 + $0x370] sm:$0xff]
        %v892 = vld [vmem:[#allocation4 + $0x378] sm:$0xff]
        %v893 = vld [vmem:[#allocation4 + $0x380] sm:$0xff]
        %v894 = vld [vmem:[#allocation4 + $0x388] sm:$0xff]
        %v895 = vld [vmem:[#allocation4 + $0x390] sm:$0xff]
        %v896 = vld [vmem:[#allocation4 + $0x398] sm:$0xff]
        %v897 = vld [vmem:[#allocation4 + $0x3a0] sm:$0xff]
        %v898 = vld [vmem:[#allocation4 + $0x3a8] sm:$0xff]
        %v899 = vld [vmem:[#allocation4 + $0x3b0] sm:$0xff]
        %v900 = vld [vmem:[#allocation4 + $0x3b8] sm:$0xff]
        %v901 = vld [vmem:[#allocation4 + $0x3c0] sm:$0xff]
        %v902 = vld [vmem:[#allocation4 + $0x3c8] sm:$0xff]
        %v903 = vld [vmem:[#allocation4 + $0x3d0] sm:$0xff]
        %v904 = vld [vmem:[#allocation4 + $0x3d8] sm:$0xff]
        %v905 = vld [vmem:[#allocation4 + $0x3e0] sm:$0xff]
        %v906 = vld [vmem:[#allocation4 + $0x3e8] sm:$0xff]
        %v907 = vld [vmem:[#allocation4 + $0x3f0] sm:$0xff]
        %v908 = vld [vmem:[#allocation4 + $0x3f8] sm:$0xff]
        %v909 = vld [vmem:[%s4] sm:$0xff]
        %v911 = vlaneseq
        %v912 = vshrl.u32 %v911, 7
        %v913 = vsub.s32 0, %v912
        %v914 = vrot.slane %v909, %v913
        %v915 = vlaneseq
        %v916 = vshrl.u32 %v915, 7
        %v917 = vsub.s32 1, %v916
        %v918 = vrot.slane %v909, %v917
        %v919 = vlaneseq
        %v920 = vshrl.u32 %v919, 7
        %v921 = vsub.s32 2, %v920
        %v922 = vrot.slane %v909, %v921
        %v923 = vlaneseq
        %v924 = vshrl.u32 %v923, 7
        %v925 = vsub.s32 3, %v924
        %v926 = vrot.slane %v909, %v925
        %v927 = vlaneseq
        %v928 = vshrl.u32 %v927, 7
        %v929 = vsub.s32 4, %v928
        %v930 = vrot.slane %v909, %v929
        %v931 = vlaneseq
        %v932 = vshrl.u32 %v931, 7
        %v933 = vsub.s32 5, %v932
        %v934 = vrot.slane %v909, %v933
        %v935 = vlaneseq
        %v936 = vshrl.u32 %v935, 7
        %v937 = vsub.s32 6, %v936
        %v938 = vrot.slane %v909, %v937
        %v939 = vlaneseq
        %v940 = vshrl.u32 %v939, 7
        %v941 = vsub.s32 7, %v940
        %v942 = vrot.slane %v909, %v941
        %v1079 = vunpack.c.l.b16 %v781
        %v1080 = vunpack.c.h.b16 %v781
        %v1081 = vunpack.c.l.b16 %v782
        %v1082 = vunpack.c.h.b16 %v782
        %v1083 = vunpack.c.l.b16 %v783
        %v1084 = vunpack.c.h.b16 %v783
        %v1085 = vunpack.c.l.b16 %v784
        %v1086 = vunpack.c.h.b16 %v784
        %v1087 = vunpack.c.l.b16 %v785
        %v1088 = vunpack.c.h.b16 %v785
        %v1089 = vunpack.c.l.b16 %v786
        %v1090 = vunpack.c.h.b16 %v786
        %v1091 = vunpack.c.l.b16 %v787
        %v1092 = vunpack.c.h.b16 %v787
        %v1093 = vunpack.c.l.b16 %v788
        %v1094 = vunpack.c.h.b16 %v788
        %v1095 = vunpack.c.l.b16 %v789
        %v1096 = vunpack.c.h.b16 %v789
        %v1097 = vunpack.c.l.b16 %v790
        %v1098 = vunpack.c.h.b16 %v790
        %v1099 = vunpack.c.l.b16 %v791
        %v1100 = vunpack.c.h.b16 %v791
        %v1101 = vunpack.c.l.b16 %v792
        %v1102 = vunpack.c.h.b16 %v792
        %v1103 = vunpack.c.l.b16 %v793
        %v1104 = vunpack.c.h.b16 %v793
        %v1105 = vunpack.c.l.b16 %v794
        %v1106 = vunpack.c.h.b16 %v794
        %v1107 = vunpack.c.l.b16 %v795
        %v1108 = vunpack.c.h.b16 %v795
        %v1109 = vunpack.c.l.b16 %v796
        %v1110 = vunpack.c.h.b16 %v796
        %v1111 = vunpack.c.l.b16 %v797
        %v1112 = vunpack.c.h.b16 %v797
        %v1113 = vunpack.c.l.b16 %v798
        %v1114 = vunpack.c.h.b16 %v798
        %v1115 = vunpack.c.l.b16 %v799
        %v1116 = vunpack.c.h.b16 %v799
        %v1117 = vunpack.c.l.b16 %v800
        %v1118 = vunpack.c.h.b16 %v800
        %v1119 = vunpack.c.l.b16 %v801
        %v1120 = vunpack.c.h.b16 %v801
        %v1121 = vunpack.c.l.b16 %v802
        %v1122 = vunpack.c.h.b16 %v802
        %v1123 = vunpack.c.l.b16 %v803
        %v1124 = vunpack.c.h.b16 %v803
        %v1125 = vunpack.c.l.b16 %v804
        %v1126 = vunpack.c.h.b16 %v804
        %v1127 = vunpack.c.l.b16 %v805
        %v1128 = vunpack.c.h.b16 %v805
        %v1129 = vunpack.c.l.b16 %v806
        %v1130 = vunpack.c.h.b16 %v806
        %v1131 = vunpack.c.l.b16 %v807
        %v1132 = vunpack.c.h.b16 %v807
        %v1133 = vunpack.c.l.b16 %v808
        %v1134 = vunpack.c.h.b16 %v808
        %v1135 = vunpack.c.l.b16 %v809
        %v1136 = vunpack.c.h.b16 %v809
        %v1137 = vunpack.c.l.b16 %v810
        %v1138 = vunpack.c.h.b16 %v810
        %v1139 = vunpack.c.l.b16 %v811
        %v1140 = vunpack.c.h.b16 %v811
        %v1141 = vunpack.c.l.b16 %v812
        %v1142 = vunpack.c.h.b16 %v812
        %v1143 = vunpack.c.l.b16 %v813
        %v1144 = vunpack.c.h.b16 %v813
        %v1145 = vunpack.c.l.b16 %v814
        %v1146 = vunpack.c.h.b16 %v814
        %v1147 = vunpack.c.l.b16 %v815
        %v1148 = vunpack.c.h.b16 %v815
        %v1149 = vunpack.c.l.b16 %v816
        %v1150 = vunpack.c.h.b16 %v816
        %v1151 = vunpack.c.l.b16 %v817
        %v1152 = vunpack.c.h.b16 %v817
        %v1153 = vunpack.c.l.b16 %v818
        %v1154 = vunpack.c.h.b16 %v818
        %v1155 = vunpack.c.l.b16 %v819
        %v1156 = vunpack.c.h.b16 %v819
        %v1157 = vunpack.c.l.b16 %v820
        %v1158 = vunpack.c.h.b16 %v820
        %v1159 = vunpack.c.l.b16 %v821
        %v1160 = vunpack.c.h.b16 %v821
        %v1161 = vunpack.c.l.b16 %v822
        %v1162 = vunpack.c.h.b16 %v822
        %v1163 = vunpack.c.l.b16 %v823
        %v1164 = vunpack.c.h.b16 %v823
        %v1165 = vunpack.c.l.b16 %v824
        %v1166 = vunpack.c.h.b16 %v824
        %v1167 = vunpack.c.l.b16 %v825
        %v1168 = vunpack.c.h.b16 %v825
        %v1169 = vunpack.c.l.b16 %v826
        %v1170 = vunpack.c.h.b16 %v826
        %v1171 = vunpack.c.l.b16 %v827
        %v1172 = vunpack.c.h.b16 %v827
        %v1173 = vunpack.c.l.b16 %v828
        %v1174 = vunpack.c.h.b16 %v828
        %v1175 = vunpack.c.l.b16 %v829
        %v1176 = vunpack.c.h.b16 %v829
        %v1177 = vunpack.c.l.b16 %v830
        %v1178 = vunpack.c.h.b16 %v830
        %v1179 = vunpack.c.l.b16 %v831
        %v1180 = vunpack.c.h.b16 %v831
        %v1181 = vunpack.c.l.b16 %v832
        %v1182 = vunpack.c.h.b16 %v832
        %v1183 = vunpack.c.l.b16 %v833
        %v1184 = vunpack.c.h.b16 %v833
        %v1185 = vunpack.c.l.b16 %v834
        %v1186 = vunpack.c.h.b16 %v834
        %v1187 = vunpack.c.l.b16 %v835
        %v1188 = vunpack.c.h.b16 %v835
        %v1189 = vunpack.c.l.b16 %v836
        %v1190 = vunpack.c.h.b16 %v836
        %v1191 = vunpack.c.l.b16 %v837
        %v1192 = vunpack.c.h.b16 %v837
        %v1193 = vunpack.c.l.b16 %v838
        %v1194 = vunpack.c.h.b16 %v838
        %v1195 = vunpack.c.l.b16 %v839
        %v1196 = vunpack.c.h.b16 %v839
        %v1197 = vunpack.c.l.b16 %v840
        %v1198 = vunpack.c.h.b16 %v840
        %v1199 = vunpack.c.l.b16 %v841
        %v1200 = vunpack.c.h.b16 %v841
        %v1201 = vunpack.c.l.b16 %v842
        %v1202 = vunpack.c.h.b16 %v842
        %v1203 = vunpack.c.l.b16 %v843
        %v1204 = vunpack.c.h.b16 %v843
        %v1205 = vunpack.c.l.b16 %v844
        %v1206 = vunpack.c.h.b16 %v844
        %v1207 = vunpack.c.l.b16 %v845
        %v1208 = vunpack.c.h.b16 %v845
        %v1209 = vunpack.c.l.b16 %v846
        %v1210 = vunpack.c.h.b16 %v846
        %v1211 = vunpack.c.l.b16 %v847
        %v1212 = vunpack.c.h.b16 %v847
        %v1213 = vunpack.c.l.b16 %v848
        %v1214 = vunpack.c.h.b16 %v848
        %v1215 = vunpack.c.l.b16 %v849
        %v1216 = vunpack.c.h.b16 %v849
        %v1217 = vunpack.c.l.b16 %v850
        %v1218 = vunpack.c.h.b16 %v850
        %v1219 = vunpack.c.l.b16 %v851
        %v1220 = vunpack.c.h.b16 %v851
        %v1221 = vunpack.c.l.b16 %v852
        %v1222 = vunpack.c.h.b16 %v852
        %v1223 = vunpack.c.l.b16 %v853
        %v1224 = vunpack.c.h.b16 %v853
        %v1225 = vunpack.c.l.b16 %v854
        %v1226 = vunpack.c.h.b16 %v854
        %v1227 = vunpack.c.l.b16 %v855
        %v1228 = vunpack.c.h.b16 %v855
        %v1229 = vunpack.c.l.b16 %v856
        %v1230 = vunpack.c.h.b16 %v856
        %v1231 = vunpack.c.l.b16 %v857
        %v1232 = vunpack.c.h.b16 %v857
        %v1233 = vunpack.c.l.b16 %v858
        %v1234 = vunpack.c.h.b16 %v858
        %v1235 = vunpack.c.l.b16 %v859
        %v1236 = vunpack.c.h.b16 %v859
        %v1237 = vunpack.c.l.b16 %v860
        %v1238 = vunpack.c.h.b16 %v860
        %v1239 = vunpack.c.l.b16 %v861
        %v1240 = vunpack.c.h.b16 %v861
        %v1241 = vunpack.c.l.b16 %v862
        %v1242 = vunpack.c.h.b16 %v862
        %v1243 = vunpack.c.l.b16 %v863
        %v1244 = vunpack.c.h.b16 %v863
        %v1245 = vunpack.c.l.b16 %v864
        %v1246 = vunpack.c.h.b16 %v864
        %v1247 = vunpack.c.l.b16 %v865
        %v1248 = vunpack.c.h.b16 %v865
        %v1249 = vunpack.c.l.b16 %v866
        %v1250 = vunpack.c.h.b16 %v866
        %v1251 = vunpack.c.l.b16 %v867
        %v1252 = vunpack.c.h.b16 %v867
        %v1253 = vunpack.c.l.b16 %v868
        %v1254 = vunpack.c.h.b16 %v868
        %v1255 = vunpack.c.l.b16 %v869
        %v1256 = vunpack.c.h.b16 %v869
        %v1257 = vunpack.c.l.b16 %v870
        %v1258 = vunpack.c.h.b16 %v870
        %v1259 = vunpack.c.l.b16 %v871
        %v1260 = vunpack.c.h.b16 %v871
        %v1261 = vunpack.c.l.b16 %v872
        %v1262 = vunpack.c.h.b16 %v872
        %v1263 = vunpack.c.l.b16 %v873
        %v1264 = vunpack.c.h.b16 %v873
        %v1265 = vunpack.c.l.b16 %v874
        %v1266 = vunpack.c.h.b16 %v874
        %v1267 = vunpack.c.l.b16 %v875
        %v1268 = vunpack.c.h.b16 %v875
        %v1269 = vunpack.c.l.b16 %v876
        %v1270 = vunpack.c.h.b16 %v876
        %v1271 = vunpack.c.l.b16 %v877
        %v1272 = vunpack.c.h.b16 %v877
        %v1273 = vunpack.c.l.b16 %v878
        %v1274 = vunpack.c.h.b16 %v878
        %v1275 = vunpack.c.l.b16 %v879
        %v1276 = vunpack.c.h.b16 %v879
        %v1277 = vunpack.c.l.b16 %v880
        %v1278 = vunpack.c.h.b16 %v880
        %v1279 = vunpack.c.l.b16 %v881
        %v1280 = vunpack.c.h.b16 %v881
        %v1281 = vunpack.c.l.b16 %v882
        %v1282 = vunpack.c.h.b16 %v882
        %v1283 = vunpack.c.l.b16 %v883
        %v1284 = vunpack.c.h.b16 %v883
        %v1285 = vunpack.c.l.b16 %v884
        %v1286 = vunpack.c.h.b16 %v884
        %v1287 = vunpack.c.l.b16 %v885
        %v1288 = vunpack.c.h.b16 %v885
        %v1289 = vunpack.c.l.b16 %v886
        %v1290 = vunpack.c.h.b16 %v886
        %v1291 = vunpack.c.l.b16 %v887
        %v1292 = vunpack.c.h.b16 %v887
        %v1293 = vunpack.c.l.b16 %v888
        %v1294 = vunpack.c.h.b16 %v888
        %v1295 = vunpack.c.l.b16 %v889
        %v1296 = vunpack.c.h.b16 %v889
        %v1297 = vunpack.c.l.b16 %v890
        %v1298 = vunpack.c.h.b16 %v890
        %v1299 = vunpack.c.l.b16 %v891
        %v1300 = vunpack.c.h.b16 %v891
        %v1301 = vunpack.c.l.b16 %v892
        %v1302 = vunpack.c.h.b16 %v892
        %v1303 = vunpack.c.l.b16 %v893
        %v1304 = vunpack.c.h.b16 %v893
        %v1305 = vunpack.c.l.b16 %v894
        %v1306 = vunpack.c.h.b16 %v894
        %v1307 = vunpack.c.l.b16 %v895
        %v1308 = vunpack.c.h.b16 %v895
        %v1309 = vunpack.c.l.b16 %v896
        %v1310 = vunpack.c.h.b16 %v896
        %v1311 = vunpack.c.l.b16 %v897
        %v1312 = vunpack.c.h.b16 %v897
        %v1313 = vunpack.c.l.b16 %v898
        %v1314 = vunpack.c.h.b16 %v898
        %v1315 = vunpack.c.l.b16 %v899
        %v1316 = vunpack.c.h.b16 %v899
        %v1317 = vunpack.c.l.b16 %v900
        %v1318 = vunpack.c.h.b16 %v900
        %v1319 = vunpack.c.l.b16 %v901
        %v1320 = vunpack.c.h.b16 %v901
        %v1321 = vunpack.c.l.b16 %v902
        %v1322 = vunpack.c.h.b16 %v902
        %v1323 = vunpack.c.l.b16 %v903
        %v1324 = vunpack.c.h.b16 %v903
        %v1325 = vunpack.c.l.b16 %v904
        %v1326 = vunpack.c.h.b16 %v904
        %v1327 = vunpack.c.l.b16 %v905
        %v1328 = vunpack.c.h.b16 %v905
        %v1329 = vunpack.c.l.b16 %v906
        %v1330 = vunpack.c.h.b16 %v906
        %v1331 = vunpack.c.l.b16 %v907
        %v1332 = vunpack.c.h.b16 %v907
        %v1333 = vunpack.c.l.b16 %v908
        %v1334 = vunpack.c.h.b16 %v908
        %v1335 = vpack.c.b16 %v1087, %v1079
        %v1336 = vpack.c.b16 %v1088, %v1080
        %v1337 = vpack.c.b16 %v1089, %v1081
        %v1338 = vpack.c.b16 %v1090, %v1082
        %v1339 = vpack.c.b16 %v1091, %v1083
        %v1340 = vpack.c.b16 %v1092, %v1084
        %v1341 = vpack.c.b16 %v1093, %v1085
        %v1342 = vpack.c.b16 %v1094, %v1086
        %v1343 = vpack.c.b16 %v1103, %v1095
        %v1344 = vpack.c.b16 %v1104, %v1096
        %v1345 = vpack.c.b16 %v1105, %v1097
        %v1346 = vpack.c.b16 %v1106, %v1098
        %v1347 = vpack.c.b16 %v1107, %v1099
        %v1348 = vpack.c.b16 %v1108, %v1100
        %v1349 = vpack.c.b16 %v1109, %v1101
        %v1350 = vpack.c.b16 %v1110, %v1102
        %v1351 = vpack.c.b16 %v1119, %v1111
        %v1352 = vpack.c.b16 %v1120, %v1112
        %v1353 = vpack.c.b16 %v1121, %v1113
        %v1354 = vpack.c.b16 %v1122, %v1114
        %v1355 = vpack.c.b16 %v1123, %v1115
        %v1356 = vpack.c.b16 %v1124, %v1116
        %v1357 = vpack.c.b16 %v1125, %v1117
        %v1358 = vpack.c.b16 %v1126, %v1118
        %v1359 = vpack.c.b16 %v1135, %v1127
        %v1360 = vpack.c.b16 %v1136, %v1128
        %v1361 = vpack.c.b16 %v1137, %v1129
        %v1362 = vpack.c.b16 %v1138, %v1130
        %v1363 = vpack.c.b16 %v1139, %v1131
        %v1364 = vpack.c.b16 %v1140, %v1132
        %v1365 = vpack.c.b16 %v1141, %v1133
        %v1366 = vpack.c.b16 %v1142, %v1134
        %v1367 = vpack.c.b16 %v1151, %v1143
        %v1368 = vpack.c.b16 %v1152, %v1144
        %v1369 = vpack.c.b16 %v1153, %v1145
        %v1370 = vpack.c.b16 %v1154, %v1146
        %v1371 = vpack.c.b16 %v1155, %v1147
        %v1372 = vpack.c.b16 %v1156, %v1148
        %v1373 = vpack.c.b16 %v1157, %v1149
        %v1374 = vpack.c.b16 %v1158, %v1150
        %v1375 = vpack.c.b16 %v1167, %v1159
        %v1376 = vpack.c.b16 %v1168, %v1160
        %v1377 = vpack.c.b16 %v1169, %v1161
        %v1378 = vpack.c.b16 %v1170, %v1162
        %v1379 = vpack.c.b16 %v1171, %v1163
        %v1380 = vpack.c.b16 %v1172, %v1164
        %v1381 = vpack.c.b16 %v1173, %v1165
        %v1382 = vpack.c.b16 %v1174, %v1166
        %v1383 = vpack.c.b16 %v1183, %v1175
        %v1384 = vpack.c.b16 %v1184, %v1176
        %v1385 = vpack.c.b16 %v1185, %v1177
        %v1386 = vpack.c.b16 %v1186, %v1178
        %v1387 = vpack.c.b16 %v1187, %v1179
        %v1388 = vpack.c.b16 %v1188, %v1180
        %v1389 = vpack.c.b16 %v1189, %v1181
        %v1390 = vpack.c.b16 %v1190, %v1182
        %v1391 = vpack.c.b16 %v1199, %v1191
        %v1392 = vpack.c.b16 %v1200, %v1192
        %v1393 = vpack.c.b16 %v1201, %v1193
        %v1394 = vpack.c.b16 %v1202, %v1194
        %v1395 = vpack.c.b16 %v1203, %v1195
        %v1396 = vpack.c.b16 %v1204, %v1196
        %v1397 = vpack.c.b16 %v1205, %v1197
        %v1398 = vpack.c.b16 %v1206, %v1198
        %v1399 = vpack.c.b16 %v1215, %v1207
        %v1400 = vpack.c.b16 %v1216, %v1208
        %v1401 = vpack.c.b16 %v1217, %v1209
        %v1402 = vpack.c.b16 %v1218, %v1210
        %v1403 = vpack.c.b16 %v1219, %v1211
        %v1404 = vpack.c.b16 %v1220, %v1212
        %v1405 = vpack.c.b16 %v1221, %v1213
        %v1406 = vpack.c.b16 %v1222, %v1214
        %v1407 = vpack.c.b16 %v1231, %v1223
        %v1408 = vpack.c.b16 %v1232, %v1224
        %v1409 = vpack.c.b16 %v1233, %v1225
        %v1410 = vpack.c.b16 %v1234, %v1226
        %v1411 = vpack.c.b16 %v1235, %v1227
        %v1412 = vpack.c.b16 %v1236, %v1228
        %v1413 = vpack.c.b16 %v1237, %v1229
        %v1414 = vpack.c.b16 %v1238, %v1230
        %v1415 = vpack.c.b16 %v1247, %v1239
        %v1416 = vpack.c.b16 %v1248, %v1240
        %v1417 = vpack.c.b16 %v1249, %v1241
        %v1418 = vpack.c.b16 %v1250, %v1242
        %v1419 = vpack.c.b16 %v1251, %v1243
        %v1420 = vpack.c.b16 %v1252, %v1244
        %v1421 = vpack.c.b16 %v1253, %v1245
        %v1422 = vpack.c.b16 %v1254, %v1246
        %v1423 = vpack.c.b16 %v1263, %v1255
        %v1424 = vpack.c.b16 %v1264, %v1256
        %v1425 = vpack.c.b16 %v1265, %v1257
        %v1426 = vpack.c.b16 %v1266, %v1258
        %v1427 = vpack.c.b16 %v1267, %v1259
        %v1428 = vpack.c.b16 %v1268, %v1260
        %v1429 = vpack.c.b16 %v1269, %v1261
        %v1430 = vpack.c.b16 %v1270, %v1262
        %v1431 = vpack.c.b16 %v1279, %v1271
        %v1432 = vpack.c.b16 %v1280, %v1272
        %v1433 = vpack.c.b16 %v1281, %v1273
        %v1434 = vpack.c.b16 %v1282, %v1274
        %v1435 = vpack.c.b16 %v1283, %v1275
        %v1436 = vpack.c.b16 %v1284, %v1276
        %v1437 = vpack.c.b16 %v1285, %v1277
        %v1438 = vpack.c.b16 %v1286, %v1278
        %v1439 = vpack.c.b16 %v1295, %v1287
        %v1440 = vpack.c.b16 %v1296, %v1288
        %v1441 = vpack.c.b16 %v1297, %v1289
        %v1442 = vpack.c.b16 %v1298, %v1290
        %v1443 = vpack.c.b16 %v1299, %v1291
        %v1444 = vpack.c.b16 %v1300, %v1292
        %v1445 = vpack.c.b16 %v1301, %v1293
        %v1446 = vpack.c.b16 %v1302, %v1294
        %v1447 = vpack.c.b16 %v1311, %v1303
        %v1448 = vpack.c.b16 %v1312, %v1304
        %v1449 = vpack.c.b16 %v1313, %v1305
        %v1450 = vpack.c.b16 %v1314, %v1306
        %v1451 = vpack.c.b16 %v1315, %v1307
        %v1452 = vpack.c.b16 %v1316, %v1308
        %v1453 = vpack.c.b16 %v1317, %v1309
        %v1454 = vpack.c.b16 %v1318, %v1310
        %v1455 = vpack.c.b16 %v1327, %v1319
        %v1456 = vpack.c.b16 %v1328, %v1320
        %v1457 = vpack.c.b16 %v1329, %v1321
        %v1458 = vpack.c.b16 %v1330, %v1322
        %v1459 = vpack.c.b16 %v1331, %v1323
        %v1460 = vpack.c.b16 %v1332, %v1324
        %v1461 = vpack.c.b16 %v1333, %v1325
        %v1462 = vpack.c.b16 %v1334, %v1326
        %1591 = vmatprep.subr.bf16.mxu0 %v1336
        %1592 = vmatpush1.bf16.msra.mxu0 %v1335
        %1593 = vmatprep.subr.bf16.mxu0 %v1344
        %1594 = vmatpush1.bf16.msra.mxu0 %v1343
        %1595 = vmatprep.subr.bf16.mxu0 %v1352
        %1596 = vmatpush1.bf16.msra.mxu0 %v1351
        %1597 = vmatprep.subr.bf16.mxu0 %v1360
        %1598 = vmatpush1.bf16.msra.mxu0 %v1359
        %1599 = vmatprep.subr.bf16.mxu0 %v1368
        %1600 = vmatpush1.bf16.msra.mxu0 %v1367
        %1601 = vmatprep.subr.bf16.mxu0 %v1376
        %1602 = vmatpush1.bf16.msra.mxu0 %v1375
        %1603 = vmatprep.subr.bf16.mxu0 %v1384
        %1604 = vmatpush1.bf16.msra.mxu0 %v1383
        %1605 = vmatprep.subr.bf16.mxu0 %v1392
        %1606 = vmatpush1.bf16.msra.mxu0 %v1391
        %1607 = vmatprep.subr.bf16.mxu0 %v1400
        %1608 = vmatpush1.bf16.msra.mxu0 %v1399
        %1609 = vmatprep.subr.bf16.mxu0 %v1408
        %1610 = vmatpush1.bf16.msra.mxu0 %v1407
        %1611 = vmatprep.subr.bf16.mxu0 %v1416
        %1612 = vmatpush1.bf16.msra.mxu0 %v1415
        %1613 = vmatprep.subr.bf16.mxu0 %v1424
        %1614 = vmatpush1.bf16.msra.mxu0 %v1423
        %1615 = vmatprep.subr.bf16.mxu0 %v1432
        %1616 = vmatpush1.bf16.msra.mxu0 %v1431
        %1617 = vmatprep.subr.bf16.mxu0 %v1440
        %1618 = vmatpush1.bf16.msra.mxu0 %v1439
        %1619 = vmatprep.subr.bf16.mxu0 %v1448
        %1620 = vmatpush1.bf16.msra.mxu0 %v1447
        %1621 = vmatprep.subr.bf16.mxu0 %v1456
        %1622 = vmatpush1.bf16.msra.mxu0 %v1455
        %1623 = vmatprep.mubr.bf16.mxu0 %v762
        %1624 = vmatmul.mubr.bf16.gmra.mrb[0].mxu0 %v761
        %v1625 = vpop.f32.mrb[0].mxu0
        %v1626 = vadd.f32 %v914, %v1625
        %v1627 = vpop.f32.mrb[0].mxu0
        %v1628 = vadd.f32 %v918, %v1627
        %v1629 = vpop.f32.mrb[0].mxu0
        %v1630 = vadd.f32 %v914, %v1629
        %v1631 = vpop.f32.mrb[0].mxu0
        %v1632 = vadd.f32 %v918, %v1631
        %1633 = vmatprep.mubr.bf16.mxu0 %v764
        %1634 = vmatmul.mubr.bf16.gmra.mrb[0].mxu0 %v763
        %v1635 = vpop.f32.mrb[0].mxu0
        %v1636 = vadd.f32 %v914, %v1635
        %v1637 = vpop.f32.mrb[0].mxu0
        %v1638 = vadd.f32 %v918, %v1637
        %v1639 = vpop.f32.mrb[0].mxu0
        %v1640 = vadd.f32 %v914, %v1639
        %v1641 = vpop.f32.mrb[0].mxu0
        %v1642 = vadd.f32 %v918, %v1641
        %1643 = vmatprep.mubr.bf16.mxu0 %v766
        %1644 = vmatmul.mubr.bf16.gmra.mrb[0].mxu0 %v765
        %v1645 = vpop.f32.mrb[0].mxu0
        %v1646 = vadd.f32 %v914, %v1645
        %v1647 = vpop.f32.mrb[0].mxu0
        %v1648 = vadd.f32 %v918, %v1647
        %v1649 = vpop.f32.mrb[0].mxu0
        %v1650 = vadd.f32 %v914, %v1649
        %v1651 = vpop.f32.mrb[0].mxu0
        %v1652 = vadd.f32 %v918, %v1651
        %1653 = vmatprep.mubr.bf16.mxu0 %v768
        %1654 = vmatmul.mubr.bf16.gmra.mrb[0].mxu0 %v767
        %v1655 = vpop.f32.mrb[0].mxu0
        %v1656 = vadd.f32 %v914, %v1655
        %v1657 = vpop.f32.mrb[0].mxu0
        %v1658 = vadd.f32 %v918, %v1657
        %v1659 = vpop.f32.mrb[0].mxu0
        %v1660 = vadd.f32 %v914, %v1659
        %v1661 = vpop.f32.mrb[0].mxu0
        %v1662 = vadd.f32 %v918, %v1661
        %1663 = vmatprep.mubr.bf16.mxu0 %v770
        %1664 = vmatmul.mubr.bf16.gmra.mrb[0].mxu0 %v769
        %v1665 = vpop.f32.mrb[0].mxu0
        %v1666 = vadd.f32 %v914, %v1665
        %v1667 = vpop.f32.mrb[0].mxu0
        %v1668 = vadd.f32 %v918, %v1667
        %v1669 = vpop.f32.mrb[0].mxu0
        %v1670 = vadd.f32 %v914, %v1669
        %v1671 = vpop.f32.mrb[0].mxu0
        %v1672 = vadd.f32 %v918, %v1671
        %1673 = vmatprep.mubr.bf16.mxu0 %v772
        %1674 = vmatmul.mubr.bf16.gmra.mrb[0].mxu0 %v771
        %v1675 = vpop.f32.mrb[0].mxu0
        %v1676 = vadd.f32 %v914, %v1675
        %v1677 = vpop.f32.mrb[0].mxu0
        %v1678 = vadd.f32 %v918, %v1677
        %v1679 = vpop.f32.mrb[0].mxu0
        %v1680 = vadd.f32 %v914, %v1679
        %v1681 = vpop.f32.mrb[0].mxu0
        %v1682 = vadd.f32 %v918, %v1681
        %1683 = vmatprep.mubr.bf16.mxu0 %v774
        %1684 = vmatmul.mubr.bf16.gmra.mrb[0].mxu0 %v773
        %v1685 = vpop.f32.mrb[0].mxu0
        %v1686 = vadd.f32 %v914, %v1685
        %v1687 = vpop.f32.mrb[0].mxu0
        %v1688 = vadd.f32 %v918, %v1687
        %v1689 = vpop.f32.mrb[0].mxu0
        %v1690 = vadd.f32 %v914, %v1689
        %v1691 = vpop.f32.mrb[0].mxu0
        %v1692 = vadd.f32 %v918, %v1691
        %1693 = vmatprep.mubr.bf16.mxu0 %v776
        %1694 = vmatmul.mubr.bf16.gmra.mrb[0].mxu0 %v775
        %v1695 = vpop.f32.mrb[0].mxu0
        %v1696 = vadd.f32 %v914, %v1695
        %v1697 = vpop.f32.mrb[0].mxu0
        %v1698 = vadd.f32 %v918, %v1697
        %v1699 = vpop.f32.mrb[0].mxu0
        %v1700 = vadd.f32 %v914, %v1699
        %v1701 = vpop.f32.mrb[0].mxu0
        %v1702 = vadd.f32 %v918, %v1701
        %1703 = vmatprep.mubr.bf16.mxu0 %v778
        %1704 = vmatmul.mubr.bf16.gmra.mrb[0].mxu0 %v777
        %v1705 = vpop.f32.mrb[0].mxu0
        %v1706 = vadd.f32 %v914, %v1705
        %v1707 = vpop.f32.mrb[0].mxu0
        %v1708 = vadd.f32 %v918, %v1707
        %v1709 = vpop.f32.mrb[0].mxu0
        %v1710 = vadd.f32 %v914, %v1709
        %v1711 = vpop.f32.mrb[0].mxu0
        %v1712 = vadd.f32 %v918, %v1711
        %1713 = vmatprep.mubr.bf16.mxu0 %v780
        %1714 = vmatmul.mubr.bf16.gmra.mrb[0].mxu0 %v779
        %v1715 = vpop.f32.mrb[0].mxu0
        %v1716 = vadd.f32 %v914, %v1715
        %v1717 = vpop.f32.mrb[0].mxu0
        %v1718 = vadd.f32 %v918, %v1717
        %v1719 = vpop.f32.mrb[0].mxu0
        %v1720 = vadd.f32 %v914, %v1719
        %v1721 = vpop.f32.mrb[0].mxu0
        %v1722 = vadd.f32 %v918, %v1721
        %1723 = vdwg.mxu0
        %1724 = vmatprep.subr.bf16.mxu0 %v1338
        %1725 = vmatpush1.bf16.msra.mxu0 %v1337
        %1726 = vmatprep.subr.bf16.mxu0 %v1346
        %1727 = vmatpush1.bf16.msra.mxu0 %v1345
        %1728 = vmatprep.subr.bf16.mxu0 %v1354
        %1729 = vmatpush1.bf16.msra.mxu0 %v1353
        %1730 = vmatprep.subr.bf16.mxu0 %v1362
        %1731 = vmatpush1.bf16.msra.mxu0 %v1361
        %1732 = vmatprep.subr.bf16.mxu0 %v1370
        %1733 = vmatpush1.bf16.msra.mxu0 %v1369
        %1734 = vmatprep.subr.bf16.mxu0 %v1378
        %1735 = vmatpush1.bf16.msra.mxu0 %v1377
        %1736 = vmatprep.subr.bf16.mxu0 %v1386
        %1737 = vmatpush1.bf16.msra.mxu0 %v1385
        %1738 = vmatprep.subr.bf16.mxu0 %v1394
        %1739 = vmatpush1.bf16.msra.mxu0 %v1393
        %1740 = vmatprep.subr.bf16.mxu0 %v1402
        %1741 = vmatpush1.bf16.msra.mxu0 %v1401
        %1742 = vmatprep.subr.bf16.mxu0 %v1410
        %1743 = vmatpush1.bf16.msra.mxu0 %v1409
        %1744 = vmatprep.subr.bf16.mxu0 %v1418
        %1745 = vmatpush1.bf16.msra.mxu0 %v1417
        %1746 = vmatprep.subr.bf16.mxu0 %v1426
        %1747 = vmatpush1.bf16.msra.mxu0 %v1425
        %1748 = vmatprep.subr.bf16.mxu0 %v1434
        %1749 = vmatpush1.bf16.msra.mxu0 %v1433
        %1750 = vmatprep.subr.bf16.mxu0 %v1442
        %1751 = vmatpush1.bf16.msra.mxu0 %v1441
        %1752 = vmatprep.subr.bf16.mxu0 %v1450
        %1753 = vmatpush1.bf16.msra.mxu0 %v1449
        %1754 = vmatprep.subr.bf16.mxu0 %v1458
        %1755 = vmatpush1.bf16.msra.mxu0 %v1457
        %1756 = vmatprep.mubr.bf16.mxu0 %v762
        %1757 = vmatmul.mubr.bf16.gmra.mrb[0].mxu0 %v761
        %v1758 = vpop.f32.mrb[0].mxu0
        %v1759 = vadd.f32 %v922, %v1758
        %v1760 = vpop.f32.mrb[0].mxu0
        %v1761 = vadd.f32 %v926, %v1760
        %v1762 = vpop.f32.mrb[0].mxu0
        %v1763 = vadd.f32 %v922, %v1762
        %v1764 = vpop.f32.mrb[0].mxu0
        %v1765 = vadd.f32 %v926, %v1764
        %1766 = vmatprep.mubr.bf16.mxu0 %v764
        %1767 = vmatmul.mubr.bf16.gmra.mrb[0].mxu0 %v763
        %v1768 = vpop.f32.mrb[0].mxu0
        %v1769 = vadd.f32 %v922, %v1768
        %v1770 = vpop.f32.mrb[0].mxu0
        %v1771 = vadd.f32 %v926, %v1770
        %v1772 = vpop.f32.mrb[0].mxu0
        %v1773 = vadd.f32 %v922, %v1772
        %v1774 = vpop.f32.mrb[0].mxu0
        %v1775 = vadd.f32 %v926, %v1774
        %1776 = vmatprep.mubr.bf16.mxu0 %v766
        %1777 = vmatmul.mubr.bf16.gmra.mrb[0].mxu0 %v765
        %v1778 = vpop.f32.mrb[0].mxu0
        %v1779 = vadd.f32 %v922, %v1778
        %v1780 = vpop.f32.mrb[0].mxu0
        %v1781 = vadd.f32 %v926, %v1780
        %v1782 = vpop.f32.mrb[0].mxu0
        %v1783 = vadd.f32 %v922, %v1782
        %v1784 = vpop.f32.mrb[0].mxu0
        %v1785 = vadd.f32 %v926, %v1784
        %1786 = vmatprep.mubr.bf16.mxu0 %v768
        %1787 = vmatmul.mubr.bf16.gmra.mrb[0].mxu0 %v767
        %v1788 = vpop.f32.mrb[0].mxu0
        %v1789 = vadd.f32 %v922, %v1788
        %v1790 = vpop.f32.mrb[0].mxu0
        %v1791 = vadd.f32 %v926, %v1790
        %v1792 = vpop.f32.mrb[0].mxu0
        %v1793 = vadd.f32 %v922, %v1792
        %v1794 = vpop.f32.mrb[0].mxu0
        %v1795 = vadd.f32 %v926, %v1794
        %1796 = vmatprep.mubr.bf16.mxu0 %v770
        %1797 = vmatmul.mubr.bf16.gmra.mrb[0].mxu0 %v769
        %v1798 = vpop.f32.mrb[0].mxu0
        %v1799 = vadd.f32 %v922, %v1798
        %v1800 = vpop.f32.mrb[0].mxu0
        %v1801 = vadd.f32 %v926, %v1800
        %v1802 = vpop.f32.mrb[0].mxu0
        %v1803 = vadd.f32 %v922, %v1802
        %v1804 = vpop.f32.mrb[0].mxu0
        %v1805 = vadd.f32 %v926, %v1804
        %1806 = vmatprep.mubr.bf16.mxu0 %v772
        %1807 = vmatmul.mubr.bf16.gmra.mrb[0].mxu0 %v771
        %v1808 = vpop.f32.mrb[0].mxu0
        %v1809 = vadd.f32 %v922, %v1808
        %v1810 = vpop.f32.mrb[0].mxu0
        %v1811 = vadd.f32 %v926, %v1810
        %v1812 = vpop.f32.mrb[0].mxu0
        %v1813 = vadd.f32 %v922, %v1812
        %v1814 = vpop.f32.mrb[0].mxu0
        %v1815 = vadd.f32 %v926, %v1814
        %1816 = vmatprep.mubr.bf16.mxu0 %v774
        %1817 = vmatmul.mubr.bf16.gmra.mrb[0].mxu0 %v773
        %v1818 = vpop.f32.mrb[0].mxu0
        %v1819 = vadd.f32 %v922, %v1818
        %v1820 = vpop.f32.mrb[0].mxu0
        %v1821 = vadd.f32 %v926, %v1820
        %v1822 = vpop.f32.mrb[0].mxu0
        %v1823 = vadd.f32 %v922, %v1822
        %v1824 = vpop.f32.mrb[0].mxu0
        %v1825 = vadd.f32 %v926, %v1824
        %1826 = vmatprep.mubr.bf16.mxu0 %v776
        %1827 = vmatmul.mubr.bf16.gmra.mrb[0].mxu0 %v775
        %v1828 = vpop.f32.mrb[0].mxu0
        %v1829 = vadd.f32 %v922, %v1828
        %v1830 = vpop.f32.mrb[0].mxu0
        %v1831 = vadd.f32 %v926, %v1830
        %v1832 = vpop.f32.mrb[0].mxu0
        %v1833 = vadd.f32 %v922, %v1832
        %v1834 = vpop.f32.mrb[0].mxu0
        %v1835 = vadd.f32 %v926, %v1834
        %1836 = vmatprep.mubr.bf16.mxu0 %v778
        %1837 = vmatmul.mubr.bf16.gmra.mrb[0].mxu0 %v777
        %v1838 = vpop.f32.mrb[0].mxu0
        %v1839 = vadd.f32 %v922, %v1838
        %v1840 = vpop.f32.mrb[0].mxu0
        %v1841 = vadd.f32 %v926, %v1840
        %v1842 = vpop.f32.mrb[0].mxu0
        %v1843 = vadd.f32 %v922, %v1842
        %v1844 = vpop.f32.mrb[0].mxu0
        %v1845 = vadd.f32 %v926, %v1844
        %1846 = vmatprep.mubr.bf16.mxu0 %v780
        %1847 = vmatmul.mubr.bf16.gmra.mrb[0].mxu0 %v779
        %v1848 = vpop.f32.mrb[0].mxu0
        %v1849 = vadd.f32 %v922, %v1848
        %v1850 = vpop.f32.mrb[0].mxu0
        %v1851 = vadd.f32 %v926, %v1850
        %v1852 = vpop.f32.mrb[0].mxu0
        %v1853 = vadd.f32 %v922, %v1852
        %v1854 = vpop.f32.mrb[0].mxu0
        %v1855 = vadd.f32 %v926, %v1854
        %1856 = vdwg.mxu0
        %1857 = vmatprep.subr.bf16.mxu0 %v1340
        %1858 = vmatpush1.bf16.msra.mxu0 %v1339
        %1859 = vmatprep.subr.bf16.mxu0 %v1348
        %1860 = vmatpush1.bf16.msra.mxu0 %v1347
        %1861 = vmatprep.subr.bf16.mxu0 %v1356
        %1862 = vmatpush1.bf16.msra.mxu0 %v1355
        %1863 = vmatprep.subr.bf16.mxu0 %v1364
        %1864 = vmatpush1.bf16.msra.mxu0 %v1363
        %1865 = vmatprep.subr.bf16.mxu0 %v1372
        %1866 = vmatpush1.bf16.msra.mxu0 %v1371
        %1867 = vmatprep.subr.bf16.mxu0 %v1380
        %1868 = vmatpush1.bf16.msra.mxu0 %v1379
        %1869 = vmatprep.subr.bf16.mxu0 %v1388
        %1870 = vmatpush1.bf16.msra.mxu0 %v1387
        %1871 = vmatprep.subr.bf16.mxu0 %v1396
        %1872 = vmatpush1.bf16.msra.mxu0 %v1395
        %1873 = vmatprep.subr.bf16.mxu0 %v1404
        %1874 = vmatpush1.bf16.msra.mxu0 %v1403
        %1875 = vmatprep.subr.bf16.mxu0 %v1412
        %1876 = vmatpush1.bf16.msra.mxu0 %v1411
        %1877 = vmatprep.subr.bf16.mxu0 %v1420
        %1878 = vmatpush1.bf16.msra.mxu0 %v1419
        %1879 = vmatprep.subr.bf16.mxu0 %v1428
        %1880 = vmatpush1.bf16.msra.mxu0 %v1427
        %1881 = vmatprep.subr.bf16.mxu0 %v1436
        %1882 = vmatpush1.bf16.msra.mxu0 %v1435
        %1883 = vmatprep.subr.bf16.mxu0 %v1444
        %1884 = vmatpush1.bf16.msra.mxu0 %v1443
        %1885 = vmatprep.subr.bf16.mxu0 %v1452
        %1886 = vmatpush1.bf16.msra.mxu0 %v1451
        %1887 = vmatprep.subr.bf16.mxu0 %v1460
        %1888 = vmatpush1.bf16.msra.mxu0 %v1459
        %1889 = vmatprep.mubr.bf16.mxu0 %v762
        %1890 = vmatmul.mubr.bf16.gmra.mrb[0].mxu0 %v761
        %v1891 = vpop.f32.mrb[0].mxu0
        %v1892 = vadd.f32 %v930, %v1891
        %v1893 = vpop.f32.mrb[0].mxu0
        %v1894 = vadd.f32 %v934, %v1893
        %v1895 = vpop.f32.mrb[0].mxu0
        %v1896 = vadd.f32 %v930, %v1895
        %v1897 = vpop.f32.mrb[0].mxu0
        %v1898 = vadd.f32 %v934, %v1897
        %1899 = vmatprep.mubr.bf16.mxu0 %v764
        %1900 = vmatmul.mubr.bf16.gmra.mrb[0].mxu0 %v763
        %v1901 = vpop.f32.mrb[0].mxu0
        %v1902 = vadd.f32 %v930, %v1901
        %v1903 = vpop.f32.mrb[0].mxu0
        %v1904 = vadd.f32 %v934, %v1903
        %v1905 = vpop.f32.mrb[0].mxu0
        %v1906 = vadd.f32 %v930, %v1905
        %v1907 = vpop.f32.mrb[0].mxu0
        %v1908 = vadd.f32 %v934, %v1907
        %1909 = vmatprep.mubr.bf16.mxu0 %v766
        %1910 = vmatmul.mubr.bf16.gmra.mrb[0].mxu0 %v765
        %v1911 = vpop.f32.mrb[0].mxu0
        %v1912 = vadd.f32 %v930, %v1911
        %v1913 = vpop.f32.mrb[0].mxu0
        %v1914 = vadd.f32 %v934, %v1913
        %v1915 = vpop.f32.mrb[0].mxu0
        %v1916 = vadd.f32 %v930, %v1915
        %v1917 = vpop.f32.mrb[0].mxu0
        %v1918 = vadd.f32 %v934, %v1917
        %1919 = vmatprep.mubr.bf16.mxu0 %v768
        %1920 = vmatmul.mubr.bf16.gmra.mrb[0].mxu0 %v767
        %v1921 = vpop.f32.mrb[0].mxu0
        %v1922 = vadd.f32 %v930, %v1921
        %v1923 = vpop.f32.mrb[0].mxu0
        %v1924 = vadd.f32 %v934, %v1923
        %v1925 = vpop.f32.mrb[0].mxu0
        %v1926 = vadd.f32 %v930, %v1925
        %v1927 = vpop.f32.mrb[0].mxu0
        %v1928 = vadd.f32 %v934, %v1927
        %1929 = vmatprep.mubr.bf16.mxu0 %v770
        %1930 = vmatmul.mubr.bf16.gmra.mrb[0].mxu0 %v769
        %v1931 = vpop.f32.mrb[0].mxu0
        %v1932 = vadd.f32 %v930, %v1931
        %v1933 = vpop.f32.mrb[0].mxu0
        %v1934 = vadd.f32 %v934, %v1933
        %v1935 = vpop.f32.mrb[0].mxu0
        %v1936 = vadd.f32 %v930, %v1935
        %v1937 = vpop.f32.mrb[0].mxu0
        %v1938 = vadd.f32 %v934, %v1937
        %1939 = vmatprep.mubr.bf16.mxu0 %v772
        %1940 = vmatmul.mubr.bf16.gmra.mrb[0].mxu0 %v771
        %v1941 = vpop.f32.mrb[0].mxu0
        %v1942 = vadd.f32 %v930, %v1941
        %v1943 = vpop.f32.mrb[0].mxu0
        %v1944 = vadd.f32 %v934, %v1943
        %v1945 = vpop.f32.mrb[0].mxu0
        %v1946 = vadd.f32 %v930, %v1945
        %v1947 = vpop.f32.mrb[0].mxu0
        %v1948 = vadd.f32 %v934, %v1947
        %1949 = vmatprep.mubr.bf16.mxu0 %v774
        %1950 = vmatmul.mubr.bf16.gmra.mrb[0].mxu0 %v773
        %v1951 = vpop.f32.mrb[0].mxu0
        %v1952 = vadd.f32 %v930, %v1951
        %v1953 = vpop.f32.mrb[0].mxu0
        %v1954 = vadd.f32 %v934, %v1953
        %v1955 = vpop.f32.mrb[0].mxu0
        %v1956 = vadd.f32 %v930, %v1955
        %v1957 = vpop.f32.mrb[0].mxu0
        %v1958 = vadd.f32 %v934, %v1957
        %1959 = vmatprep.mubr.bf16.mxu0 %v776
        %1960 = vmatmul.mubr.bf16.gmra.mrb[0].mxu0 %v775
        %v1961 = vpop.f32.mrb[0].mxu0
        %v1962 = vadd.f32 %v930, %v1961
        %v1963 = vpop.f32.mrb[0].mxu0
        %v1964 = vadd.f32 %v934, %v1963
        %v1965 = vpop.f32.mrb[0].mxu0
        %v1966 = vadd.f32 %v930, %v1965
        %v1967 = vpop.f32.mrb[0].mxu0
        %v1968 = vadd.f32 %v934, %v1967
        %1969 = vmatprep.mubr.bf16.mxu0 %v778
        %1970 = vmatmul.mubr.bf16.gmra.mrb[0].mxu0 %v777
        %v1971 = vpop.f32.mrb[0].mxu0
        %v1972 = vadd.f32 %v930, %v1971
        %v1973 = vpop.f32.mrb[0].mxu0
        %v1974 = vadd.f32 %v934, %v1973
        %v1975 = vpop.f32.mrb[0].mxu0
        %v1976 = vadd.f32 %v930, %v1975
        %v1977 = vpop.f32.mrb[0].mxu0
        %v1978 = vadd.f32 %v934, %v1977
        %1979 = vmatprep.mubr.bf16.mxu0 %v780
        %1980 = vmatmul.mubr.bf16.gmra.mrb[0].mxu0 %v779
        %v1981 = vpop.f32.mrb[0].mxu0
        %v1982 = vadd.f32 %v930, %v1981
        %v1983 = vpop.f32.mrb[0].mxu0
        %v1984 = vadd.f32 %v934, %v1983
        %v1985 = vpop.f32.mrb[0].mxu0
        %v1986 = vadd.f32 %v930, %v1985
        %v1987 = vpop.f32.mrb[0].mxu0
        %v1988 = vadd.f32 %v934, %v1987
        %1989 = vdwg.mxu0
        %1990 = vmatprep.subr.bf16.mxu0 %v1342
        %1991 = vmatpush1.bf16.msra.mxu0 %v1341
        %1992 = vmatprep.subr.bf16.mxu0 %v1350
        %1993 = vmatpush1.bf16.msra.mxu0 %v1349
        %1994 = vmatprep.subr.bf16.mxu0 %v1358
        %1995 = vmatpush1.bf16.msra.mxu0 %v1357
        %1996 = vmatprep.subr.bf16.mxu0 %v1366
        %1997 = vmatpush1.bf16.msra.mxu0 %v1365
        %1998 = vmatprep.subr.bf16.mxu0 %v1374
        %1999 = vmatpush1.bf16.msra.mxu0 %v1373
        %2000 = vmatprep.subr.bf16.mxu0 %v1382
        %2001 = vmatpush1.bf16.msra.mxu0 %v1381
        %2002 = vmatprep.subr.bf16.mxu0 %v1390
        %2003 = vmatpush1.bf16.msra.mxu0 %v1389
        %2004 = vmatprep.subr.bf16.mxu0 %v1398
        %2005 = vmatpush1.bf16.msra.mxu0 %v1397
        %2006 = vmatprep.subr.bf16.mxu0 %v1406
        %2007 = vmatpush1.bf16.msra.mxu0 %v1405
        %2008 = vmatprep.subr.bf16.mxu0 %v1414
        %2009 = vmatpush1.bf16.msra.mxu0 %v1413
        %2010 = vmatprep.subr.bf16.mxu0 %v1422
        %2011 = vmatpush1.bf16.msra.mxu0 %v1421
        %2012 = vmatprep.subr.bf16.mxu0 %v1430
        %2013 = vmatpush1.bf16.msra.mxu0 %v1429
        %2014 = vmatprep.subr.bf16.mxu0 %v1438
        %2015 = vmatpush1.bf16.msra.mxu0 %v1437
        %2016 = vmatprep.subr.bf16.mxu0 %v1446
        %2017 = vmatpush1.bf16.msra.mxu0 %v1445
        %2018 = vmatprep.subr.bf16.mxu0 %v1454
        %2019 = vmatpush1.bf16.msra.mxu0 %v1453
        %2020 = vmatprep.subr.bf16.mxu0 %v1462
        %2021 = vmatpush1.bf16.msra.mxu0 %v1461
        %2022 = vmatprep.mubr.bf16.mxu0 %v762
        %2023 = vmatmul.mubr.bf16.gmra.mrb[0].mxu0 %v761
        %v2024 = vpop.f32.mrb[0].mxu0
        %v2025 = vadd.f32 %v938, %v2024
        %v2026 = vpop.f32.mrb[0].mxu0
        %v2027 = vadd.f32 %v942, %v2026
        %v2028 = vpop.f32.mrb[0].mxu0
        %v2029 = vadd.f32 %v938, %v2028
        %v2030 = vpop.f32.mrb[0].mxu0
        %v2031 = vadd.f32 %v942, %v2030
        %2032 = vmatprep.mubr.bf16.mxu0 %v764
        %2033 = vmatmul.mubr.bf16.gmra.mrb[0].mxu0 %v763
        %v2034 = vpop.f32.mrb[0].mxu0
        %v2035 = vadd.f32 %v938, %v2034
        %v2036 = vpop.f32.mrb[0].mxu0
        %v2037 = vadd.f32 %v942, %v2036
        %v2038 = vpop.f32.mrb[0].mxu0
        %v2039 = vadd.f32 %v938, %v2038
        %v2040 = vpop.f32.mrb[0].mxu0
        %v2041 = vadd.f32 %v942, %v2040
        %2042 = vmatprep.mubr.bf16.mxu0 %v766
        %2043 = vmatmul.mubr.bf16.gmra.mrb[0].mxu0 %v765
        %v2044 = vpop.f32.mrb[0].mxu0
        %v2045 = vadd.f32 %v938, %v2044
        %v2046 = vpop.f32.mrb[0].mxu0
        %v2047 = vadd.f32 %v942, %v2046
        %v2048 = vpop.f32.mrb[0].mxu0
        %v2049 = vadd.f32 %v938, %v2048
        %v2050 = vpop.f32.mrb[0].mxu0
        %v2051 = vadd.f32 %v942, %v2050
        %2052 = vmatprep.mubr.bf16.mxu0 %v768
        %2053 = vmatmul.mubr.bf16.gmra.mrb[0].mxu0 %v767
        %v2054 = vpop.f32.mrb[0].mxu0
        %v2055 = vadd.f32 %v938, %v2054
        %v2056 = vpop.f32.mrb[0].mxu0
        %v2057 = vadd.f32 %v942, %v2056
        %v2058 = vpop.f32.mrb[0].mxu0
        %v2059 = vadd.f32 %v938, %v2058
        %v2060 = vpop.f32.mrb[0].mxu0
        %v2061 = vadd.f32 %v942, %v2060
        %2062 = vmatprep.mubr.bf16.mxu0 %v770
        %2063 = vmatmul.mubr.bf16.gmra.mrb[0].mxu0 %v769
        %v2064 = vpop.f32.mrb[0].mxu0
        %v2065 = vadd.f32 %v938, %v2064
        %v2066 = vpop.f32.mrb[0].mxu0
        %v2067 = vadd.f32 %v942, %v2066
        %v2068 = vpop.f32.mrb[0].mxu0
        %v2069 = vadd.f32 %v938, %v2068
        %v2070 = vpop.f32.mrb[0].mxu0
        %v2071 = vadd.f32 %v942, %v2070
        %2072 = vmatprep.mubr.bf16.mxu0 %v772
        %2073 = vmatmul.mubr.bf16.gmra.mrb[0].mxu0 %v771
        %v2074 = vpop.f32.mrb[0].mxu0
        %v2075 = vadd.f32 %v938, %v2074
        %v2076 = vpop.f32.mrb[0].mxu0
        %v2077 = vadd.f32 %v942, %v2076
        %v2078 = vpop.f32.mrb[0].mxu0
        %v2079 = vadd.f32 %v938, %v2078
        %v2080 = vpop.f32.mrb[0].mxu0
        %v2081 = vadd.f32 %v942, %v2080
        %2082 = vmatprep.mubr.bf16.mxu0 %v774
        %2083 = vmatmul.mubr.bf16.gmra.mrb[0].mxu0 %v773
        %v2084 = vpop.f32.mrb[0].mxu0
        %v2085 = vadd.f32 %v938, %v2084
        %v2086 = vpop.f32.mrb[0].mxu0
        %v2087 = vadd.f32 %v942, %v2086
        %v2088 = vpop.f32.mrb[0].mxu0
        %v2089 = vadd.f32 %v938, %v2088
        %v2090 = vpop.f32.mrb[0].mxu0
        %v2091 = vadd.f32 %v942, %v2090
        %2092 = vmatprep.mubr.bf16.mxu0 %v776
        %2093 = vmatmul.mubr.bf16.gmra.mrb[0].mxu0 %v775
        %v2094 = vpop.f32.mrb[0].mxu0
        %v2095 = vadd.f32 %v938, %v2094
        %v2096 = vpop.f32.mrb[0].mxu0
        %v2097 = vadd.f32 %v942, %v2096
        %v2098 = vpop.f32.mrb[0].mxu0
        %v2099 = vadd.f32 %v938, %v2098
        %v2100 = vpop.f32.mrb[0].mxu0
        %v2101 = vadd.f32 %v942, %v2100
        %2102 = vmatprep.mubr.bf16.mxu0 %v778
        %2103 = vmatmul.mubr.bf16.gmra.mrb[0].mxu0 %v777
        %v2104 = vpop.f32.mrb[0].mxu0
        %v2105 = vadd.f32 %v938, %v2104
        %v2106 = vpop.f32.mrb[0].mxu0
        %v2107 = vadd.f32 %v942, %v2106
        %v2108 = vpop.f32.mrb[0].mxu0
        %v2109 = vadd.f32 %v938, %v2108
        %v2110 = vpop.f32.mrb[0].mxu0
        %v2111 = vadd.f32 %v942, %v2110
        %2112 = vmatprep.mubr.bf16.mxu0 %v780
        %2113 = vmatmul.mubr.bf16.gmra.mrb[0].mxu0 %v779
        %v2114 = vpop.f32.mrb[0].mxu0
        %v2115 = vadd.f32 %v938, %v2114
        %v2116 = vpop.f32.mrb[0].mxu0
        %v2117 = vadd.f32 %v942, %v2116
        %v2118 = vpop.f32.mrb[0].mxu0
        %v2119 = vadd.f32 %v938, %v2118
        %v2120 = vpop.f32.mrb[0].mxu0
        %v2121 = vadd.f32 %v942, %v2120
        %2122 = vdwg.mxu0
        %v2123 = vmax.f32 %v1626, 0.0
        %v2124 = vmax.f32 %v1628, 0.0
        %v2125 = vmax.f32 %v1759, 0.0
        %v2126 = vmax.f32 %v1761, 0.0
        %v2127 = vmax.f32 %v1892, 0.0
        %v2128 = vmax.f32 %v1894, 0.0
        %v2129 = vmax.f32 %v2025, 0.0
        %v2130 = vmax.f32 %v2027, 0.0
        %v2131 = vmax.f32 %v1630, 0.0
        %v2132 = vmax.f32 %v1632, 0.0
        %v2133 = vmax.f32 %v1763, 0.0
        %v2134 = vmax.f32 %v1765, 0.0
        %v2135 = vmax.f32 %v1896, 0.0
        %v2136 = vmax.f32 %v1898, 0.0
        %v2137 = vmax.f32 %v2029, 0.0
        %v2138 = vmax.f32 %v2031, 0.0
        %v2139 = vmax.f32 %v1636, 0.0
        %v2140 = vmax.f32 %v1638, 0.0
        %v2141 = vmax.f32 %v1769, 0.0
        %v2142 = vmax.f32 %v1771, 0.0
        %v2143 = vmax.f32 %v1902, 0.0
        %v2144 = vmax.f32 %v1904, 0.0
        %v2145 = vmax.f32 %v2035, 0.0
        %v2146 = vmax.f32 %v2037, 0.0
        %v2147 = vmax.f32 %v1640, 0.0
        %v2148 = vmax.f32 %v1642, 0.0
        %v2149 = vmax.f32 %v1773, 0.0
        %v2150 = vmax.f32 %v1775, 0.0
        %v2151 = vmax.f32 %v1906, 0.0
        %v2152 = vmax.f32 %v1908, 0.0
        %v2153 = vmax.f32 %v2039, 0.0
        %v2154 = vmax.f32 %v2041, 0.0
        %v2155 = vmax.f32 %v1646, 0.0
        %v2156 = vmax.f32 %v1648, 0.0
        %v2157 = vmax.f32 %v1779, 0.0
        %v2158 = vmax.f32 %v1781, 0.0
        %v2159 = vmax.f32 %v1912, 0.0
        %v2160 = vmax.f32 %v1914, 0.0
        %v2161 = vmax.f32 %v2045, 0.0
        %v2162 = vmax.f32 %v2047, 0.0
        %v2163 = vmax.f32 %v1650, 0.0
        %v2164 = vmax.f32 %v1652, 0.0
        %v2165 = vmax.f32 %v1783, 0.0
        %v2166 = vmax.f32 %v1785, 0.0
        %v2167 = vmax.f32 %v1916, 0.0
        %v2168 = vmax.f32 %v1918, 0.0
        %v2169 = vmax.f32 %v2049, 0.0
        %v2170 = vmax.f32 %v2051, 0.0
        %v2171 = vmax.f32 %v1656, 0.0
        %v2172 = vmax.f32 %v1658, 0.0
        %v2173 = vmax.f32 %v1789, 0.0
        %v2174 = vmax.f32 %v1791, 0.0
        %v2175 = vmax.f32 %v1922, 0.0
        %v2176 = vmax.f32 %v1924, 0.0
        %v2177 = vmax.f32 %v2055, 0.0
        %v2178 = vmax.f32 %v2057, 0.0
        %v2179 = vmax.f32 %v1660, 0.0
        %v2180 = vmax.f32 %v1662, 0.0
        %v2181 = vmax.f32 %v1793, 0.0
        %v2182 = vmax.f32 %v1795, 0.0
        %v2183 = vmax.f32 %v1926, 0.0
        %v2184 = vmax.f32 %v1928, 0.0
        %v2185 = vmax.f32 %v2059, 0.0
        %v2186 = vmax.f32 %v2061, 0.0
        %v2187 = vmax.f32 %v1666, 0.0
        %v2188 = vmax.f32 %v1668, 0.0
        %v2189 = vmax.f32 %v1799, 0.0
        %v2190 = vmax.f32 %v1801, 0.0
        %v2191 = vmax.f32 %v1932, 0.0
        %v2192 = vmax.f32 %v1934, 0.0
        %v2193 = vmax.f32 %v2065, 0.0
        %v2194 = vmax.f32 %v2067, 0.0
        %v2195 = vmax.f32 %v1670, 0.0
        %v2196 = vmax.f32 %v1672, 0.0
        %v2197 = vmax.f32 %v1803, 0.0
        %v2198 = vmax.f32 %v1805, 0.0
        %v2199 = vmax.f32 %v1936, 0.0
        %v2200 = vmax.f32 %v1938, 0.0
        %v2201 = vmax.f32 %v2069, 0.0
        %v2202 = vmax.f32 %v2071, 0.0
        %v2203 = vmax.f32 %v1676, 0.0
        %v2204 = vmax.f32 %v1678, 0.0
        %v2205 = vmax.f32 %v1809, 0.0
        %v2206 = vmax.f32 %v1811, 0.0
        %v2207 = vmax.f32 %v1942, 0.0
        %v2208 = vmax.f32 %v1944, 0.0
        %v2209 = vmax.f32 %v2075, 0.0
        %v2210 = vmax.f32 %v2077, 0.0
        %v2211 = vmax.f32 %v1680, 0.0
        %v2212 = vmax.f32 %v1682, 0.0
        %v2213 = vmax.f32 %v1813, 0.0
        %v2214 = vmax.f32 %v1815, 0.0
        %v2215 = vmax.f32 %v1946, 0.0
        %v2216 = vmax.f32 %v1948, 0.0
        %v2217 = vmax.f32 %v2079, 0.0
        %v2218 = vmax.f32 %v2081, 0.0
        %v2219 = vmax.f32 %v1686, 0.0
        %v2220 = vmax.f32 %v1688, 0.0
        %v2221 = vmax.f32 %v1819, 0.0
        %v2222 = vmax.f32 %v1821, 0.0
        %v2223 = vmax.f32 %v1952, 0.0
        %v2224 = vmax.f32 %v1954, 0.0
        %v2225 = vmax.f32 %v2085, 0.0
        %v2226 = vmax.f32 %v2087, 0.0
        %v2227 = vmax.f32 %v1690, 0.0
        %v2228 = vmax.f32 %v1692, 0.0
        %v2229 = vmax.f32 %v1823, 0.0
        %v2230 = vmax.f32 %v1825, 0.0
        %v2231 = vmax.f32 %v1956, 0.0
        %v2232 = vmax.f32 %v1958, 0.0
        %v2233 = vmax.f32 %v2089, 0.0
        %v2234 = vmax.f32 %v2091, 0.0
        %v2235 = vmax.f32 %v1696, 0.0
        %v2236 = vmax.f32 %v1698, 0.0
        %v2237 = vmax.f32 %v1829, 0.0
        %v2238 = vmax.f32 %v1831, 0.0
        %v2239 = vmax.f32 %v1962, 0.0
        %v2240 = vmax.f32 %v1964, 0.0
        %v2241 = vmax.f32 %v2095, 0.0
        %v2242 = vmax.f32 %v2097, 0.0
        %v2243 = vmax.f32 %v1700, 0.0
        %v2244 = vmax.f32 %v1702, 0.0
        %v2245 = vmax.f32 %v1833, 0.0
        %v2246 = vmax.f32 %v1835, 0.0
        %v2247 = vmax.f32 %v1966, 0.0
        %v2248 = vmax.f32 %v1968, 0.0
        %v2249 = vmax.f32 %v2099, 0.0
        %v2250 = vmax.f32 %v2101, 0.0
        %v2251 = vmax.f32 %v1706, 0.0
        %v2252 = vmax.f32 %v1708, 0.0
        %v2253 = vmax.f32 %v1839, 0.0
        %v2254 = vmax.f32 %v1841, 0.0
        %v2255 = vmax.f32 %v1972, 0.0
        %v2256 = vmax.f32 %v1974, 0.0
        %v2257 = vmax.f32 %v2105, 0.0
        %v2258 = vmax.f32 %v2107, 0.0
        %v2259 = vmax.f32 %v1710, 0.0
        %v2260 = vmax.f32 %v1712, 0.0
        %v2261 = vmax.f32 %v1843, 0.0
        %v2262 = vmax.f32 %v1845, 0.0
        %v2263 = vmax.f32 %v1976, 0.0
        %v2264 = vmax.f32 %v1978, 0.0
        %v2265 = vmax.f32 %v2109, 0.0
        %v2266 = vmax.f32 %v2111, 0.0
        %v2267 = vmax.f32 %v1716, 0.0
        %v2268 = vmax.f32 %v1718, 0.0
        %v2269 = vmax.f32 %v1849, 0.0
        %v2270 = vmax.f32 %v1851, 0.0
        %v2271 = vmax.f32 %v1982, 0.0
        %v2272 = vmax.f32 %v1984, 0.0
        %v2273 = vmax.f32 %v2115, 0.0
        %v2274 = vmax.f32 %v2117, 0.0
        %v2275 = vmax.f32 %v1720, 0.0
        %v2276 = vmax.f32 %v1722, 0.0
        %v2277 = vmax.f32 %v1853, 0.0
        %v2278 = vmax.f32 %v1855, 0.0
        %v2279 = vmax.f32 %v1986, 0.0
        %v2280 = vmax.f32 %v1988, 0.0
        %v2281 = vmax.f32 %v2119, 0.0
        %v2282 = vmax.f32 %v2121, 0.0
        %v2283 = vpack.c.bf16 %v2131, %v2123
        %v2284 = vpack.c.bf16 %v2132, %v2124
        %v2285 = vpack.c.bf16 %v2133, %v2125
        %v2286 = vpack.c.bf16 %v2134, %v2126
        %v2287 = vpack.c.bf16 %v2135, %v2127
        %v2288 = vpack.c.bf16 %v2136, %v2128
        %v2289 = vpack.c.bf16 %v2137, %v2129
        %v2290 = vpack.c.bf16 %v2138, %v2130
        %v2291 = vpack.c.bf16 %v2147, %v2139
        %v2292 = vpack.c.bf16 %v2148, %v2140
        %v2293 = vpack.c.bf16 %v2149, %v2141
        %v2294 = vpack.c.bf16 %v2150, %v2142
        %v2295 = vpack.c.bf16 %v2151, %v2143
        %v2296 = vpack.c.bf16 %v2152, %v2144
        %v2297 = vpack.c.bf16 %v2153, %v2145
        %v2298 = vpack.c.bf16 %v2154, %v2146
        %v2299 = vpack.c.bf16 %v2163, %v2155
        %v2300 = vpack.c.bf16 %v2164, %v2156
        %v2301 = vpack.c.bf16 %v2165, %v2157
        %v2302 = vpack.c.bf16 %v2166, %v2158
        %v2303 = vpack.c.bf16 %v2167, %v2159
        %v2304 = vpack.c.bf16 %v2168, %v2160
        %v2305 = vpack.c.bf16 %v2169, %v2161
        %v2306 = vpack.c.bf16 %v2170, %v2162
        %v2307 = vpack.c.bf16 %v2179, %v2171
        %v2308 = vpack.c.bf16 %v2180, %v2172
        %v2309 = vpack.c.bf16 %v2181, %v2173
        %v2310 = vpack.c.bf16 %v2182, %v2174
        %v2311 = vpack.c.bf16 %v2183, %v2175
        %v2312 = vpack.c.bf16 %v2184, %v2176
        %v2313 = vpack.c.bf16 %v2185, %v2177
        %v2314 = vpack.c.bf16 %v2186, %v2178
        %v2315 = vpack.c.bf16 %v2195, %v2187
        %v2316 = vpack.c.bf16 %v2196, %v2188
        %v2317 = vpack.c.bf16 %v2197, %v2189
        %v2318 = vpack.c.bf16 %v2198, %v2190
        %v2319 = vpack.c.bf16 %v2199, %v2191
        %v2320 = vpack.c.bf16 %v2200, %v2192
        %v2321 = vpack.c.bf16 %v2201, %v2193
        %v2322 = vpack.c.bf16 %v2202, %v2194
        %v2323 = vpack.c.bf16 %v2211, %v2203
        %v2324 = vpack.c.bf16 %v2212, %v2204
        %v2325 = vpack.c.bf16 %v2213, %v2205
        %v2326 = vpack.c.bf16 %v2214, %v2206
        %v2327 = vpack.c.bf16 %v2215, %v2207
        %v2328 = vpack.c.bf16 %v2216, %v2208
        %v2329 = vpack.c.bf16 %v2217, %v2209
        %v2330 = vpack.c.bf16 %v2218, %v2210
        %v2331 = vpack.c.bf16 %v2227, %v2219
        %v2332 = vpack.c.bf16 %v2228, %v2220
        %v2333 = vpack.c.bf16 %v2229, %v2221
        %v2334 = vpack.c.bf16 %v2230, %v2222
        %v2335 = vpack.c.bf16 %v2231, %v2223
        %v2336 = vpack.c.bf16 %v2232, %v2224
        %v2337 = vpack.c.bf16 %v2233, %v2225
        %v2338 = vpack.c.bf16 %v2234, %v2226
        %v2339 = vpack.c.bf16 %v2243, %v2235
        %v2340 = vpack.c.bf16 %v2244, %v2236
        %v2341 = vpack.c.bf16 %v2245, %v2237
        %v2342 = vpack.c.bf16 %v2246, %v2238
        %v2343 = vpack.c.bf16 %v2247, %v2239
        %v2344 = vpack.c.bf16 %v2248, %v2240
        %v2345 = vpack.c.bf16 %v2249, %v2241
        %v2346 = vpack.c.bf16 %v2250, %v2242
        %v2347 = vpack.c.bf16 %v2259, %v2251
        %v2348 = vpack.c.bf16 %v2260, %v2252
        %v2349 = vpack.c.bf16 %v2261, %v2253
        %v2350 = vpack.c.bf16 %v2262, %v2254
        %v2351 = vpack.c.bf16 %v2263, %v2255
        %v2352 = vpack.c.bf16 %v2264, %v2256
        %v2353 = vpack.c.bf16 %v2265, %v2257
        %v2354 = vpack.c.bf16 %v2266, %v2258
        %v2355 = vpack.c.bf16 %v2275, %v2267
        %v2356 = vpack.c.bf16 %v2276, %v2268
        %v2357 = vpack.c.bf16 %v2277, %v2269
        %v2358 = vpack.c.bf16 %v2278, %v2270
        %v2359 = vpack.c.bf16 %v2279, %v2271
        %v2360 = vpack.c.bf16 %v2280, %v2272
        %v2361 = vpack.c.bf16 %v2281, %v2273
        %v2362 = vpack.c.bf16 %v2282, %v2274
        %v2363 = vld [vmem:[#allocation6] sm:$0xff]
        %v2364 = vld [vmem:[#allocation6 + $0x8] sm:$0xff]
        %v2365 = vld [vmem:[#allocation6 + $0x10] sm:$0xff]
        %v2366 = vld [vmem:[#allocation6 + $0x18] sm:$0xff]
        %v2367 = vld [vmem:[#allocation6 + $0x20] sm:$0xff]
        %v2368 = vld [vmem:[#allocation6 + $0x28] sm:$0xff]
        %v2369 = vld [vmem:[#allocation6 + $0x30] sm:$0xff]
        %v2370 = vld [vmem:[#allocation6 + $0x38] sm:$0xff]
        %v2371 = vld [vmem:[#allocation6 + $0x40] sm:$0xff]
        %v2372 = vld [vmem:[#allocation6 + $0x48] sm:$0xff]
        %v2373 = vld [vmem:[#allocation6 + $0x50] sm:$0xff]
        %v2374 = vld [vmem:[#allocation6 + $0x58] sm:$0xff]
        %v2375 = vld [vmem:[#allocation6 + $0x60] sm:$0xff]
        %v2376 = vld [vmem:[#allocation6 + $0x68] sm:$0xff]
        %v2377 = vld [vmem:[#allocation6 + $0x70] sm:$0xff]
        %v2378 = vld [vmem:[#allocation6 + $0x78] sm:$0xff]
        %v2379 = vld [vmem:[#allocation6 + $0x80] sm:$0xff]
        %v2380 = vld [vmem:[#allocation6 + $0x88] sm:$0xff]
        %v2381 = vld [vmem:[#allocation6 + $0x90] sm:$0xff]
        %v2382 = vld [vmem:[#allocation6 + $0x98] sm:$0xff]
        %v2383 = vld [vmem:[#allocation6 + $0xa0] sm:$0xff]
        %v2384 = vld [vmem:[#allocation6 + $0xa8] sm:$0xff]
        %v2385 = vld [vmem:[#allocation6 + $0xb0] sm:$0xff]
        %v2386 = vld [vmem:[#allocation6 + $0xb8] sm:$0xff]
        %v2387 = vld [vmem:[#allocation6 + $0xc0] sm:$0xff]
        %v2388 = vld [vmem:[#allocation6 + $0xc8] sm:$0xff]
        %v2389 = vld [vmem:[#allocation6 + $0xd0] sm:$0xff]
        %v2390 = vld [vmem:[#allocation6 + $0xd8] sm:$0xff]
        %v2391 = vld [vmem:[#allocation6 + $0xe0] sm:$0xff]
        %v2392 = vld [vmem:[#allocation6 + $0xe8] sm:$0xff]
        %v2393 = vld [vmem:[#allocation6 + $0xf0] sm:$0xff]
        %v2394 = vld [vmem:[#allocation6 + $0xf8] sm:$0xff]
        %v2395 = vld [vmem:[#allocation6 + $0x100] sm:$0xff]
        %v2396 = vld [vmem:[#allocation6 + $0x108] sm:$0xff]
        %v2397 = vld [vmem:[#allocation6 + $0x110] sm:$0xff]
        %v2398 = vld [vmem:[#allocation6 + $0x118] sm:$0xff]
        %v2399 = vld [vmem:[#allocation6 + $0x120] sm:$0xff]
        %v2400 = vld [vmem:[#allocation6 + $0x128] sm:$0xff]
        %v2401 = vld [vmem:[#allocation6 + $0x130] sm:$0xff]
        %v2402 = vld [vmem:[#allocation6 + $0x138] sm:$0xff]
        %v2403 = vld [vmem:[#allocation6 + $0x140] sm:$0xff]
        %v2404 = vld [vmem:[#allocation6 + $0x148] sm:$0xff]
        %v2405 = vld [vmem:[#allocation6 + $0x150] sm:$0xff]
        %v2406 = vld [vmem:[#allocation6 + $0x158] sm:$0xff]
        %v2407 = vld [vmem:[#allocation6 + $0x160] sm:$0xff]
        %v2408 = vld [vmem:[#allocation6 + $0x168] sm:$0xff]
        %v2409 = vld [vmem:[#allocation6 + $0x170] sm:$0xff]
        %v2410 = vld [vmem:[#allocation6 + $0x178] sm:$0xff]
        %v2411 = vld [vmem:[#allocation6 + $0x180] sm:$0xff]
        %v2412 = vld [vmem:[#allocation6 + $0x188] sm:$0xff]
        %v2413 = vld [vmem:[#allocation6 + $0x190] sm:$0xff]
        %v2414 = vld [vmem:[#allocation6 + $0x198] sm:$0xff]
        %v2415 = vld [vmem:[#allocation6 + $0x1a0] sm:$0xff]
        %v2416 = vld [vmem:[#allocation6 + $0x1a8] sm:$0xff]
        %v2417 = vld [vmem:[#allocation6 + $0x1b0] sm:$0xff]
        %v2418 = vld [vmem:[#allocation6 + $0x1b8] sm:$0xff]
        %v2419 = vld [vmem:[#allocation6 + $0x1c0] sm:$0xff]
        %v2420 = vld [vmem:[#allocation6 + $0x1c8] sm:$0xff]
        %v2421 = vld [vmem:[#allocation6 + $0x1d0] sm:$0xff]
        %v2422 = vld [vmem:[#allocation6 + $0x1d8] sm:$0xff]
        %v2423 = vld [vmem:[#allocation6 + $0x1e0] sm:$0xff]
        %v2424 = vld [vmem:[#allocation6 + $0x1e8] sm:$0xff]
        %v2425 = vld [vmem:[#allocation6 + $0x1f0] sm:$0xff]
        %v2426 = vld [vmem:[#allocation6 + $0x1f8] sm:$0xff]
        %v2427 = vld [vmem:[#allocation6 + $0x200] sm:$0xff]
        %v2428 = vld [vmem:[#allocation6 + $0x208] sm:$0xff]
        %v2429 = vld [vmem:[#allocation6 + $0x210] sm:$0xff]
        %v2430 = vld [vmem:[#allocation6 + $0x218] sm:$0xff]
        %v2431 = vld [vmem:[#allocation6 + $0x220] sm:$0xff]
        %v2432 = vld [vmem:[#allocation6 + $0x228] sm:$0xff]
        %v2433 = vld [vmem:[#allocation6 + $0x230] sm:$0xff]
        %v2434 = vld [vmem:[#allocation6 + $0x238] sm:$0xff]
        %v2435 = vld [vmem:[#allocation6 + $0x240] sm:$0xff]
        %v2436 = vld [vmem:[#allocation6 + $0x248] sm:$0xff]
        %v2437 = vld [vmem:[#allocation6 + $0x250] sm:$0xff]
        %v2438 = vld [vmem:[#allocation6 + $0x258] sm:$0xff]
        %v2439 = vld [vmem:[#allocation6 + $0x260] sm:$0xff]
        %v2440 = vld [vmem:[#allocation6 + $0x268] sm:$0xff]
        %v2441 = vld [vmem:[#allocation6 + $0x270] sm:$0xff]
        %v2442 = vld [vmem:[#allocation6 + $0x278] sm:$0xff]
        %v2443 = vld [vmem:[#allocation6 + $0x280] sm:$0xff]
        %v2444 = vld [vmem:[#allocation6 + $0x288] sm:$0xff]
        %v2445 = vld [vmem:[#allocation6 + $0x290] sm:$0xff]
        %v2446 = vld [vmem:[#allocation6 + $0x298] sm:$0xff]
        %v2447 = vld [vmem:[#allocation6 + $0x2a0] sm:$0xff]
        %v2448 = vld [vmem:[#allocation6 + $0x2a8] sm:$0xff]
        %v2449 = vld [vmem:[#allocation6 + $0x2b0] sm:$0xff]
        %v2450 = vld [vmem:[#allocation6 + $0x2b8] sm:$0xff]
        %v2451 = vld [vmem:[#allocation6 + $0x2c0] sm:$0xff]
        %v2452 = vld [vmem:[#allocation6 + $0x2c8] sm:$0xff]
        %v2453 = vld [vmem:[#allocation6 + $0x2d0] sm:$0xff]
        %v2454 = vld [vmem:[#allocation6 + $0x2d8] sm:$0xff]
        %v2455 = vld [vmem:[#allocation6 + $0x2e0] sm:$0xff]
        %v2456 = vld [vmem:[#allocation6 + $0x2e8] sm:$0xff]
        %v2457 = vld [vmem:[#allocation6 + $0x2f0] sm:$0xff]
        %v2458 = vld [vmem:[#allocation6 + $0x2f8] sm:$0xff]
        %v2459 = vld [vmem:[#allocation6 + $0x300] sm:$0xff]
        %v2460 = vld [vmem:[#allocation6 + $0x308] sm:$0xff]
        %v2461 = vld [vmem:[#allocation6 + $0x310] sm:$0xff]
        %v2462 = vld [vmem:[#allocation6 + $0x318] sm:$0xff]
        %v2463 = vld [vmem:[#allocation6 + $0x320] sm:$0xff]
        %v2464 = vld [vmem:[#allocation6 + $0x328] sm:$0xff]
        %v2465 = vld [vmem:[#allocation6 + $0x330] sm:$0xff]
        %v2466 = vld [vmem:[#allocation6 + $0x338] sm:$0xff]
        %v2467 = vld [vmem:[#allocation6 + $0x340] sm:$0xff]
        %v2468 = vld [vmem:[#allocation6 + $0x348] sm:$0xff]
        %v2469 = vld [vmem:[#allocation6 + $0x350] sm:$0xff]
        %v2470 = vld [vmem:[#allocation6 + $0x358] sm:$0xff]
        %v2471 = vld [vmem:[#allocation6 + $0x360] sm:$0xff]
        %v2472 = vld [vmem:[#allocation6 + $0x368] sm:$0xff]
        %v2473 = vld [vmem:[#allocation6 + $0x370] sm:$0xff]
        %v2474 = vld [vmem:[#allocation6 + $0x378] sm:$0xff]
        %v2475 = vld [vmem:[#allocation6 + $0x380] sm:$0xff]
        %v2476 = vld [vmem:[#allocation6 + $0x388] sm:$0xff]
        %v2477 = vld [vmem:[#allocation6 + $0x390] sm:$0xff]
        %v2478 = vld [vmem:[#allocation6 + $0x398] sm:$0xff]
        %v2479 = vld [vmem:[#allocation6 + $0x3a0] sm:$0xff]
        %v2480 = vld [vmem:[#allocation6 + $0x3a8] sm:$0xff]
        %v2481 = vld [vmem:[#allocation6 + $0x3b0] sm:$0xff]
        %v2482 = vld [vmem:[#allocation6 + $0x3b8] sm:$0xff]
        %v2483 = vld [vmem:[#allocation6 + $0x3c0] sm:$0xff]
        %v2484 = vld [vmem:[#allocation6 + $0x3c8] sm:$0xff]
        %v2485 = vld [vmem:[#allocation6 + $0x3d0] sm:$0xff]
        %v2486 = vld [vmem:[#allocation6 + $0x3d8] sm:$0xff]
        %v2487 = vld [vmem:[#allocation6 + $0x3e0] sm:$0xff]
        %v2488 = vld [vmem:[#allocation6 + $0x3e8] sm:$0xff]
        %v2489 = vld [vmem:[#allocation6 + $0x3f0] sm:$0xff]
        %v2490 = vld [vmem:[#allocation6 + $0x3f8] sm:$0xff]
        %v2491 = vld [vmem:[%s6] sm:$0x3]
        %v2493 = vlaneseq
        %v2494 = vshrl.u32 %v2493, 7
        %v2495 = vsub.s32 0, %v2494
        %v2496 = vrot.slane %v2491, %v2495
        %v2497 = vlaneseq
        %v2498 = vshrl.u32 %v2497, 7
        %v2499 = vsub.s32 1, %v2498
        %v2500 = vrot.slane %v2491, %v2499
        %v2631 = vunpack.c.l.b16 %v2363
        %v2632 = vunpack.c.h.b16 %v2363
        %v2633 = vunpack.c.l.b16 %v2364
        %v2634 = vunpack.c.h.b16 %v2364
        %v2635 = vunpack.c.l.b16 %v2365
        %v2636 = vunpack.c.h.b16 %v2365
        %v2637 = vunpack.c.l.b16 %v2366
        %v2638 = vunpack.c.h.b16 %v2366
        %v2639 = vunpack.c.l.b16 %v2367
        %v2640 = vunpack.c.h.b16 %v2367
        %v2641 = vunpack.c.l.b16 %v2368
        %v2642 = vunpack.c.h.b16 %v2368
        %v2643 = vunpack.c.l.b16 %v2369
        %v2644 = vunpack.c.h.b16 %v2369
        %v2645 = vunpack.c.l.b16 %v2370
        %v2646 = vunpack.c.h.b16 %v2370
        %v2647 = vunpack.c.l.b16 %v2371
        %v2648 = vunpack.c.h.b16 %v2371
        %v2649 = vunpack.c.l.b16 %v2372
        %v2650 = vunpack.c.h.b16 %v2372
        %v2651 = vunpack.c.l.b16 %v2373
        %v2652 = vunpack.c.h.b16 %v2373
        %v2653 = vunpack.c.l.b16 %v2374
        %v2654 = vunpack.c.h.b16 %v2374
        %v2655 = vunpack.c.l.b16 %v2375
        %v2656 = vunpack.c.h.b16 %v2375
        %v2657 = vunpack.c.l.b16 %v2376
        %v2658 = vunpack.c.h.b16 %v2376
        %v2659 = vunpack.c.l.b16 %v2377
        %v2660 = vunpack.c.h.b16 %v2377
        %v2661 = vunpack.c.l.b16 %v2378
        %v2662 = vunpack.c.h.b16 %v2378
        %v2663 = vunpack.c.l.b16 %v2379
        %v2664 = vunpack.c.h.b16 %v2379
        %v2665 = vunpack.c.l.b16 %v2380
        %v2666 = vunpack.c.h.b16 %v2380
        %v2667 = vunpack.c.l.b16 %v2381
        %v2668 = vunpack.c.h.b16 %v2381
        %v2669 = vunpack.c.l.b16 %v2382
        %v2670 = vunpack.c.h.b16 %v2382
        %v2671 = vunpack.c.l.b16 %v2383
        %v2672 = vunpack.c.h.b16 %v2383
        %v2673 = vunpack.c.l.b16 %v2384
        %v2674 = vunpack.c.h.b16 %v2384
        %v2675 = vunpack.c.l.b16 %v2385
        %v2676 = vunpack.c.h.b16 %v2385
        %v2677 = vunpack.c.l.b16 %v2386
        %v2678 = vunpack.c.h.b16 %v2386
        %v2679 = vunpack.c.l.b16 %v2387
        %v2680 = vunpack.c.h.b16 %v2387
        %v2681 = vunpack.c.l.b16 %v2388
        %v2682 = vunpack.c.h.b16 %v2388
        %v2683 = vunpack.c.l.b16 %v2389
        %v2684 = vunpack.c.h.b16 %v2389
        %v2685 = vunpack.c.l.b16 %v2390
        %v2686 = vunpack.c.h.b16 %v2390
        %v2687 = vunpack.c.l.b16 %v2391
        %v2688 = vunpack.c.h.b16 %v2391
        %v2689 = vunpack.c.l.b16 %v2392
        %v2690 = vunpack.c.h.b16 %v2392
        %v2691 = vunpack.c.l.b16 %v2393
        %v2692 = vunpack.c.h.b16 %v2393
        %v2693 = vunpack.c.l.b16 %v2394
        %v2694 = vunpack.c.h.b16 %v2394
        %v2695 = vunpack.c.l.b16 %v2395
        %v2696 = vunpack.c.h.b16 %v2395
        %v2697 = vunpack.c.l.b16 %v2396
        %v2698 = vunpack.c.h.b16 %v2396
        %v2699 = vunpack.c.l.b16 %v2397
        %v2700 = vunpack.c.h.b16 %v2397
        %v2701 = vunpack.c.l.b16 %v2398
        %v2702 = vunpack.c.h.b16 %v2398
        %v2703 = vunpack.c.l.b16 %v2399
        %v2704 = vunpack.c.h.b16 %v2399
        %v2705 = vunpack.c.l.b16 %v2400
        %v2706 = vunpack.c.h.b16 %v2400
        %v2707 = vunpack.c.l.b16 %v2401
        %v2708 = vunpack.c.h.b16 %v2401
        %v2709 = vunpack.c.l.b16 %v2402
        %v2710 = vunpack.c.h.b16 %v2402
        %v2711 = vunpack.c.l.b16 %v2403
        %v2712 = vunpack.c.h.b16 %v2403
        %v2713 = vunpack.c.l.b16 %v2404
        %v2714 = vunpack.c.h.b16 %v2404
        %v2715 = vunpack.c.l.b16 %v2405
        %v2716 = vunpack.c.h.b16 %v2405
        %v2717 = vunpack.c.l.b16 %v2406
        %v2718 = vunpack.c.h.b16 %v2406
        %v2719 = vunpack.c.l.b16 %v2407
        %v2720 = vunpack.c.h.b16 %v2407
        %v2721 = vunpack.c.l.b16 %v2408
        %v2722 = vunpack.c.h.b16 %v2408
        %v2723 = vunpack.c.l.b16 %v2409
        %v2724 = vunpack.c.h.b16 %v2409
        %v2725 = vunpack.c.l.b16 %v2410
        %v2726 = vunpack.c.h.b16 %v2410
        %v2727 = vunpack.c.l.b16 %v2411
        %v2728 = vunpack.c.h.b16 %v2411
        %v2729 = vunpack.c.l.b16 %v2412
        %v2730 = vunpack.c.h.b16 %v2412
        %v2731 = vunpack.c.l.b16 %v2413
        %v2732 = vunpack.c.h.b16 %v2413
        %v2733 = vunpack.c.l.b16 %v2414
        %v2734 = vunpack.c.h.b16 %v2414
        %v2735 = vunpack.c.l.b16 %v2415
        %v2736 = vunpack.c.h.b16 %v2415
        %v2737 = vunpack.c.l.b16 %v2416
        %v2738 = vunpack.c.h.b16 %v2416
        %v2739 = vunpack.c.l.b16 %v2417
        %v2740 = vunpack.c.h.b16 %v2417
        %v2741 = vunpack.c.l.b16 %v2418
        %v2742 = vunpack.c.h.b16 %v2418
        %v2743 = vunpack.c.l.b16 %v2419
        %v2744 = vunpack.c.h.b16 %v2419
        %v2745 = vunpack.c.l.b16 %v2420
        %v2746 = vunpack.c.h.b16 %v2420
        %v2747 = vunpack.c.l.b16 %v2421
        %v2748 = vunpack.c.h.b16 %v2421
        %v2749 = vunpack.c.l.b16 %v2422
        %v2750 = vunpack.c.h.b16 %v2422
        %v2751 = vunpack.c.l.b16 %v2423
        %v2752 = vunpack.c.h.b16 %v2423
        %v2753 = vunpack.c.l.b16 %v2424
        %v2754 = vunpack.c.h.b16 %v2424
        %v2755 = vunpack.c.l.b16 %v2425
        %v2756 = vunpack.c.h.b16 %v2425
        %v2757 = vunpack.c.l.b16 %v2426
        %v2758 = vunpack.c.h.b16 %v2426
        %v2759 = vunpack.c.l.b16 %v2427
        %v2760 = vunpack.c.h.b16 %v2427
        %v2761 = vunpack.c.l.b16 %v2428
        %v2762 = vunpack.c.h.b16 %v2428
        %v2763 = vunpack.c.l.b16 %v2429
        %v2764 = vunpack.c.h.b16 %v2429
        %v2765 = vunpack.c.l.b16 %v2430
        %v2766 = vunpack.c.h.b16 %v2430
        %v2767 = vunpack.c.l.b16 %v2431
        %v2768 = vunpack.c.h.b16 %v2431
        %v2769 = vunpack.c.l.b16 %v2432
        %v2770 = vunpack.c.h.b16 %v2432
        %v2771 = vunpack.c.l.b16 %v2433
        %v2772 = vunpack.c.h.b16 %v2433
        %v2773 = vunpack.c.l.b16 %v2434
        %v2774 = vunpack.c.h.b16 %v2434
        %v2775 = vunpack.c.l.b16 %v2435
        %v2776 = vunpack.c.h.b16 %v2435
        %v2777 = vunpack.c.l.b16 %v2436
        %v2778 = vunpack.c.h.b16 %v2436
        %v2779 = vunpack.c.l.b16 %v2437
        %v2780 = vunpack.c.h.b16 %v2437
        %v2781 = vunpack.c.l.b16 %v2438
        %v2782 = vunpack.c.h.b16 %v2438
        %v2783 = vunpack.c.l.b16 %v2439
        %v2784 = vunpack.c.h.b16 %v2439
        %v2785 = vunpack.c.l.b16 %v2440
        %v2786 = vunpack.c.h.b16 %v2440
        %v2787 = vunpack.c.l.b16 %v2441
        %v2788 = vunpack.c.h.b16 %v2441
        %v2789 = vunpack.c.l.b16 %v2442
        %v2790 = vunpack.c.h.b16 %v2442
        %v2791 = vunpack.c.l.b16 %v2443
        %v2792 = vunpack.c.h.b16 %v2443
        %v2793 = vunpack.c.l.b16 %v2444
        %v2794 = vunpack.c.h.b16 %v2444
        %v2795 = vunpack.c.l.b16 %v2445
        %v2796 = vunpack.c.h.b16 %v2445
        %v2797 = vunpack.c.l.b16 %v2446
        %v2798 = vunpack.c.h.b16 %v2446
        %v2799 = vunpack.c.l.b16 %v2447
        %v2800 = vunpack.c.h.b16 %v2447
        %v2801 = vunpack.c.l.b16 %v2448
        %v2802 = vunpack.c.h.b16 %v2448
        %v2803 = vunpack.c.l.b16 %v2449
        %v2804 = vunpack.c.h.b16 %v2449
        %v2805 = vunpack.c.l.b16 %v2450
        %v2806 = vunpack.c.h.b16 %v2450
        %v2807 = vunpack.c.l.b16 %v2451
        %v2808 = vunpack.c.h.b16 %v2451
        %v2809 = vunpack.c.l.b16 %v2452
        %v2810 = vunpack.c.h.b16 %v2452
        %v2811 = vunpack.c.l.b16 %v2453
        %v2812 = vunpack.c.h.b16 %v2453
        %v2813 = vunpack.c.l.b16 %v2454
        %v2814 = vunpack.c.h.b16 %v2454
        %v2815 = vunpack.c.l.b16 %v2455
        %v2816 = vunpack.c.h.b16 %v2455
        %v2817 = vunpack.c.l.b16 %v2456
        %v2818 = vunpack.c.h.b16 %v2456
        %v2819 = vunpack.c.l.b16 %v2457
        %v2820 = vunpack.c.h.b16 %v2457
        %v2821 = vunpack.c.l.b16 %v2458
        %v2822 = vunpack.c.h.b16 %v2458
        %v2823 = vunpack.c.l.b16 %v2459
        %v2824 = vunpack.c.h.b16 %v2459
        %v2825 = vunpack.c.l.b16 %v2460
        %v2826 = vunpack.c.h.b16 %v2460
        %v2827 = vunpack.c.l.b16 %v2461
        %v2828 = vunpack.c.h.b16 %v2461
        %v2829 = vunpack.c.l.b16 %v2462
        %v2830 = vunpack.c.h.b16 %v2462
        %v2831 = vunpack.c.l.b16 %v2463
        %v2832 = vunpack.c.h.b16 %v2463
        %v2833 = vunpack.c.l.b16 %v2464
        %v2834 = vunpack.c.h.b16 %v2464
        %v2835 = vunpack.c.l.b16 %v2465
        %v2836 = vunpack.c.h.b16 %v2465
        %v2837 = vunpack.c.l.b16 %v2466
        %v2838 = vunpack.c.h.b16 %v2466
        %v2839 = vunpack.c.l.b16 %v2467
        %v2840 = vunpack.c.h.b16 %v2467
        %v2841 = vunpack.c.l.b16 %v2468
        %v2842 = vunpack.c.h.b16 %v2468
        %v2843 = vunpack.c.l.b16 %v2469
        %v2844 = vunpack.c.h.b16 %v2469
        %v2845 = vunpack.c.l.b16 %v2470
        %v2846 = vunpack.c.h.b16 %v2470
        %v2847 = vunpack.c.l.b16 %v2471
        %v2848 = vunpack.c.h.b16 %v2471
        %v2849 = vunpack.c.l.b16 %v2472
        %v2850 = vunpack.c.h.b16 %v2472
        %v2851 = vunpack.c.l.b16 %v2473
        %v2852 = vunpack.c.h.b16 %v2473
        %v2853 = vunpack.c.l.b16 %v2474
        %v2854 = vunpack.c.h.b16 %v2474
        %v2855 = vunpack.c.l.b16 %v2475
        %v2856 = vunpack.c.h.b16 %v2475
        %v2857 = vunpack.c.l.b16 %v2476
        %v2858 = vunpack.c.h.b16 %v2476
        %v2859 = vunpack.c.l.b16 %v2477
        %v2860 = vunpack.c.h.b16 %v2477
        %v2861 = vunpack.c.l.b16 %v2478
        %v2862 = vunpack.c.h.b16 %v2478
        %v2863 = vunpack.c.l.b16 %v2479
        %v2864 = vunpack.c.h.b16 %v2479
        %v2865 = vunpack.c.l.b16 %v2480
        %v2866 = vunpack.c.h.b16 %v2480
        %v2867 = vunpack.c.l.b16 %v2481
        %v2868 = vunpack.c.h.b16 %v2481
        %v2869 = vunpack.c.l.b16 %v2482
        %v2870 = vunpack.c.h.b16 %v2482
        %v2871 = vunpack.c.l.b16 %v2483
        %v2872 = vunpack.c.h.b16 %v2483
        %v2873 = vunpack.c.l.b16 %v2484
        %v2874 = vunpack.c.h.b16 %v2484
        %v2875 = vunpack.c.l.b16 %v2485
        %v2876 = vunpack.c.h.b16 %v2485
        %v2877 = vunpack.c.l.b16 %v2486
        %v2878 = vunpack.c.h.b16 %v2486
        %v2879 = vunpack.c.l.b16 %v2487
        %v2880 = vunpack.c.h.b16 %v2487
        %v2881 = vunpack.c.l.b16 %v2488
        %v2882 = vunpack.c.h.b16 %v2488
        %v2883 = vunpack.c.l.b16 %v2489
        %v2884 = vunpack.c.h.b16 %v2489
        %v2885 = vunpack.c.l.b16 %v2490
        %v2886 = vunpack.c.h.b16 %v2490
        %v2887 = vpack.c.b16 %v2633, %v2631
        %v2888 = vpack.c.b16 %v2634, %v2632
        %v2889 = vpack.c.b16 %v2637, %v2635
        %v2890 = vpack.c.b16 %v2638, %v2636
        %v2891 = vpack.c.b16 %v2641, %v2639
        %v2892 = vpack.c.b16 %v2642, %v2640
        %v2893 = vpack.c.b16 %v2645, %v2643
        %v2894 = vpack.c.b16 %v2646, %v2644
        %v2895 = vpack.c.b16 %v2649, %v2647
        %v2896 = vpack.c.b16 %v2650, %v2648
        %v2897 = vpack.c.b16 %v2653, %v2651
        %v2898 = vpack.c.b16 %v2654, %v2652
        %v2899 = vpack.c.b16 %v2657, %v2655
        %v2900 = vpack.c.b16 %v2658, %v2656
        %v2901 = vpack.c.b16 %v2661, %v2659
        %v2902 = vpack.c.b16 %v2662, %v2660
        %v2903 = vpack.c.b16 %v2665, %v2663
        %v2904 = vpack.c.b16 %v2666, %v2664
        %v2905 = vpack.c.b16 %v2669, %v2667
        %v2906 = vpack.c.b16 %v2670, %v2668
        %v2907 = vpack.c.b16 %v2673, %v2671
        %v2908 = vpack.c.b16 %v2674, %v2672
        %v2909 = vpack.c.b16 %v2677, %v2675
        %v2910 = vpack.c.b16 %v2678, %v2676
        %v2911 = vpack.c.b16 %v2681, %v2679
        %v2912 = vpack.c.b16 %v2682, %v2680
        %v2913 = vpack.c.b16 %v2685, %v2683
        %v2914 = vpack.c.b16 %v2686, %v2684
        %v2915 = vpack.c.b16 %v2689, %v2687
        %v2916 = vpack.c.b16 %v2690, %v2688
        %v2917 = vpack.c.b16 %v2693, %v2691
        %v2918 = vpack.c.b16 %v2694, %v2692
        %v2919 = vpack.c.b16 %v2697, %v2695
        %v2920 = vpack.c.b16 %v2698, %v2696
        %v2921 = vpack.c.b16 %v2701, %v2699
        %v2922 = vpack.c.b16 %v2702, %v2700
        %v2923 = vpack.c.b16 %v2705, %v2703
        %v2924 = vpack.c.b16 %v2706, %v2704
        %v2925 = vpack.c.b16 %v2709, %v2707
        %v2926 = vpack.c.b16 %v2710, %v2708
        %v2927 = vpack.c.b16 %v2713, %v2711
        %v2928 = vpack.c.b16 %v2714, %v2712
        %v2929 = vpack.c.b16 %v2717, %v2715
        %v2930 = vpack.c.b16 %v2718, %v2716
        %v2931 = vpack.c.b16 %v2721, %v2719
        %v2932 = vpack.c.b16 %v2722, %v2720
        %v2933 = vpack.c.b16 %v2725, %v2723
        %v2934 = vpack.c.b16 %v2726, %v2724
        %v2935 = vpack.c.b16 %v2729, %v2727
        %v2936 = vpack.c.b16 %v2730, %v2728
        %v2937 = vpack.c.b16 %v2733, %v2731
        %v2938 = vpack.c.b16 %v2734, %v2732
        %v2939 = vpack.c.b16 %v2737, %v2735
        %v2940 = vpack.c.b16 %v2738, %v2736
        %v2941 = vpack.c.b16 %v2741, %v2739
        %v2942 = vpack.c.b16 %v2742, %v2740
        %v2943 = vpack.c.b16 %v2745, %v2743
        %v2944 = vpack.c.b16 %v2746, %v2744
        %v2945 = vpack.c.b16 %v2749, %v2747
        %v2946 = vpack.c.b16 %v2750, %v2748
        %v2947 = vpack.c.b16 %v2753, %v2751
        %v2948 = vpack.c.b16 %v2754, %v2752
        %v2949 = vpack.c.b16 %v2757, %v2755
        %v2950 = vpack.c.b16 %v2758, %v2756
        %v2951 = vpack.c.b16 %v2761, %v2759
        %v2952 = vpack.c.b16 %v2762, %v2760
        %v2953 = vpack.c.b16 %v2765, %v2763
        %v2954 = vpack.c.b16 %v2766, %v2764
        %v2955 = vpack.c.b16 %v2769, %v2767
        %v2956 = vpack.c.b16 %v2770, %v2768
        %v2957 = vpack.c.b16 %v2773, %v2771
        %v2958 = vpack.c.b16 %v2774, %v2772
        %v2959 = vpack.c.b16 %v2777, %v2775
        %v2960 = vpack.c.b16 %v2778, %v2776
        %v2961 = vpack.c.b16 %v2781, %v2779
        %v2962 = vpack.c.b16 %v2782, %v2780
        %v2963 = vpack.c.b16 %v2785, %v2783
        %v2964 = vpack.c.b16 %v2786, %v2784
        %v2965 = vpack.c.b16 %v2789, %v2787
        %v2966 = vpack.c.b16 %v2790, %v2788
        %v2967 = vpack.c.b16 %v2793, %v2791
        %v2968 = vpack.c.b16 %v2794, %v2792
        %v2969 = vpack.c.b16 %v2797, %v2795
        %v2970 = vpack.c.b16 %v2798, %v2796
        %v2971 = vpack.c.b16 %v2801, %v2799
        %v2972 = vpack.c.b16 %v2802, %v2800
        %v2973 = vpack.c.b16 %v2805, %v2803
        %v2974 = vpack.c.b16 %v2806, %v2804
        %v2975 = vpack.c.b16 %v2809, %v2807
        %v2976 = vpack.c.b16 %v2810, %v2808
        %v2977 = vpack.c.b16 %v2813, %v2811
        %v2978 = vpack.c.b16 %v2814, %v2812
        %v2979 = vpack.c.b16 %v2817, %v2815
        %v2980 = vpack.c.b16 %v2818, %v2816
        %v2981 = vpack.c.b16 %v2821, %v2819
        %v2982 = vpack.c.b16 %v2822, %v2820
        %v2983 = vpack.c.b16 %v2825, %v2823
        %v2984 = vpack.c.b16 %v2826, %v2824
        %v2985 = vpack.c.b16 %v2829, %v2827
        %v2986 = vpack.c.b16 %v2830, %v2828
        %v2987 = vpack.c.b16 %v2833, %v2831
        %v2988 = vpack.c.b16 %v2834, %v2832
        %v2989 = vpack.c.b16 %v2837, %v2835
        %v2990 = vpack.c.b16 %v2838, %v2836
        %v2991 = vpack.c.b16 %v2841, %v2839
        %v2992 = vpack.c.b16 %v2842, %v2840
        %v2993 = vpack.c.b16 %v2845, %v2843
        %v2994 = vpack.c.b16 %v2846, %v2844
        %v2995 = vpack.c.b16 %v2849, %v2847
        %v2996 = vpack.c.b16 %v2850, %v2848
        %v2997 = vpack.c.b16 %v2853, %v2851
        %v2998 = vpack.c.b16 %v2854, %v2852
        %v2999 = vpack.c.b16 %v2857, %v2855
        %v3000 = vpack.c.b16 %v2858, %v2856
        %v3001 = vpack.c.b16 %v2861, %v2859
        %v3002 = vpack.c.b16 %v2862, %v2860
        %v3003 = vpack.c.b16 %v2865, %v2863
        %v3004 = vpack.c.b16 %v2866, %v2864
        %v3005 = vpack.c.b16 %v2869, %v2867
        %v3006 = vpack.c.b16 %v2870, %v2868
        %v3007 = vpack.c.b16 %v2873, %v2871
        %v3008 = vpack.c.b16 %v2874, %v2872
        %v3009 = vpack.c.b16 %v2877, %v2875
        %v3010 = vpack.c.b16 %v2878, %v2876
        %v3011 = vpack.c.b16 %v2881, %v2879
        %v3012 = vpack.c.b16 %v2882, %v2880
        %v3013 = vpack.c.b16 %v2885, %v2883
        %v3014 = vpack.c.b16 %v2886, %v2884
        %3143 = vmatprep.subr.bf16.mxu0 %v2888
        %3144 = vmatpush1.bf16.msra.mxu0 %v2887
        %3145 = vmatprep.subr.bf16.mxu0 %v2890
        %3146 = vmatpush1.bf16.msra.mxu0 %v2889
        %3147 = vmatprep.subr.bf16.mxu0 %v2892
        %3148 = vmatpush1.bf16.msra.mxu0 %v2891
        %3149 = vmatprep.subr.bf16.mxu0 %v2894
        %3150 = vmatpush1.bf16.msra.mxu0 %v2893
        %3151 = vmatprep.subr.bf16.mxu0 %v2896
        %3152 = vmatpush1.bf16.msra.mxu0 %v2895
        %3153 = vmatprep.subr.bf16.mxu0 %v2898
        %3154 = vmatpush1.bf16.msra.mxu0 %v2897
        %3155 = vmatprep.subr.bf16.mxu0 %v2900
        %3156 = vmatpush1.bf16.msra.mxu0 %v2899
        %3157 = vmatprep.subr.bf16.mxu0 %v2902
        %3158 = vmatpush1.bf16.msra.mxu0 %v2901
        %3159 = vmatprep.subr.bf16.mxu0 %v2904
        %3160 = vmatpush1.bf16.msra.mxu0 %v2903
        %3161 = vmatprep.subr.bf16.mxu0 %v2906
        %3162 = vmatpush1.bf16.msra.mxu0 %v2905
        %3163 = vmatprep.subr.bf16.mxu0 %v2908
        %3164 = vmatpush1.bf16.msra.mxu0 %v2907
        %3165 = vmatprep.subr.bf16.mxu0 %v2910
        %3166 = vmatpush1.bf16.msra.mxu0 %v2909
        %3167 = vmatprep.subr.bf16.mxu0 %v2912
        %3168 = vmatpush1.bf16.msra.mxu0 %v2911
        %3169 = vmatprep.subr.bf16.mxu0 %v2914
        %3170 = vmatpush1.bf16.msra.mxu0 %v2913
        %3171 = vmatprep.subr.bf16.mxu0 %v2916
        %3172 = vmatpush1.bf16.msra.mxu0 %v2915
        %3173 = vmatprep.subr.bf16.mxu0 %v2918
        %3174 = vmatpush1.bf16.msra.mxu0 %v2917
        %3175 = vmatprep.mubr.bf16.mxu0 %v2284
        %3176 = vmatmul.mubr.bf16.gmra.mrb[0].mxu0 %v2283
        %v3177 = vpop.f32.mrb[0].mxu0
        %v3178 = vadd.f32 %v2496, %v3177
        %v3179 = vpop.f32.mrb[0].mxu0
        %v3180 = vadd.f32 %v2500, %v3179
        %v3181 = vpop.f32.mrb[0].mxu0
        %v3182 = vadd.f32 %v2496, %v3181
        %v3183 = vpop.f32.mrb[0].mxu0
        %v3184 = vadd.f32 %v2500, %v3183
        %3185 = vmatprep.mubr.bf16.mxu0 %v2292
        %3186 = vmatmul.mubr.bf16.gmra.mrb[0].mxu0 %v2291
        %v3187 = vpop.f32.mrb[0].mxu0
        %v3188 = vadd.f32 %v2496, %v3187
        %v3189 = vpop.f32.mrb[0].mxu0
        %v3190 = vadd.f32 %v2500, %v3189
        %v3191 = vpop.f32.mrb[0].mxu0
        %v3192 = vadd.f32 %v2496, %v3191
        %v3193 = vpop.f32.mrb[0].mxu0
        %v3194 = vadd.f32 %v2500, %v3193
        %3195 = vmatprep.mubr.bf16.mxu0 %v2300
        %3196 = vmatmul.mubr.bf16.gmra.mrb[0].mxu0 %v2299
        %v3197 = vpop.f32.mrb[0].mxu0
        %v3198 = vadd.f32 %v2496, %v3197
        %v3199 = vpop.f32.mrb[0].mxu0
        %v3200 = vadd.f32 %v2500, %v3199
        %v3201 = vpop.f32.mrb[0].mxu0
        %v3202 = vadd.f32 %v2496, %v3201
        %v3203 = vpop.f32.mrb[0].mxu0
        %v3204 = vadd.f32 %v2500, %v3203
        %3205 = vmatprep.mubr.bf16.mxu0 %v2308
        %3206 = vmatmul.mubr.bf16.gmra.mrb[0].mxu0 %v2307
        %v3207 = vpop.f32.mrb[0].mxu0
        %v3208 = vadd.f32 %v2496, %v3207
        %v3209 = vpop.f32.mrb[0].mxu0
        %v3210 = vadd.f32 %v2500, %v3209
        %v3211 = vpop.f32.mrb[0].mxu0
        %v3212 = vadd.f32 %v2496, %v3211
        %v3213 = vpop.f32.mrb[0].mxu0
        %v3214 = vadd.f32 %v2500, %v3213
        %3215 = vmatprep.mubr.bf16.mxu0 %v2316
        %3216 = vmatmul.mubr.bf16.gmra.mrb[0].mxu0 %v2315
        %v3217 = vpop.f32.mrb[0].mxu0
        %v3218 = vadd.f32 %v2496, %v3217
        %v3219 = vpop.f32.mrb[0].mxu0
        %v3220 = vadd.f32 %v2500, %v3219
        %v3221 = vpop.f32.mrb[0].mxu0
        %v3222 = vadd.f32 %v2496, %v3221
        %v3223 = vpop.f32.mrb[0].mxu0
        %v3224 = vadd.f32 %v2500, %v3223
        %3225 = vmatprep.mubr.bf16.mxu0 %v2324
        %3226 = vmatmul.mubr.bf16.gmra.mrb[0].mxu0 %v2323
        %v3227 = vpop.f32.mrb[0].mxu0
        %v3228 = vadd.f32 %v2496, %v3227
        %v3229 = vpop.f32.mrb[0].mxu0
        %v3230 = vadd.f32 %v2500, %v3229
        %v3231 = vpop.f32.mrb[0].mxu0
        %v3232 = vadd.f32 %v2496, %v3231
        %v3233 = vpop.f32.mrb[0].mxu0
        %v3234 = vadd.f32 %v2500, %v3233
        %3235 = vmatprep.mubr.bf16.mxu0 %v2332
        %3236 = vmatmul.mubr.bf16.gmra.mrb[0].mxu0 %v2331
        %v3237 = vpop.f32.mrb[0].mxu0
        %v3238 = vadd.f32 %v2496, %v3237
        %v3239 = vpop.f32.mrb[0].mxu0
        %v3240 = vadd.f32 %v2500, %v3239
        %v3241 = vpop.f32.mrb[0].mxu0
        %v3242 = vadd.f32 %v2496, %v3241
        %v3243 = vpop.f32.mrb[0].mxu0
        %v3244 = vadd.f32 %v2500, %v3243
        %3245 = vmatprep.mubr.bf16.mxu0 %v2340
        %3246 = vmatmul.mubr.bf16.gmra.mrb[0].mxu0 %v2339
        %v3247 = vpop.f32.mrb[0].mxu0
        %v3248 = vadd.f32 %v2496, %v3247
        %v3249 = vpop.f32.mrb[0].mxu0
        %v3250 = vadd.f32 %v2500, %v3249
        %v3251 = vpop.f32.mrb[0].mxu0
        %v3252 = vadd.f32 %v2496, %v3251
        %v3253 = vpop.f32.mrb[0].mxu0
        %v3254 = vadd.f32 %v2500, %v3253
        %3255 = vmatprep.mubr.bf16.mxu0 %v2348
        %3256 = vmatmul.mubr.bf16.gmra.mrb[0].mxu0 %v2347
        %v3257 = vpop.f32.mrb[0].mxu0
        %v3258 = vadd.f32 %v2496, %v3257
        %v3259 = vpop.f32.mrb[0].mxu0
        %v3260 = vadd.f32 %v2500, %v3259
        %v3261 = vpop.f32.mrb[0].mxu0
        %v3262 = vadd.f32 %v2496, %v3261
        %v3263 = vpop.f32.mrb[0].mxu0
        %v3264 = vadd.f32 %v2500, %v3263
        %3265 = vmatprep.mubr.bf16.mxu0 %v2356
        %3266 = vmatmul.mubr.bf16.gmra.mrb[0].mxu0 %v2355
        %v3267 = vpop.f32.mrb[0].mxu0
        %v3268 = vadd.f32 %v2496, %v3267
        %v3269 = vpop.f32.mrb[0].mxu0
        %v3270 = vadd.f32 %v2500, %v3269
        %v3271 = vpop.f32.mrb[0].mxu0
        %v3272 = vadd.f32 %v2496, %v3271
        %v3273 = vpop.f32.mrb[0].mxu0
        %v3274 = vadd.f32 %v2500, %v3273
        %3275 = vdwg.mxu0
        %3276 = vmatprep.subr.bf16.mxu0 %v2920
        %3277 = vmatpush1.bf16.msra.mxu0 %v2919
        %3278 = vmatprep.subr.bf16.mxu0 %v2922
        %3279 = vmatpush1.bf16.msra.mxu0 %v2921
        %3280 = vmatprep.subr.bf16.mxu0 %v2924
        %3281 = vmatpush1.bf16.msra.mxu0 %v2923
        %3282 = vmatprep.subr.bf16.mxu0 %v2926
        %3283 = vmatpush1.bf16.msra.mxu0 %v2925
        %3284 = vmatprep.subr.bf16.mxu0 %v2928
        %3285 = vmatpush1.bf16.msra.mxu0 %v2927
        %3286 = vmatprep.subr.bf16.mxu0 %v2930
        %3287 = vmatpush1.bf16.msra.mxu0 %v2929
        %3288 = vmatprep.subr.bf16.mxu0 %v2932
        %3289 = vmatpush1.bf16.msra.mxu0 %v2931
        %3290 = vmatprep.subr.bf16.mxu0 %v2934
        %3291 = vmatpush1.bf16.msra.mxu0 %v2933
        %3292 = vmatprep.subr.bf16.mxu0 %v2936
        %3293 = vmatpush1.bf16.msra.mxu0 %v2935
        %3294 = vmatprep.subr.bf16.mxu0 %v2938
        %3295 = vmatpush1.bf16.msra.mxu0 %v2937
        %3296 = vmatprep.subr.bf16.mxu0 %v2940
        %3297 = vmatpush1.bf16.msra.mxu0 %v2939
        %3298 = vmatprep.subr.bf16.mxu0 %v2942
        %3299 = vmatpush1.bf16.msra.mxu0 %v2941
        %3300 = vmatprep.subr.bf16.mxu0 %v2944
        %3301 = vmatpush1.bf16.msra.mxu0 %v2943
        %3302 = vmatprep.subr.bf16.mxu0 %v2946
        %3303 = vmatpush1.bf16.msra.mxu0 %v2945
        %3304 = vmatprep.subr.bf16.mxu0 %v2948
        %3305 = vmatpush1.bf16.msra.mxu0 %v2947
        %3306 = vmatprep.subr.bf16.mxu0 %v2950
        %3307 = vmatpush1.bf16.msra.mxu0 %v2949
        %3308 = vmatprep.mubr.bf16.mxu0 %v2286
        %3309 = vmatmul.mubr.bf16.gmra.mrb[0].mxu0 %v2285
        %v3310 = vpop.f32.mrb[0].mxu0
        %v3311 = vadd.f32 %v3178, %v3310
        %v3312 = vpop.f32.mrb[0].mxu0
        %v3313 = vadd.f32 %v3180, %v3312
        %v3314 = vpop.f32.mrb[0].mxu0
        %v3315 = vadd.f32 %v3182, %v3314
        %v3316 = vpop.f32.mrb[0].mxu0
        %v3317 = vadd.f32 %v3184, %v3316
        %3318 = vmatprep.mubr.bf16.mxu0 %v2294
        %3319 = vmatmul.mubr.bf16.gmra.mrb[0].mxu0 %v2293
        %v3320 = vpop.f32.mrb[0].mxu0
        %v3321 = vadd.f32 %v3188, %v3320
        %v3322 = vpop.f32.mrb[0].mxu0
        %v3323 = vadd.f32 %v3190, %v3322
        %v3324 = vpop.f32.mrb[0].mxu0
        %v3325 = vadd.f32 %v3192, %v3324
        %v3326 = vpop.f32.mrb[0].mxu0
        %v3327 = vadd.f32 %v3194, %v3326
        %3328 = vmatprep.mubr.bf16.mxu0 %v2302
        %3329 = vmatmul.mubr.bf16.gmra.mrb[0].mxu0 %v2301
        %v3330 = vpop.f32.mrb[0].mxu0
        %v3331 = vadd.f32 %v3198, %v3330
        %v3332 = vpop.f32.mrb[0].mxu0
        %v3333 = vadd.f32 %v3200, %v3332
        %v3334 = vpop.f32.mrb[0].mxu0
        %v3335 = vadd.f32 %v3202, %v3334
        %v3336 = vpop.f32.mrb[0].mxu0
        %v3337 = vadd.f32 %v3204, %v3336
        %3338 = vmatprep.mubr.bf16.mxu0 %v2310
        %3339 = vmatmul.mubr.bf16.gmra.mrb[0].mxu0 %v2309
        %v3340 = vpop.f32.mrb[0].mxu0
        %v3341 = vadd.f32 %v3208, %v3340
        %v3342 = vpop.f32.mrb[0].mxu0
        %v3343 = vadd.f32 %v3210, %v3342
        %v3344 = vpop.f32.mrb[0].mxu0
        %v3345 = vadd.f32 %v3212, %v3344
        %v3346 = vpop.f32.mrb[0].mxu0
        %v3347 = vadd.f32 %v3214, %v3346
        %3348 = vmatprep.mubr.bf16.mxu0 %v2318
        %3349 = vmatmul.mubr.bf16.gmra.mrb[0].mxu0 %v2317
        %v3350 = vpop.f32.mrb[0].mxu0
        %v3351 = vadd.f32 %v3218, %v3350
        %v3352 = vpop.f32.mrb[0].mxu0
        %v3353 = vadd.f32 %v3220, %v3352
        %v3354 = vpop.f32.mrb[0].mxu0
        %v3355 = vadd.f32 %v3222, %v3354
        %v3356 = vpop.f32.mrb[0].mxu0
        %v3357 = vadd.f32 %v3224, %v3356
        %3358 = vmatprep.mubr.bf16.mxu0 %v2326
        %3359 = vmatmul.mubr.bf16.gmra.mrb[0].mxu0 %v2325
        %v3360 = vpop.f32.mrb[0].mxu0
        %v3361 = vadd.f32 %v3228, %v3360
        %v3362 = vpop.f32.mrb[0].mxu0
        %v3363 = vadd.f32 %v3230, %v3362
        %v3364 = vpop.f32.mrb[0].mxu0
        %v3365 = vadd.f32 %v3232, %v3364
        %v3366 = vpop.f32.mrb[0].mxu0
        %v3367 = vadd.f32 %v3234, %v3366
        %3368 = vmatprep.mubr.bf16.mxu0 %v2334
        %3369 = vmatmul.mubr.bf16.gmra.mrb[0].mxu0 %v2333
        %v3370 = vpop.f32.mrb[0].mxu0
        %v3371 = vadd.f32 %v3238, %v3370
        %v3372 = vpop.f32.mrb[0].mxu0
        %v3373 = vadd.f32 %v3240, %v3372
        %v3374 = vpop.f32.mrb[0].mxu0
        %v3375 = vadd.f32 %v3242, %v3374
        %v3376 = vpop.f32.mrb[0].mxu0
        %v3377 = vadd.f32 %v3244, %v3376
        %3378 = vmatprep.mubr.bf16.mxu0 %v2342
        %3379 = vmatmul.mubr.bf16.gmra.mrb[0].mxu0 %v2341
        %v3380 = vpop.f32.mrb[0].mxu0
        %v3381 = vadd.f32 %v3248, %v3380
        %v3382 = vpop.f32.mrb[0].mxu0
        %v3383 = vadd.f32 %v3250, %v3382
        %v3384 = vpop.f32.mrb[0].mxu0
        %v3385 = vadd.f32 %v3252, %v3384
        %v3386 = vpop.f32.mrb[0].mxu0
        %v3387 = vadd.f32 %v3254, %v3386
        %3388 = vmatprep.mubr.bf16.mxu0 %v2350
        %3389 = vmatmul.mubr.bf16.gmra.mrb[0].mxu0 %v2349
        %v3390 = vpop.f32.mrb[0].mxu0
        %v3391 = vadd.f32 %v3258, %v3390
        %v3392 = vpop.f32.mrb[0].mxu0
        %v3393 = vadd.f32 %v3260, %v3392
        %v3394 = vpop.f32.mrb[0].mxu0
        %v3395 = vadd.f32 %v3262, %v3394
        %v3396 = vpop.f32.mrb[0].mxu0
        %v3397 = vadd.f32 %v3264, %v3396
        %3398 = vmatprep.mubr.bf16.mxu0 %v2358
        %3399 = vmatmul.mubr.bf16.gmra.mrb[0].mxu0 %v2357
        %v3400 = vpop.f32.mrb[0].mxu0
        %v3401 = vadd.f32 %v3268, %v3400
        %v3402 = vpop.f32.mrb[0].mxu0
        %v3403 = vadd.f32 %v3270, %v3402
        %v3404 = vpop.f32.mrb[0].mxu0
        %v3405 = vadd.f32 %v3272, %v3404
        %v3406 = vpop.f32.mrb[0].mxu0
        %v3407 = vadd.f32 %v3274, %v3406
        %3408 = vdwg.mxu0
        %3409 = vmatprep.subr.bf16.mxu0 %v2952
        %3410 = vmatpush1.bf16.msra.mxu0 %v2951
        %3411 = vmatprep.subr.bf16.mxu0 %v2954
        %3412 = vmatpush1.bf16.msra.mxu0 %v2953
        %3413 = vmatprep.subr.bf16.mxu0 %v2956
        %3414 = vmatpush1.bf16.msra.mxu0 %v2955
        %3415 = vmatprep.subr.bf16.mxu0 %v2958
        %3416 = vmatpush1.bf16.msra.mxu0 %v2957
        %3417 = vmatprep.subr.bf16.mxu0 %v2960
        %3418 = vmatpush1.bf16.msra.mxu0 %v2959
        %3419 = vmatprep.subr.bf16.mxu0 %v2962
        %3420 = vmatpush1.bf16.msra.mxu0 %v2961
        %3421 = vmatprep.subr.bf16.mxu0 %v2964
        %3422 = vmatpush1.bf16.msra.mxu0 %v2963
        %3423 = vmatprep.subr.bf16.mxu0 %v2966
        %3424 = vmatpush1.bf16.msra.mxu0 %v2965
        %3425 = vmatprep.subr.bf16.mxu0 %v2968
        %3426 = vmatpush1.bf16.msra.mxu0 %v2967
        %3427 = vmatprep.subr.bf16.mxu0 %v2970
        %3428 = vmatpush1.bf16.msra.mxu0 %v2969
        %3429 = vmatprep.subr.bf16.mxu0 %v2972
        %3430 = vmatpush1.bf16.msra.mxu0 %v2971
        %3431 = vmatprep.subr.bf16.mxu0 %v2974
        %3432 = vmatpush1.bf16.msra.mxu0 %v2973
        %3433 = vmatprep.subr.bf16.mxu0 %v2976
        %3434 = vmatpush1.bf16.msra.mxu0 %v2975
        %3435 = vmatprep.subr.bf16.mxu0 %v2978
        %3436 = vmatpush1.bf16.msra.mxu0 %v2977
        %3437 = vmatprep.subr.bf16.mxu0 %v2980
        %3438 = vmatpush1.bf16.msra.mxu0 %v2979
        %3439 = vmatprep.subr.bf16.mxu0 %v2982
        %3440 = vmatpush1.bf16.msra.mxu0 %v2981
        %3441 = vmatprep.mubr.bf16.mxu0 %v2288
        %3442 = vmatmul.mubr.bf16.gmra.mrb[0].mxu0 %v2287
        %v3443 = vpop.f32.mrb[0].mxu0
        %v3444 = vadd.f32 %v3311, %v3443
        %v3445 = vpop.f32.mrb[0].mxu0
        %v3446 = vadd.f32 %v3313, %v3445
        %v3447 = vpop.f32.mrb[0].mxu0
        %v3448 = vadd.f32 %v3315, %v3447
        %v3449 = vpop.f32.mrb[0].mxu0
        %v3450 = vadd.f32 %v3317, %v3449
        %3451 = vmatprep.mubr.bf16.mxu0 %v2296
        %3452 = vmatmul.mubr.bf16.gmra.mrb[0].mxu0 %v2295
        %v3453 = vpop.f32.mrb[0].mxu0
        %v3454 = vadd.f32 %v3321, %v3453
        %v3455 = vpop.f32.mrb[0].mxu0
        %v3456 = vadd.f32 %v3323, %v3455
        %v3457 = vpop.f32.mrb[0].mxu0
        %v3458 = vadd.f32 %v3325, %v3457
        %v3459 = vpop.f32.mrb[0].mxu0
        %v3460 = vadd.f32 %v3327, %v3459
        %3461 = vmatprep.mubr.bf16.mxu0 %v2304
        %3462 = vmatmul.mubr.bf16.gmra.mrb[0].mxu0 %v2303
        %v3463 = vpop.f32.mrb[0].mxu0
        %v3464 = vadd.f32 %v3331, %v3463
        %v3465 = vpop.f32.mrb[0].mxu0
        %v3466 = vadd.f32 %v3333, %v3465
        %v3467 = vpop.f32.mrb[0].mxu0
        %v3468 = vadd.f32 %v3335, %v3467
        %v3469 = vpop.f32.mrb[0].mxu0
        %v3470 = vadd.f32 %v3337, %v3469
        %3471 = vmatprep.mubr.bf16.mxu0 %v2312
        %3472 = vmatmul.mubr.bf16.gmra.mrb[0].mxu0 %v2311
        %v3473 = vpop.f32.mrb[0].mxu0
        %v3474 = vadd.f32 %v3341, %v3473
        %v3475 = vpop.f32.mrb[0].mxu0
        %v3476 = vadd.f32 %v3343, %v3475
        %v3477 = vpop.f32.mrb[0].mxu0
        %v3478 = vadd.f32 %v3345, %v3477
        %v3479 = vpop.f32.mrb[0].mxu0
        %v3480 = vadd.f32 %v3347, %v3479
        %3481 = vmatprep.mubr.bf16.mxu0 %v2320
        %3482 = vmatmul.mubr.bf16.gmra.mrb[0].mxu0 %v2319
        %v3483 = vpop.f32.mrb[0].mxu0
        %v3484 = vadd.f32 %v3351, %v3483
        %v3485 = vpop.f32.mrb[0].mxu0
        %v3486 = vadd.f32 %v3353, %v3485
        %v3487 = vpop.f32.mrb[0].mxu0
        %v3488 = vadd.f32 %v3355, %v3487
        %v3489 = vpop.f32.mrb[0].mxu0
        %v3490 = vadd.f32 %v3357, %v3489
        %3491 = vmatprep.mubr.bf16.mxu0 %v2328
        %3492 = vmatmul.mubr.bf16.gmra.mrb[0].mxu0 %v2327
        %v3493 = vpop.f32.mrb[0].mxu0
        %v3494 = vadd.f32 %v3361, %v3493
        %v3495 = vpop.f32.mrb[0].mxu0
        %v3496 = vadd.f32 %v3363, %v3495
        %v3497 = vpop.f32.mrb[0].mxu0
        %v3498 = vadd.f32 %v3365, %v3497
        %v3499 = vpop.f32.mrb[0].mxu0
        %v3500 = vadd.f32 %v3367, %v3499
        %3501 = vmatprep.mubr.bf16.mxu0 %v2336
        %3502 = vmatmul.mubr.bf16.gmra.mrb[0].mxu0 %v2335
        %v3503 = vpop.f32.mrb[0].mxu0
        %v3504 = vadd.f32 %v3371, %v3503
        %v3505 = vpop.f32.mrb[0].mxu0
        %v3506 = vadd.f32 %v3373, %v3505
        %v3507 = vpop.f32.mrb[0].mxu0
        %v3508 = vadd.f32 %v3375, %v3507
        %v3509 = vpop.f32.mrb[0].mxu0
        %v3510 = vadd.f32 %v3377, %v3509
        %3511 = vmatprep.mubr.bf16.mxu0 %v2344
        %3512 = vmatmul.mubr.bf16.gmra.mrb[0].mxu0 %v2343
        %v3513 = vpop.f32.mrb[0].mxu0
        %v3514 = vadd.f32 %v3381, %v3513
        %v3515 = vpop.f32.mrb[0].mxu0
        %v3516 = vadd.f32 %v3383, %v3515
        %v3517 = vpop.f32.mrb[0].mxu0
        %v3518 = vadd.f32 %v3385, %v3517
        %v3519 = vpop.f32.mrb[0].mxu0
        %v3520 = vadd.f32 %v3387, %v3519
        %3521 = vmatprep.mubr.bf16.mxu0 %v2352
        %3522 = vmatmul.mubr.bf16.gmra.mrb[0].mxu0 %v2351
        %v3523 = vpop.f32.mrb[0].mxu0
        %v3524 = vadd.f32 %v3391, %v3523
        %v3525 = vpop.f32.mrb[0].mxu0
        %v3526 = vadd.f32 %v3393, %v3525
        %v3527 = vpop.f32.mrb[0].mxu0
        %v3528 = vadd.f32 %v3395, %v3527
        %v3529 = vpop.f32.mrb[0].mxu0
        %v3530 = vadd.f32 %v3397, %v3529
        %3531 = vmatprep.mubr.bf16.mxu0 %v2360
        %3532 = vmatmul.mubr.bf16.gmra.mrb[0].mxu0 %v2359
        %v3533 = vpop.f32.mrb[0].mxu0
        %v3534 = vadd.f32 %v3401, %v3533
        %v3535 = vpop.f32.mrb[0].mxu0
        %v3536 = vadd.f32 %v3403, %v3535
        %v3537 = vpop.f32.mrb[0].mxu0
        %v3538 = vadd.f32 %v3405, %v3537
        %v3539 = vpop.f32.mrb[0].mxu0
        %v3540 = vadd.f32 %v3407, %v3539
        %3541 = vdwg.mxu0
        %3542 = vmatprep.subr.bf16.mxu0 %v2984
        %3543 = vmatpush1.bf16.msra.mxu0 %v2983
        %3544 = vmatprep.subr.bf16.mxu0 %v2986
        %3545 = vmatpush1.bf16.msra.mxu0 %v2985
        %3546 = vmatprep.subr.bf16.mxu0 %v2988
        %3547 = vmatpush1.bf16.msra.mxu0 %v2987
        %3548 = vmatprep.subr.bf16.mxu0 %v2990
        %3549 = vmatpush1.bf16.msra.mxu0 %v2989
        %3550 = vmatprep.subr.bf16.mxu0 %v2992
        %3551 = vmatpush1.bf16.msra.mxu0 %v2991
        %3552 = vmatprep.subr.bf16.mxu0 %v2994
        %3553 = vmatpush1.bf16.msra.mxu0 %v2993
        %3554 = vmatprep.subr.bf16.mxu0 %v2996
        %3555 = vmatpush1.bf16.msra.mxu0 %v2995
        %3556 = vmatprep.subr.bf16.mxu0 %v2998
        %3557 = vmatpush1.bf16.msra.mxu0 %v2997
        %3558 = vmatprep.subr.bf16.mxu0 %v3000
        %3559 = vmatpush1.bf16.msra.mxu0 %v2999
        %3560 = vmatprep.subr.bf16.mxu0 %v3002
        %3561 = vmatpush1.bf16.msra.mxu0 %v3001
        %3562 = vmatprep.subr.bf16.mxu0 %v3004
        %3563 = vmatpush1.bf16.msra.mxu0 %v3003
        %3564 = vmatprep.subr.bf16.mxu0 %v3006
        %3565 = vmatpush1.bf16.msra.mxu0 %v3005
        %3566 = vmatprep.subr.bf16.mxu0 %v3008
        %3567 = vmatpush1.bf16.msra.mxu0 %v3007
        %3568 = vmatprep.subr.bf16.mxu0 %v3010
        %3569 = vmatpush1.bf16.msra.mxu0 %v3009
        %3570 = vmatprep.subr.bf16.mxu0 %v3012
        %3571 = vmatpush1.bf16.msra.mxu0 %v3011
        %3572 = vmatprep.subr.bf16.mxu0 %v3014
        %3573 = vmatpush1.bf16.msra.mxu0 %v3013
        %3574 = vmatprep.mubr.bf16.mxu0 %v2290
        %3575 = vmatmul.mubr.bf16.gmra.mrb[0].mxu0 %v2289
        %v3576 = vpop.f32.mrb[0].mxu0
        %v3577 = vadd.f32 %v3444, %v3576
        %v3578 = vpop.f32.mrb[0].mxu0
        %v3579 = vadd.f32 %v3446, %v3578
        %v3580 = vpop.f32.mrb[0].mxu0
        %v3581 = vadd.f32 %v3448, %v3580
        %v3582 = vpop.f32.mrb[0].mxu0
        %v3583 = vadd.f32 %v3450, %v3582
        %3584 = vmatprep.mubr.bf16.mxu0 %v2298
        %3585 = vmatmul.mubr.bf16.gmra.mrb[0].mxu0 %v2297
        %v3586 = vpop.f32.mrb[0].mxu0
        %v3587 = vadd.f32 %v3454, %v3586
        %v3588 = vpop.f32.mrb[0].mxu0
        %v3589 = vadd.f32 %v3456, %v3588
        %v3590 = vpop.f32.mrb[0].mxu0
        %v3591 = vadd.f32 %v3458, %v3590
        %v3592 = vpop.f32.mrb[0].mxu0
        %v3593 = vadd.f32 %v3460, %v3592
        %3594 = vmatprep.mubr.bf16.mxu0 %v2306
        %3595 = vmatmul.mubr.bf16.gmra.mrb[0].mxu0 %v2305
        %v3596 = vpop.f32.mrb[0].mxu0
        %v3597 = vadd.f32 %v3464, %v3596
        %v3598 = vpop.f32.mrb[0].mxu0
        %v3599 = vadd.f32 %v3466, %v3598
        %v3600 = vpop.f32.mrb[0].mxu0
        %v3601 = vadd.f32 %v3468, %v3600
        %v3602 = vpop.f32.mrb[0].mxu0
        %v3603 = vadd.f32 %v3470, %v3602
        %3604 = vmatprep.mubr.bf16.mxu0 %v2314
        %3605 = vmatmul.mubr.bf16.gmra.mrb[0].mxu0 %v2313
        %v3606 = vpop.f32.mrb[0].mxu0
        %v3607 = vadd.f32 %v3474, %v3606
        %v3608 = vpop.f32.mrb[0].mxu0
        %v3609 = vadd.f32 %v3476, %v3608
        %v3610 = vpop.f32.mrb[0].mxu0
        %v3611 = vadd.f32 %v3478, %v3610
        %v3612 = vpop.f32.mrb[0].mxu0
        %v3613 = vadd.f32 %v3480, %v3612
        %3614 = vmatprep.mubr.bf16.mxu0 %v2322
        %3615 = vmatmul.mubr.bf16.gmra.mrb[0].mxu0 %v2321
        %v3616 = vpop.f32.mrb[0].mxu0
        %v3617 = vadd.f32 %v3484, %v3616
        %v3618 = vpop.f32.mrb[0].mxu0
        %v3619 = vadd.f32 %v3486, %v3618
        %v3620 = vpop.f32.mrb[0].mxu0
        %v3621 = vadd.f32 %v3488, %v3620
        %v3622 = vpop.f32.mrb[0].mxu0
        %v3623 = vadd.f32 %v3490, %v3622
        %3624 = vmatprep.mubr.bf16.mxu0 %v2330
        %3625 = vmatmul.mubr.bf16.gmra.mrb[0].mxu0 %v2329
        %v3626 = vpop.f32.mrb[0].mxu0
        %v3627 = vadd.f32 %v3494, %v3626
        %v3628 = vpop.f32.mrb[0].mxu0
        %v3629 = vadd.f32 %v3496, %v3628
        %v3630 = vpop.f32.mrb[0].mxu0
        %v3631 = vadd.f32 %v3498, %v3630
        %v3632 = vpop.f32.mrb[0].mxu0
        %v3633 = vadd.f32 %v3500, %v3632
        %3634 = vmatprep.mubr.bf16.mxu0 %v2338
        %3635 = vmatmul.mubr.bf16.gmra.mrb[0].mxu0 %v2337
        %v3636 = vpop.f32.mrb[0].mxu0
        %v3637 = vadd.f32 %v3504, %v3636
        %v3638 = vpop.f32.mrb[0].mxu0
        %v3639 = vadd.f32 %v3506, %v3638
        %v3640 = vpop.f32.mrb[0].mxu0
        %v3641 = vadd.f32 %v3508, %v3640
        %v3642 = vpop.f32.mrb[0].mxu0
        %v3643 = vadd.f32 %v3510, %v3642
        %3644 = vmatprep.mubr.bf16.mxu0 %v2346
        %3645 = vmatmul.mubr.bf16.gmra.mrb[0].mxu0 %v2345
        %v3646 = vpop.f32.mrb[0].mxu0
        %v3647 = vadd.f32 %v3514, %v3646
        %v3648 = vpop.f32.mrb[0].mxu0
        %v3649 = vadd.f32 %v3516, %v3648
        %v3650 = vpop.f32.mrb[0].mxu0
        %v3651 = vadd.f32 %v3518, %v3650
        %v3652 = vpop.f32.mrb[0].mxu0
        %v3653 = vadd.f32 %v3520, %v3652
        %3654 = vmatprep.mubr.bf16.mxu0 %v2354
        %3655 = vmatmul.mubr.bf16.gmra.mrb[0].mxu0 %v2353
        %v3656 = vpop.f32.mrb[0].mxu0
        %v3657 = vadd.f32 %v3524, %v3656
        %v3658 = vpop.f32.mrb[0].mxu0
        %v3659 = vadd.f32 %v3526, %v3658
        %v3660 = vpop.f32.mrb[0].mxu0
        %v3661 = vadd.f32 %v3528, %v3660
        %v3662 = vpop.f32.mrb[0].mxu0
        %v3663 = vadd.f32 %v3530, %v3662
        %3664 = vmatprep.mubr.bf16.mxu0 %v2362
        %3665 = vmatmul.mubr.bf16.gmra.mrb[0].mxu0 %v2361
        %v3666 = vpop.f32.mrb[0].mxu0
        %v3667 = vadd.f32 %v3534, %v3666
        %v3668 = vpop.f32.mrb[0].mxu0
        %v3669 = vadd.f32 %v3536, %v3668
        %v3670 = vpop.f32.mrb[0].mxu0
        %v3671 = vadd.f32 %v3538, %v3670
        %v3672 = vpop.f32.mrb[0].mxu0
        %v3673 = vadd.f32 %v3540, %v3672
        %3674 = vdwg.mxu0
        %v3675 = vmax.f32 %v3577, 0.0
        %v3676 = vmax.f32 %v3579, 0.0
        %v3677 = vmax.f32 %v3581, 0.0
        %v3678 = vmax.f32 %v3583, 0.0
        %v3679 = vmax.f32 %v3587, 0.0
        %v3680 = vmax.f32 %v3589, 0.0
        %v3681 = vmax.f32 %v3591, 0.0
        %v3682 = vmax.f32 %v3593, 0.0
        %v3683 = vmax.f32 %v3597, 0.0
        %v3684 = vmax.f32 %v3599, 0.0
        %v3685 = vmax.f32 %v3601, 0.0
        %v3686 = vmax.f32 %v3603, 0.0
        %v3687 = vmax.f32 %v3607, 0.0
        %v3688 = vmax.f32 %v3609, 0.0
        %v3689 = vmax.f32 %v3611, 0.0
        %v3690 = vmax.f32 %v3613, 0.0
        %v3691 = vmax.f32 %v3617, 0.0
        %v3692 = vmax.f32 %v3619, 0.0
        %v3693 = vmax.f32 %v3621, 0.0
        %v3694 = vmax.f32 %v3623, 0.0
        %v3695 = vmax.f32 %v3627, 0.0
        %v3696 = vmax.f32 %v3629, 0.0
        %v3697 = vmax.f32 %v3631, 0.0
        %v3698 = vmax.f32 %v3633, 0.0
        %v3699 = vmax.f32 %v3637, 0.0
        %v3700 = vmax.f32 %v3639, 0.0
        %v3701 = vmax.f32 %v3641, 0.0
        %v3702 = vmax.f32 %v3643, 0.0
        %v3703 = vmax.f32 %v3647, 0.0
        %v3704 = vmax.f32 %v3649, 0.0
        %v3705 = vmax.f32 %v3651, 0.0
        %v3706 = vmax.f32 %v3653, 0.0
        %v3707 = vmax.f32 %v3657, 0.0
        %v3708 = vmax.f32 %v3659, 0.0
        %v3709 = vmax.f32 %v3661, 0.0
        %v3710 = vmax.f32 %v3663, 0.0
        %v3711 = vmax.f32 %v3667, 0.0
        %v3712 = vmax.f32 %v3669, 0.0
        %v3713 = vmax.f32 %v3671, 0.0
        %v3714 = vmax.f32 %v3673, 0.0
        %v3715 = vld [vmem:[%s7] sm:$0x3]
        %v3717 = vlaneseq
        %v3718 = vshrl.u32 %v3717, 7
        %v3719 = vsub.s32 0, %v3718
        %v3720 = vrot.slane %v3715, %v3719
        %v3721 = vlaneseq
        %v3722 = vshrl.u32 %v3721, 7
        %v3723 = vsub.s32 1, %v3722
        %v3724 = vrot.slane %v3715, %v3723
        %v3727 = vmul.f32 %v3675, %v3720
        %v3728 = vmul.f32 %v3676, %v3724
        %v3729 = vmul.f32 %v3677, %v3720
        %v3730 = vmul.f32 %v3678, %v3724
        %v3731 = vmul.f32 %v3679, %v3720
        %v3732 = vmul.f32 %v3680, %v3724
        %v3733 = vmul.f32 %v3681, %v3720
        %v3734 = vmul.f32 %v3682, %v3724
        %v3735 = vmul.f32 %v3683, %v3720
        %v3736 = vmul.f32 %v3684, %v3724
        %v3737 = vmul.f32 %v3685, %v3720
        %v3738 = vmul.f32 %v3686, %v3724
        %v3739 = vmul.f32 %v3687, %v3720
        %v3740 = vmul.f32 %v3688, %v3724
        %v3741 = vmul.f32 %v3689, %v3720
        %v3742 = vmul.f32 %v3690, %v3724
        %v3743 = vmul.f32 %v3691, %v3720
        %v3744 = vmul.f32 %v3692, %v3724
        %v3745 = vmul.f32 %v3693, %v3720
        %v3746 = vmul.f32 %v3694, %v3724
        %v3747 = vmul.f32 %v3695, %v3720
        %v3748 = vmul.f32 %v3696, %v3724
        %v3749 = vmul.f32 %v3697, %v3720
        %v3750 = vmul.f32 %v3698, %v3724
        %v3751 = vmul.f32 %v3699, %v3720
        %v3752 = vmul.f32 %v3700, %v3724
        %v3753 = vmul.f32 %v3701, %v3720
        %v3754 = vmul.f32 %v3702, %v3724
        %v3755 = vmul.f32 %v3703, %v3720
        %v3756 = vmul.f32 %v3704, %v3724
        %v3757 = vmul.f32 %v3705, %v3720
        %v3758 = vmul.f32 %v3706, %v3724
        %v3759 = vmul.f32 %v3707, %v3720
        %v3760 = vmul.f32 %v3708, %v3724
        %v3761 = vmul.f32 %v3709, %v3720
        %v3762 = vmul.f32 %v3710, %v3724
        %v3763 = vmul.f32 %v3711, %v3720
        %v3764 = vmul.f32 %v3712, %v3724
        %v3765 = vmul.f32 %v3713, %v3720
        %v3766 = vmul.f32 %v3714, %v3724
        %v3767 = vadd.f32 %v3727, %v3728
        %3768 = vadd.xlane.f32.xlu0 %v3767
        %v3769 = vpop.xlane.xlu0 %3768
        %v3770 = vadd.f32 %v3729, %v3730
        %3771 = vadd.xlane.f32.xlu0 %v3770
        %v3772 = vpop.xlane.xlu0 %3771
        %v3773 = vadd.f32 %v3731, %v3732
        %3774 = vadd.xlane.f32.xlu0 %v3773
        %v3775 = vpop.xlane.xlu0 %3774
        %v3776 = vadd.f32 %v3733, %v3734
        %3777 = vadd.xlane.f32.xlu0 %v3776
        %v3778 = vpop.xlane.xlu0 %3777
        %v3779 = vadd.f32 %v3735, %v3736
        %3780 = vadd.xlane.f32.xlu0 %v3779
        %v3781 = vpop.xlane.xlu0 %3780
        %v3782 = vadd.f32 %v3737, %v3738
        %3783 = vadd.xlane.f32.xlu0 %v3782
        %v3784 = vpop.xlane.xlu0 %3783
        %v3785 = vadd.f32 %v3739, %v3740
        %3786 = vadd.xlane.f32.xlu0 %v3785
        %v3787 = vpop.xlane.xlu0 %3786
        %v3788 = vadd.f32 %v3741, %v3742
        %3789 = vadd.xlane.f32.xlu0 %v3788
        %v3790 = vpop.xlane.xlu0 %3789
        %v3791 = vadd.f32 %v3743, %v3744
        %3792 = vadd.xlane.f32.xlu0 %v3791
        %v3793 = vpop.xlane.xlu0 %3792
        %v3794 = vadd.f32 %v3745, %v3746
        %3795 = vadd.xlane.f32.xlu0 %v3794
        %v3796 = vpop.xlane.xlu0 %3795
        %v3797 = vadd.f32 %v3747, %v3748
        %3798 = vadd.xlane.f32.xlu0 %v3797
        %v3799 = vpop.xlane.xlu0 %3798
        %v3800 = vadd.f32 %v3749, %v3750
        %3801 = vadd.xlane.f32.xlu0 %v3800
        %v3802 = vpop.xlane.xlu0 %3801
        %v3803 = vadd.f32 %v3751, %v3752
        %3804 = vadd.xlane.f32.xlu0 %v3803
        %v3805 = vpop.xlane.xlu0 %3804
        %v3806 = vadd.f32 %v3753, %v3754
        %3807 = vadd.xlane.f32.xlu0 %v3806
        %v3808 = vpop.xlane.xlu0 %3807
        %v3809 = vadd.f32 %v3755, %v3756
        %3810 = vadd.xlane.f32.xlu0 %v3809
        %v3811 = vpop.xlane.xlu0 %3810
        %v3812 = vadd.f32 %v3757, %v3758
        %3813 = vadd.xlane.f32.xlu0 %v3812
        %v3814 = vpop.xlane.xlu0 %3813
        %v3815 = vadd.f32 %v3759, %v3760
        %3816 = vadd.xlane.f32.xlu0 %v3815
        %v3817 = vpop.xlane.xlu0 %3816
        %v3818 = vadd.f32 %v3761, %v3762
        %3819 = vadd.xlane.f32.xlu0 %v3818
        %v3820 = vpop.xlane.xlu0 %3819
        %v3821 = vadd.f32 %v3763, %v3764
        %3822 = vadd.xlane.f32.xlu0 %v3821
        %v3823 = vpop.xlane.xlu0 %3822
        %v3824 = vadd.f32 %v3765, %v3766
        %3825 = vadd.xlane.f32.xlu0 %v3824
        %v3826 = vpop.xlane.xlu0 %3825
        %v3827 = vld [vmem:[#allocation3] sm:$0x1]
        %v3829 = vlaneseq
        %v3830 = vshrl.u32 %v3829, 7
        %v3831 = vsub.s32 0, %v3830
        %v3832 = vrot.slane %v3827, %v3831
        %v3834 = vadd.f32 %v3769, %v3832
        %v3835 = vadd.f32 %v3772, %v3832
        %v3836 = vadd.f32 %v3775, %v3832
        %v3837 = vadd.f32 %v3778, %v3832
        %v3838 = vadd.f32 %v3781, %v3832
        %v3839 = vadd.f32 %v3784, %v3832
        %v3840 = vadd.f32 %v3787, %v3832
        %v3841 = vadd.f32 %v3790, %v3832
        %v3842 = vadd.f32 %v3793, %v3832
        %v3843 = vadd.f32 %v3796, %v3832
        %v3844 = vadd.f32 %v3799, %v3832
        %v3845 = vadd.f32 %v3802, %v3832
        %v3846 = vadd.f32 %v3805, %v3832
        %v3847 = vadd.f32 %v3808, %v3832
        %v3848 = vadd.f32 %v3811, %v3832
        %v3849 = vadd.f32 %v3814, %v3832
        %v3850 = vadd.f32 %v3817, %v3832
        %v3851 = vadd.f32 %v3820, %v3832
        %v3852 = vadd.f32 %v3823, %v3832
        %v3853 = vadd.f32 %v3826, %v3832
        %vm3854 = vcmask 7168
        %3855 = vst.msk [vmem:[%s366] sm:$0xff] %vm3854, %v3834
        %3856 = vst.msk [vmem:[%s366 + $0x8] sm:$0xff] %vm3854, %v3835
        %3857 = vst.msk [vmem:[%s366 + $0x10] sm:$0xff] %vm3854, %v3836
        %3858 = vst.msk [vmem:[%s366 + $0x18] sm:$0xff] %vm3854, %v3837
        %3859 = vst.msk [vmem:[%s366 + $0x20] sm:$0xff] %vm3854, %v3838
        %3860 = vst.msk [vmem:[%s366 + $0x28] sm:$0xff] %vm3854, %v3839
        %3861 = vst.msk [vmem:[%s366 + $0x30] sm:$0xff] %vm3854, %v3840
        %3862 = vst.msk [vmem:[%s366 + $0x38] sm:$0xff] %vm3854, %v3841
        %3863 = vst.msk [vmem:[%s366 + $0x40] sm:$0xff] %vm3854, %v3842
        %3864 = vst.msk [vmem:[%s366 + $0x48] sm:$0xff] %vm3854, %v3843
        %3865 = vst.msk [vmem:[%s366 + $0x50] sm:$0xff] %vm3854, %v3844
        %3866 = vst.msk [vmem:[%s366 + $0x58] sm:$0xff] %vm3854, %v3845
        %3867 = vst.msk [vmem:[%s366 + $0x60] sm:$0xff] %vm3854, %v3846
        %3868 = vst.msk [vmem:[%s366 + $0x68] sm:$0xff] %vm3854, %v3847
        %3869 = vst.msk [vmem:[%s366 + $0x70] sm:$0xff] %vm3854, %v3848
        %3870 = vst.msk [vmem:[%s366 + $0x78] sm:$0xff] %vm3854, %v3849
        %3871 = vst.msk [vmem:[%s366 + $0x80] sm:$0xff] %vm3854, %v3850
        %3872 = vst.msk [vmem:[%s366 + $0x88] sm:$0xff] %vm3854, %v3851
        %3873 = vst.msk [vmem:[%s366 + $0x90] sm:$0xff] %vm3854, %v3852
        %3874 = vst.msk [vmem:[%s366 + $0x98] sm:$0xff] %vm3854, %v3853
        %s3875 = smul.u32 20, %s24
        %p3876 = scmp.lt.s32.totalorder %s3875, 39
        %s3877 = scalar_select %p3876, %s3875, 39
        %s3878 = smul.addr %s3877, 8
        %s3879 = scalar_lea.vmem %s9, %s3878
        // Predicated region
        $region65: #{model_1_forward.1} parent=55 // pred_check
          %p3880 = pneg %p236
        $region66: #{model_1_forward.1} parent=55 // pred_check_branch
          %3882 = sbr.rel (%p3880) target = $region68
        $region67: #{model_1_forward.1} parent=55 // pred_region
          %s3883 = smul.u32 20, %s24
        $region68: #{model_1_forward.1} parent=55 // pred_fallthru
          _
      $region56: #{model_1_forward.1} parent=5 // pred_fallthru
        _
      %p3884 = scmp.le.s32.totalorder 2, %s19
      // Predicated region
      $region69: #{model_1_forward.1} parent=5 // pred_check
        %p3885 = pneg %p3884
      $region70: #{model_1_forward.1} parent=5 // pred_check_branch
        %3887 = sbr.rel (%p3885) target = $region72
      $region71: #{model_1_forward.1} parent=5 // pred_region
        %s3888 = ssub.s32 %s19, 2
        // Predicated region
        $region73: #{model_1_forward.1} parent=71 // pred_check
          %p3889 = pneg %p242
        $region74: #{model_1_forward.1} parent=71 // pred_check_branch
          %3891 = sbr.rel (%p3889) target = $region76
        $region75: #{model_1_forward.1} parent=71 // pred_region
          %s3892 = smul.u32 20, %s25
          %p3893 = scmp.lt.s32.totalorder %s3892, 39
          %s3894 = scalar_select %p3893, %s3892, 39
          %s3895 = smul.addr %s3894, 8
          %s3896 = scalar_lea.vmem %s9, %s3895
        $region76: #{model_1_forward.1} parent=71 // pred_fallthru
          _
      $region72: #{model_1_forward.1} parent=5 // pred_fallthru
        _
    $region6: #{model_1_forward.1} parent=1 // loop_footer
      %s23 = sadd.s32 1, %s19
    $region7: #{model_1_forward.1} parent=1 // loop_footer_branch
      %18 = sbr.rel target = $region3
    $region8: #{model_1_forward.1} parent=1 // loop_exit
      _
    %3897 = vsyncpa [#allocation5], 1
    %s3898 = scalar_lea.sflag [#allocation5], 1
    %3899 = vsyncpa %s3898, 1
    %3900 = vsyncpa [#allocation7], 1

</llo_original>
